<compile_context>
chip_gen: v7x
topology: tpu7x:2x2x1
jax: 0.10.0
libtpu: 0.0.40
codegen_flags: <defaults>
</compile_context>

<pallas_src>
import numpy as np
import jax
import jax.numpy as jnp
from jax.experimental import pallas as pl
from jax.experimental.pallas import tpu as pltpu


def qnetwork_forward(x_nchw, params):
    """Pallas forward pass. x_nchw: (B, 6, S, S) float32 -> (B, S*S+1) float32."""
    B, Cin, H, W = x_nchw.shape
    A = params["fc2_w"].shape[0]            # board*board + 1
    HW = H * W
    PAD = W + 1                             # per-batch margin rows: every 3x3 tap is a row slice
    A_PAD = ((A + 127) // 128) * 128        # lane-dense output width
    C1, C2, FH = 32, 64, 256                # conv1/conv2 channels, fc1 width

    # ---- wrapper-side layout plumbing (tiny, plain JAX / numpy) ----
    # input: per-batch row-major (h, w) rows, channels on lanes, zero margins top/bottom
    x_rm = jnp.transpose(x_nchw, (0, 2, 3, 1)).reshape(B, HW, Cin)
    x_rm = jnp.pad(x_rm, ((0, 0), (PAD, PAD), (0, 0)))          # (B, HW + 2*PAD, Cin)

    # per-(pixel, tap) validity, lane-replicated per conv so ONE wide multiply masks the patch
    r = np.arange(HW)
    hp, wp = r // W, r % W
    valid = np.stack(
        [((hp + dy) >= 0) & ((hp + dy) < H) & ((wp + dx) >= 0) & ((wp + dx) < W)
         for dy in (-1, 0, 1) for dx in (-1, 0, 1)], axis=1).astype(np.float32)   # (HW, 9)
    mask1 = jnp.asarray(np.repeat(valid, Cin, axis=1))          # (HW, 9*Cin)
    mask2 = jnp.asarray(np.repeat(valid, C1, axis=1))           # (HW, 9*32)

    # conv weights OIHW -> (ky, kx, cin, cout) -> (9*cin, cout), bf16; rows match tap order
    w1 = jnp.transpose(params["conv1_w"], (2, 3, 1, 0)).reshape(9 * Cin, C1).astype(jnp.bfloat16)
    b1 = params["conv1_b"].reshape(1, -1)
    w2 = jnp.transpose(params["conv2_w"], (2, 3, 1, 0)).reshape(9 * C1, C2).astype(jnp.bfloat16)
    b2 = params["conv2_b"].reshape(1, -1)
    # fc1 weight: torch (256, 64*H*W) with input index (c, h, w); reorder rows to (h, w, c)
    # so they match the kernel's pixel-major / channel-minor flatten. bf16, stays in HBM.
    wfc1 = params["fc1_w"].reshape(FH, C2, H, W)
    wfc1 = jnp.transpose(wfc1, (2, 3, 1, 0)).reshape(HW * C2, FH).astype(jnp.bfloat16)
    bfc1 = params["fc1_b"].reshape(1, -1)
    wfc2 = jnp.pad(jnp.transpose(params["fc2_w"]),
                   ((0, 0), (0, A_PAD - A))).astype(jnp.bfloat16)          # (256, A_PAD)
    bfc2 = jnp.pad(params["fc2_b"], (0, A_PAD - A)).reshape(1, -1)

    tap_offsets = [dy * W + dx for dy in (-1, 0, 1) for dx in (-1, 0, 1)]

    # fc1 K-chunks: pixel-aligned and 128-lane-aligned boundary, so each partial matmul
    # only waits on its own weight-chunk DMA.
    p_half = (HW // 2) - ((HW // 2) % 2)
    pixel_chunks = ((0, p_half), (p_half, HW - p_half)) if 0 < p_half < HW else ((0, HW),)
    n_chunks = len(pixel_chunks)

    def kernel(mask1_ref, mask2_ref, x_ref, w1_ref, b1_ref, w2_ref, b2_ref,
               wfc1_hbm, bfc1_ref, wfc2_ref, bfc2_ref, out_ref,
               y1s_ref, wfc1_vmem, dma_sems):
        # Kick off the fc1-weight chunk DMAs immediately; they overlap both convs.
        copies = []
        for ci, (p0, pcnt) in enumerate(pixel_chunks):
            k0, ksz = p0 * C2, pcnt * C2
            cp = pltpu.make_async_copy(wfc1_hbm.at[pl.ds(k0, ksz)],
                                       wfc1_vmem.at[pl.ds(k0, ksz)],
                                       dma_sems.at[ci])
            cp.start()
            copies.append((cp, k0, ksz))

        def im2col_bf16(src_ref, mask):
            taps = [src_ref[pl.ds(PAD + off, HW), :] for off in tap_offsets]
            # one wide f32 mask multiply (v5e VPU has no bf16), then bf16 for the MXU
            return (jnp.concatenate(taps, axis=1) * mask).astype(jnp.bfloat16)

        # conv1 + ReLU : ONE (HW, 9*Cin) @ (9*Cin, 32) matmul
        y1 = jnp.dot(im2col_bf16(x_ref, mask1_ref[...]), w1_ref[...],
                     preferred_element_type=jnp.float32)
        y1 = jnp.maximum(y1 + b1_ref[...], 0.0)

        # stage conv1 output: zero only the two margin bands, dense aligned store for live rows
        y1s_ref[pl.ds(0, PAD), :] = jnp.zeros((PAD, C1), jnp.float32)
        y1s_ref[pl.ds(PAD + HW, PAD), :] = jnp.zeros((PAD, C1), jnp.float32)
        y1s_ref[pl.ds(PAD, HW), :] = y1

        # conv2 + ReLU : ONE (HW, 9*32) @ (9*32, 64) matmul
        y2 = jnp.dot(im2col_bf16(y1s_ref, mask2_ref[...]), w2_ref[...],
                     preferred_element_type=jnp.float32)
        y2 = jnp.maximum(y2 + b2_ref[...], 0.0)                    # (HW, 64) f32

        # fc1 (+bias) as K-chunked partial matmuls; the (h, w, c) flatten is built per chunk
        # by lane-concatenating contiguous per-pixel rows of the conv2 value.
        h = bfc1_ref[...]                                          # (1, 256) f32
        for (cp, k0, ksz), (p0, pcnt) in zip(copies, pixel_chunks):
            fc_in = jnp.concatenate(
                [y2[p:p + 1, :] for p in range(p0, p0 + pcnt)],
                axis=1).astype(jnp.bfloat16)                       # (1, pcnt*64)
            cp.wait()
            h = h + jnp.dot(fc_in, wfc1_vmem[pl.ds(k0, ksz), :],
                            preferred_element_type=jnp.float32)
        h = jnp.maximum(h, 0.0)

        # fc2 into a lane-dense, 128-wide padded slab
        out_ref[...] = (jnp.dot(h.astype(jnp.bfloat16), wfc2_ref[...],
                                preferred_element_type=jnp.float32) + bfc2_ref[...])

    const2 = lambda b: (0, 0)
    out = pl.pallas_call(
        kernel,
        grid=(B,),
        out_shape=jax.ShapeDtypeStruct((B, 1, A_PAD), jnp.float32),
        in_specs=[
            pl.BlockSpec((HW, 9 * Cin), const2),                            # mask1 (shared)
            pl.BlockSpec((HW, 9 * C1), const2),                             # mask2 (shared)
            pl.BlockSpec((None, HW + 2 * PAD, Cin), lambda b: (b, 0, 0)),   # x (per batch)
            pl.BlockSpec((9 * Cin, C1), const2),                            # conv1 weight
            pl.BlockSpec((1, C1), const2),                                  # conv1 bias
            pl.BlockSpec((9 * C1, C2), const2),                             # conv2 weight
            pl.BlockSpec((1, C2), const2),                                  # conv2 bias
            pl.BlockSpec(memory_space=pl.ANY),                              # fc1 weight in HBM
            pl.BlockSpec((1, FH), const2),                                  # fc1 bias
            pl.BlockSpec((FH, A_PAD), const2),                              # fc2 weight (bf16)
            pl.BlockSpec((1, A_PAD), const2),                               # fc2 bias
        ],
        out_specs=pl.BlockSpec((None, 1, A_PAD), lambda b: (b, 0, 0)),
        scratch_shapes=[
            pltpu.VMEM((HW + 2 * PAD, C1), jnp.float32),    # conv1 output + zero margins
            pltpu.VMEM((HW * C2, FH), jnp.bfloat16),        # fc1 weight landing buffer
            pltpu.SemaphoreType.DMA((n_chunks,)),           # one sem per fc1 weight chunk
        ],
        compiler_params=pltpu.CompilerParams(
            dimension_semantics=("parallel",)),             # shard batch across TCs on v7x
    )(mask1, mask2, x_rm, w1, b1, w2, b2, wfc1, bfc1, wfc2, bfc2)
    return out[:, 0, :A]


def init_params(key, board_size):
    """Deterministic synthetic init (PyTorch-like uniform fan-in scaling, same shapes)."""
    A = board_size * board_size + 1
    fc1_in = 64 * board_size * board_size
    ks = jax.random.split(key, 8)

    def u(k, shape, fan_in):
        bound = 1.0 / np.sqrt(fan_in)
        return jax.random.uniform(k, shape, jnp.float32, -bound, bound)

    return {
        "conv1_w": u(ks[0], (32, 6, 3, 3), 6 * 9),
        "conv1_b": u(ks[1], (32,), 6 * 9),
        "conv2_w": u(ks[2], (64, 32, 3, 3), 32 * 9),
        "conv2_b": u(ks[3], (64,), 32 * 9),
        "fc1_w": u(ks[4], (256, fc1_in), fc1_in),
        "fc1_b": u(ks[5], (256,), fc1_in),
        "fc2_w": u(ks[6], (A, 256), 256),
        "fc2_b": u(ks[7], (A,), 256),
    }


def reference_forward(x, p):
    """Pure-JAX reference matching the PyTorch forward (NCHW)."""
    y = jax.lax.conv_general_dilated(x, p["conv1_w"], (1, 1), "SAME",
                                     dimension_numbers=("NCHW", "OIHW", "NCHW"))
    y = jax.nn.relu(y + p["conv1_b"][None, :, None, None])
    y = jax.lax.conv_general_dilated(y, p["conv2_w"], (1, 1), "SAME",
                                     dimension_numbers=("NCHW", "OIHW", "NCHW"))
    y = jax.nn.relu(y + p["conv2_b"][None, :, None, None])
    y = y.reshape(y.shape[0], -1)                     # NCHW flatten: (c, h, w)
    y = jax.nn.relu(y @ p["fc1_w"].T + p["fc1_b"])
    return y @ p["fc2_w"].T + p["fc2_b"]


if __name__ == "__main__":
    board_size = 7            # 7x7 Go board -> action_size = 50
    batch = 2
    key = jax.random.PRNGKey(0)
    pkey, xkey = jax.random.split(key)
    params = init_params(pkey, board_size)
    x = jax.random.normal(xkey, (batch, 6, board_size, board_size), jnp.float32)

    out = jax.block_until_ready(qnetwork_forward(x, params))

    assert out.shape == (batch, board_size * board_size + 1)
    ref = reference_forward(x, params)
    np.testing.assert_allclose(np.asarray(out), np.asarray(ref), rtol=1e-2, atol=1e-2)
    print("KERNEL_OK")
</pallas_src>

<mosaic_0001>
module attributes {stable_mosaic.version = 11 : i64} {
  func.func @kernel(%arg0: i32, %arg1: memref<49x54xf32, #tpu.memory_space<vmem>>, %arg2: memref<49x288xf32, #tpu.memory_space<vmem>>, %arg3: memref<1x65x6xf32, #tpu.memory_space<vmem>>, %arg4: memref<54x32xbf16, #tpu.memory_space<vmem>>, %arg5: memref<1x32xf32, #tpu.memory_space<vmem>>, %arg6: memref<288x64xbf16, #tpu.memory_space<vmem>>, %arg7: memref<1x64xf32, #tpu.memory_space<vmem>>, %arg8: memref<3136x256xbf16, #tpu.memory_space<any>>, %arg9: memref<1x256xf32, #tpu.memory_space<vmem>>, %arg10: memref<256x128xbf16, #tpu.memory_space<vmem>>, %arg11: memref<1x128xf32, #tpu.memory_space<vmem>>, %arg12: memref<1x1x128xf32, #tpu.memory_space<vmem>>, %arg13: memref<65x32xf32, #tpu.memory_space<vmem>>, %arg14: memref<3136x256xbf16, #tpu.memory_space<vmem>>, %arg15: memref<2x!tpu.dma_semaphore, #tpu.memory_space<semaphore_mem>>) attributes {dimension_semantics = [#tpu.dimension_semantics<parallel>], iteration_bounds = array<i64: 2>, scalar_prefetch = 0 : i64, scratch_operands = 3 : i64, tpu.core_type = #tpu.core_type<tc>, window_params = [{pipeline_mode = #tpu.pipeline_mode<synchronous>, transform_indices = @transform_0, window_bounds = array<i64: 49, 54>}, {pipeline_mode = #tpu.pipeline_mode<synchronous>, transform_indices = @transform_1, window_bounds = array<i64: 49, 288>}, {transform_indices = @transform_2, window_bounds = array<i64: 1, 65, 6>}, {pipeline_mode = #tpu.pipeline_mode<synchronous>, transform_indices = @transform_3, window_bounds = array<i64: 54, 32>}, {pipeline_mode = #tpu.pipeline_mode<synchronous>, transform_indices = @transform_4, window_bounds = array<i64: 1, 32>}, {pipeline_mode = #tpu.pipeline_mode<synchronous>, transform_indices = @transform_5, window_bounds = array<i64: 288, 64>}, {pipeline_mode = #tpu.pipeline_mode<synchronous>, transform_indices = @transform_6, window_bounds = array<i64: 1, 64>}, {}, {pipeline_mode = #tpu.pipeline_mode<synchronous>, transform_indices = @transform_8, window_bounds = array<i64: 1, 256>}, {pipeline_mode = #tpu.pipeline_mode<synchronous>, transform_indices = @transform_9, window_bounds = array<i64: 256, 128>}, {pipeline_mode = #tpu.pipeline_mode<synchronous>, transform_indices = @transform_10, window_bounds = array<i64: 1, 128>}, {transform_indices = @transform_11, window_bounds = array<i64: 1, 1, 128>}]} {
    %c0_i32 = arith.constant 0 : i32
    %c0_i32_0 = arith.constant 0 : i32
    %c0_i32_1 = arith.constant 0 : i32
    %0 = tpu.memref_slice %arg8[%c0_i32_0, %c0_i32_1] : memref<3136x256xbf16, #tpu.memory_space<any>> -> memref<1536x256xbf16, #tpu.memory_space<any>>
    %c0_i32_2 = arith.constant 0 : i32
    %c0_i32_3 = arith.constant 0 : i32
    %1 = tpu.memref_slice %arg14[%c0_i32_2, %c0_i32_3] : memref<3136x256xbf16, #tpu.memory_space<vmem>> -> memref<1536x256xbf16, #tpu.memory_space<vmem>>
    %2 = tpu.memref_slice %arg15[%c0_i32] : memref<2x!tpu.dma_semaphore, #tpu.memory_space<semaphore_mem>> -> memref<1x!tpu.dma_semaphore, #tpu.memory_space<semaphore_mem>>
    %3 = tpu.memref_squeeze %2 : memref<1x!tpu.dma_semaphore, #tpu.memory_space<semaphore_mem>> -> memref<!tpu.dma_semaphore, #tpu.memory_space<semaphore_mem>>
    tpu.enqueue_dma source(%0 : memref<1536x256xbf16, #tpu.memory_space<any>>) target(%1 : memref<1536x256xbf16, #tpu.memory_space<vmem>>) target_semaphore(%3 : memref<!tpu.dma_semaphore, #tpu.memory_space<semaphore_mem>>)
    %c1_i32 = arith.constant 1 : i32
    %c1536_i32 = arith.constant 1536 : i32
    %c0_i32_4 = arith.constant 0 : i32
    %4 = tpu.memref_slice %arg8[%c1536_i32, %c0_i32_4] : memref<3136x256xbf16, #tpu.memory_space<any>> -> memref<1600x256xbf16, #tpu.memory_space<any>>
    %c1536_i32_5 = arith.constant 1536 : i32
    %c0_i32_6 = arith.constant 0 : i32
    %5 = tpu.memref_slice %arg14[%c1536_i32_5, %c0_i32_6] : memref<3136x256xbf16, #tpu.memory_space<vmem>> -> memref<1600x256xbf16, #tpu.memory_space<vmem>>
    %6 = tpu.memref_slice %arg15[%c1_i32] : memref<2x!tpu.dma_semaphore, #tpu.memory_space<semaphore_mem>> -> memref<1x!tpu.dma_semaphore, #tpu.memory_space<semaphore_mem>>
    %7 = tpu.memref_squeeze %6 : memref<1x!tpu.dma_semaphore, #tpu.memory_space<semaphore_mem>> -> memref<!tpu.dma_semaphore, #tpu.memory_space<semaphore_mem>>
    tpu.enqueue_dma source(%4 : memref<1600x256xbf16, #tpu.memory_space<any>>) target(%5 : memref<1600x256xbf16, #tpu.memory_space<vmem>>) target_semaphore(%7 : memref<!tpu.dma_semaphore, #tpu.memory_space<semaphore_mem>>)
    %c0 = arith.constant 0 : index
    %c0_7 = arith.constant 0 : index
    %8 = vector.load %arg1[%c0, %c0_7] : memref<49x54xf32, #tpu.memory_space<vmem>>, vector<49x54xf32>
    %c0_8 = arith.constant 0 : index
    %c0_9 = arith.constant 0 : index
    %c0_10 = arith.constant 0 : index
    %9 = vector.load %arg3[%c0_8, %c0_9, %c0_10] : memref<1x65x6xf32, #tpu.memory_space<vmem>>, vector<1x49x6xf32>
    %10 = vector.shape_cast %9 : vector<1x49x6xf32> to vector<49x6xf32>
    %c0_11 = arith.constant 0 : index
    %c1 = arith.constant 1 : index
    %c0_12 = arith.constant 0 : index
    %11 = vector.load %arg3[%c0_11, %c1, %c0_12] : memref<1x65x6xf32, #tpu.memory_space<vmem>>, vector<1x49x6xf32>
    %12 = vector.shape_cast %11 : vector<1x49x6xf32> to vector<49x6xf32>
    %c0_13 = arith.constant 0 : index
    %c2 = arith.constant 2 : index
    %c0_14 = arith.constant 0 : index
    %13 = vector.load %arg3[%c0_13, %c2, %c0_14] : memref<1x65x6xf32, #tpu.memory_space<vmem>>, vector<1x49x6xf32>
    %14 = vector.shape_cast %13 : vector<1x49x6xf32> to vector<49x6xf32>
    %c0_15 = arith.constant 0 : index
    %c7 = arith.constant 7 : index
    %c0_16 = arith.constant 0 : index
    %15 = vector.load %arg3[%c0_15, %c7, %c0_16] : memref<1x65x6xf32, #tpu.memory_space<vmem>>, vector<1x49x6xf32>
    %16 = vector.shape_cast %15 : vector<1x49x6xf32> to vector<49x6xf32>
    %c0_17 = arith.constant 0 : index
    %c8 = arith.constant 8 : index
    %c0_18 = arith.constant 0 : index
    %17 = vector.load %arg3[%c0_17, %c8, %c0_18] : memref<1x65x6xf32, #tpu.memory_space<vmem>>, vector<1x49x6xf32>
    %18 = vector.shape_cast %17 : vector<1x49x6xf32> to vector<49x6xf32>
    %c0_19 = arith.constant 0 : index
    %c9 = arith.constant 9 : index
    %c0_20 = arith.constant 0 : index
    %19 = vector.load %arg3[%c0_19, %c9, %c0_20] : memref<1x65x6xf32, #tpu.memory_space<vmem>>, vector<1x49x6xf32>
    %20 = vector.shape_cast %19 : vector<1x49x6xf32> to vector<49x6xf32>
    %c0_21 = arith.constant 0 : index
    %c14 = arith.constant 14 : index
    %c0_22 = arith.constant 0 : index
    %21 = vector.load %arg3[%c0_21, %c14, %c0_22] : memref<1x65x6xf32, #tpu.memory_space<vmem>>, vector<1x49x6xf32>
    %22 = vector.shape_cast %21 : vector<1x49x6xf32> to vector<49x6xf32>
    %c0_23 = arith.constant 0 : index
    %c15 = arith.constant 15 : index
    %c0_24 = arith.constant 0 : index
    %23 = vector.load %arg3[%c0_23, %c15, %c0_24] : memref<1x65x6xf32, #tpu.memory_space<vmem>>, vector<1x49x6xf32>
    %24 = vector.shape_cast %23 : vector<1x49x6xf32> to vector<49x6xf32>
    %c0_25 = arith.constant 0 : index
    %c16 = arith.constant 16 : index
    %c0_26 = arith.constant 0 : index
    %25 = vector.load %arg3[%c0_25, %c16, %c0_26] : memref<1x65x6xf32, #tpu.memory_space<vmem>>, vector<1x49x6xf32>
    %26 = vector.shape_cast %25 : vector<1x49x6xf32> to vector<49x6xf32>
    %27 = tpu.concatenate %10, %12, %14, %16, %18, %20, %22, %24, %26 in 1 : vector<49x6xf32>, vector<49x6xf32>, vector<49x6xf32>, vector<49x6xf32>, vector<49x6xf32>, vector<49x6xf32>, vector<49x6xf32>, vector<49x6xf32>, vector<49x6xf32> -> vector<49x54xf32>
    %28 = arith.mulf %27, %8 : vector<49x54xf32>
    %29 = arith.truncf %28 : vector<49x54xf32> to vector<49x54xbf16>
    %c0_27 = arith.constant 0 : index
    %c0_28 = arith.constant 0 : index
    %30 = vector.load %arg4[%c0_27, %c0_28] : memref<54x32xbf16, #tpu.memory_space<vmem>>, vector<54x32xbf16>
    %cst = arith.constant dense<0.000000e+00> : vector<49x32xf32>
    %31 = tpu.matmul %29, %30, %cst {dimension_numbers = #tpu.dot_dimension_numbers<[1], [0], [0], [1], [0, 0, 1, 1], [], []>} : vector<49x54xbf16>, vector<54x32xbf16>, vector<49x32xf32> -> vector<49x32xf32>
    %c0_29 = arith.constant 0 : index
    %c0_30 = arith.constant 0 : index
    %32 = vector.load %arg5[%c0_29, %c0_30] : memref<1x32xf32, #tpu.memory_space<vmem>>, vector<1x32xf32>
    %33 = vector.broadcast %32 : vector<1x32xf32> to vector<49x32xf32>
    %34 = arith.addf %31, %33 : vector<49x32xf32>
    %cst_31 = arith.constant 0.000000e+00 : f32
    %35 = vector.broadcast %cst_31 : f32 to vector<49x32xf32>
    %36 = arith.maximumf %34, %35 : vector<49x32xf32>
    %cst_32 = arith.constant 0.000000e+00 : f32
    %37 = vector.broadcast %cst_32 : f32 to vector<8x32xf32>
    %c0_33 = arith.constant 0 : index
    %c0_34 = arith.constant 0 : index
    %38 = vector.load %arg13[%c0_33, %c0_34] : memref<65x32xf32, #tpu.memory_space<vmem>>, vector<8x32xf32>
    tpu.vector_store %arg13[%c0_33, %c0_34], %37 {strides = array<i32>} : memref<65x32xf32, #tpu.memory_space<vmem>>, vector<8x32xf32>,
    %cst_35 = arith.constant 0.000000e+00 : f32
    %39 = vector.broadcast %cst_35 : f32 to vector<8x32xf32>
    %c57 = arith.constant 57 : index
    %c0_36 = arith.constant 0 : index
    %40 = vector.load %arg13[%c57, %c0_36] : memref<65x32xf32, #tpu.memory_space<vmem>>, vector<8x32xf32>
    tpu.vector_store %arg13[%c57, %c0_36], %39 {strides = array<i32>} : memref<65x32xf32, #tpu.memory_space<vmem>>, vector<8x32xf32>,
    %c8_37 = arith.constant 8 : index
    %c0_38 = arith.constant 0 : index
    %41 = vector.load %arg13[%c8_37, %c0_38] : memref<65x32xf32, #tpu.memory_space<vmem>>, vector<49x32xf32>
    tpu.vector_store %arg13[%c8_37, %c0_38], %36 {strides = array<i32>} : memref<65x32xf32, #tpu.memory_space<vmem>>, vector<49x32xf32>,
    %c0_39 = arith.constant 0 : index
    %c0_40 = arith.constant 0 : index
    %42 = vector.load %arg2[%c0_39, %c0_40] : memref<49x288xf32, #tpu.memory_space<vmem>>, vector<49x288xf32>
    %c0_41 = arith.constant 0 : index
    %c0_42 = arith.constant 0 : index
    %43 = vector.load %arg13[%c0_41, %c0_42] : memref<65x32xf32, #tpu.memory_space<vmem>>, vector<49x32xf32>
    %c1_43 = arith.constant 1 : index
    %c0_44 = arith.constant 0 : index
    %44 = vector.load %arg13[%c1_43, %c0_44] : memref<65x32xf32, #tpu.memory_space<vmem>>, vector<49x32xf32>
    %c2_45 = arith.constant 2 : index
    %c0_46 = arith.constant 0 : index
    %45 = vector.load %arg13[%c2_45, %c0_46] : memref<65x32xf32, #tpu.memory_space<vmem>>, vector<49x32xf32>
    %c7_47 = arith.constant 7 : index
    %c0_48 = arith.constant 0 : index
    %46 = vector.load %arg13[%c7_47, %c0_48] : memref<65x32xf32, #tpu.memory_space<vmem>>, vector<49x32xf32>
    %c8_49 = arith.constant 8 : index
    %c0_50 = arith.constant 0 : index
    %47 = vector.load %arg13[%c8_49, %c0_50] : memref<65x32xf32, #tpu.memory_space<vmem>>, vector<49x32xf32>
    %c9_51 = arith.constant 9 : index
    %c0_52 = arith.constant 0 : index
    %48 = vector.load %arg13[%c9_51, %c0_52] : memref<65x32xf32, #tpu.memory_space<vmem>>, vector<49x32xf32>
    %c14_53 = arith.constant 14 : index
    %c0_54 = arith.constant 0 : index
    %49 = vector.load %arg13[%c14_53, %c0_54] : memref<65x32xf32, #tpu.memory_space<vmem>>, vector<49x32xf32>
    %c15_55 = arith.constant 15 : index
    %c0_56 = arith.constant 0 : index
    %50 = vector.load %arg13[%c15_55, %c0_56] : memref<65x32xf32, #tpu.memory_space<vmem>>, vector<49x32xf32>
    %c16_57 = arith.constant 16 : index
    %c0_58 = arith.constant 0 : index
    %51 = vector.load %arg13[%c16_57, %c0_58] : memref<65x32xf32, #tpu.memory_space<vmem>>, vector<49x32xf32>
    %52 = tpu.concatenate %43, %44, %45, %46, %47, %48, %49, %50, %51 in 1 : vector<49x32xf32>, vector<49x32xf32>, vector<49x32xf32>, vector<49x32xf32>, vector<49x32xf32>, vector<49x32xf32>, vector<49x32xf32>, vector<49x32xf32>, vector<49x32xf32> -> vector<49x288xf32>
    %53 = arith.mulf %52, %42 : vector<49x288xf32>
    %54 = arith.truncf %53 : vector<49x288xf32> to vector<49x288xbf16>
    %c0_59 = arith.constant 0 : index
    %c0_60 = arith.constant 0 : index
    %55 = vector.load %arg6[%c0_59, %c0_60] : memref<288x64xbf16, #tpu.memory_space<vmem>>, vector<288x64xbf16>
    %cst_61 = arith.constant dense<0.000000e+00> : vector<49x64xf32>
    %56 = tpu.matmul %54, %55, %cst_61 {dimension_numbers = #tpu.dot_dimension_numbers<[1], [0], [0], [1], [0, 0, 1, 1], [], []>} : vector<49x288xbf16>, vector<288x64xbf16>, vector<49x64xf32> -> vector<49x64xf32>
    %c0_62 = arith.constant 0 : index
    %c0_63 = arith.constant 0 : index
    %57 = vector.load %arg7[%c0_62, %c0_63] : memref<1x64xf32, #tpu.memory_space<vmem>>, vector<1x64xf32>
    %58 = vector.broadcast %57 : vector<1x64xf32> to vector<49x64xf32>
    %59 = arith.addf %56, %58 : vector<49x64xf32>
    %cst_64 = arith.constant 0.000000e+00 : f32
    %60 = vector.broadcast %cst_64 : f32 to vector<49x64xf32>
    %61 = arith.maximumf %59, %60 : vector<49x64xf32>
    %c0_65 = arith.constant 0 : index
    %c0_66 = arith.constant 0 : index
    %62 = vector.load %arg9[%c0_65, %c0_66] : memref<1x256xf32, #tpu.memory_space<vmem>>, vector<1x256xf32>
    %63 = vector.extract_strided_slice %61 {offsets = [0, 0], sizes = [1, 64], strides = [1, 1]} : vector<49x64xf32> to vector<1x64xf32>
    %64 = vector.extract_strided_slice %61 {offsets = [1, 0], sizes = [1, 64], strides = [1, 1]} : vector<49x64xf32> to vector<1x64xf32>
    %65 = vector.extract_strided_slice %61 {offsets = [2, 0], sizes = [1, 64], strides = [1, 1]} : vector<49x64xf32> to vector<1x64xf32>
    %66 = vector.extract_strided_slice %61 {offsets = [3, 0], sizes = [1, 64], strides = [1, 1]} : vector<49x64xf32> to vector<1x64xf32>
    %67 = vector.extract_strided_slice %61 {offsets = [4, 0], sizes = [1, 64], strides = [1, 1]} : vector<49x64xf32> to vector<1x64xf32>
    %68 = vector.extract_strided_slice %61 {offsets = [5, 0], sizes = [1, 64], strides = [1, 1]} : vector<49x64xf32> to vector<1x64xf32>
    %69 = vector.extract_strided_slice %61 {offsets = [6, 0], sizes = [1, 64], strides = [1, 1]} : vector<49x64xf32> to vector<1x64xf32>
    %70 = vector.extract_strided_slice %61 {offsets = [7, 0], sizes = [1, 64], strides = [1, 1]} : vector<49x64xf32> to vector<1x64xf32>
    %71 = vector.extract_strided_slice %61 {offsets = [8, 0], sizes = [1, 64], strides = [1, 1]} : vector<49x64xf32> to vector<1x64xf32>
    %72 = vector.extract_strided_slice %61 {offsets = [9, 0], sizes = [1, 64], strides = [1, 1]} : vector<49x64xf32> to vector<1x64xf32>
    %73 = vector.extract_strided_slice %61 {offsets = [10, 0], sizes = [1, 64], strides = [1, 1]} : vector<49x64xf32> to vector<1x64xf32>
    %74 = vector.extract_strided_slice %61 {offsets = [11, 0], sizes = [1, 64], strides = [1, 1]} : vector<49x64xf32> to vector<1x64xf32>
    %75 = vector.extract_strided_slice %61 {offsets = [12, 0], sizes = [1, 64], strides = [1, 1]} : vector<49x64xf32> to vector<1x64xf32>
    %76 = vector.extract_strided_slice %61 {offsets = [13, 0], sizes = [1, 64], strides = [1, 1]} : vector<49x64xf32> to vector<1x64xf32>
    %77 = vector.extract_strided_slice %61 {offsets = [14, 0], sizes = [1, 64], strides = [1, 1]} : vector<49x64xf32> to vector<1x64xf32>
    %78 = vector.extract_strided_slice %61 {offsets = [15, 0], sizes = [1, 64], strides = [1, 1]} : vector<49x64xf32> to vector<1x64xf32>
    %79 = vector.extract_strided_slice %61 {offsets = [16, 0], sizes = [1, 64], strides = [1, 1]} : vector<49x64xf32> to vector<1x64xf32>
    %80 = vector.extract_strided_slice %61 {offsets = [17, 0], sizes = [1, 64], strides = [1, 1]} : vector<49x64xf32> to vector<1x64xf32>
    %81 = vector.extract_strided_slice %61 {offsets = [18, 0], sizes = [1, 64], strides = [1, 1]} : vector<49x64xf32> to vector<1x64xf32>
    %82 = vector.extract_strided_slice %61 {offsets = [19, 0], sizes = [1, 64], strides = [1, 1]} : vector<49x64xf32> to vector<1x64xf32>
    %83 = vector.extract_strided_slice %61 {offsets = [20, 0], sizes = [1, 64], strides = [1, 1]} : vector<49x64xf32> to vector<1x64xf32>
    %84 = vector.extract_strided_slice %61 {offsets = [21, 0], sizes = [1, 64], strides = [1, 1]} : vector<49x64xf32> to vector<1x64xf32>
    %85 = vector.extract_strided_slice %61 {offsets = [22, 0], sizes = [1, 64], strides = [1, 1]} : vector<49x64xf32> to vector<1x64xf32>
    %86 = vector.extract_strided_slice %61 {offsets = [23, 0], sizes = [1, 64], strides = [1, 1]} : vector<49x64xf32> to vector<1x64xf32>
    %87 = tpu.concatenate %63, %64, %65, %66, %67, %68, %69, %70, %71, %72, %73, %74, %75, %76, %77, %78 in 1 : vector<1x64xf32>, vector<1x64xf32>, vector<1x64xf32>, vector<1x64xf32>, vector<1x64xf32>, vector<1x64xf32>, vector<1x64xf32>, vector<1x64xf32>, vector<1x64xf32>, vector<1x64xf32>, vector<1x64xf32>, vector<1x64xf32>, vector<1x64xf32>, vector<1x64xf32>, vector<1x64xf32>, vector<1x64xf32> -> vector<1x1024xf32>
    %88 = tpu.concatenate %79, %80, %81, %82, %83, %84, %85, %86 in 1 : vector<1x64xf32>, vector<1x64xf32>, vector<1x64xf32>, vector<1x64xf32>, vector<1x64xf32>, vector<1x64xf32>, vector<1x64xf32>, vector<1x64xf32> -> vector<1x512xf32>
    %89 = tpu.concatenate %87, %88 in 1 : vector<1x1024xf32>, vector<1x512xf32> -> vector<1x1536xf32>
    %90 = arith.truncf %89 : vector<1x1536xf32> to vector<1x1536xbf16>
    %c0_i32_67 = arith.constant 0 : i32
    %c0_i32_68 = arith.constant 0 : i32
    %c0_i32_69 = arith.constant 0 : i32
    %91 = tpu.memref_slice %arg8[%c0_i32_68, %c0_i32_69] : memref<3136x256xbf16, #tpu.memory_space<any>> -> memref<1536x256xbf16, #tpu.memory_space<any>>
    %c0_i32_70 = arith.constant 0 : i32
    %c0_i32_71 = arith.constant 0 : i32
    %92 = tpu.memref_slice %arg14[%c0_i32_70, %c0_i32_71] : memref<3136x256xbf16, #tpu.memory_space<vmem>> -> memref<1536x256xbf16, #tpu.memory_space<vmem>>
    %93 = tpu.memref_slice %arg15[%c0_i32_67] : memref<2x!tpu.dma_semaphore, #tpu.memory_space<semaphore_mem>> -> memref<1x!tpu.dma_semaphore, #tpu.memory_space<semaphore_mem>>
    %94 = tpu.memref_squeeze %93 : memref<1x!tpu.dma_semaphore, #tpu.memory_space<semaphore_mem>> -> memref<!tpu.dma_semaphore, #tpu.memory_space<semaphore_mem>>
    tpu.wait_dma2 semaphore(%94 : memref<!tpu.dma_semaphore, #tpu.memory_space<semaphore_mem>>) src(%91 : memref<1536x256xbf16, #tpu.memory_space<any>>) dst(%92 : memref<1536x256xbf16, #tpu.memory_space<vmem>>)
    %c0_72 = arith.constant 0 : index
    %c0_73 = arith.constant 0 : index
    %95 = vector.load %arg14[%c0_72, %c0_73] : memref<3136x256xbf16, #tpu.memory_space<vmem>>, vector<1536x256xbf16>
    %cst_74 = arith.constant dense<0.000000e+00> : vector<1x256xf32>
    %96 = tpu.matmul %90, %95, %cst_74 {dimension_numbers = #tpu.dot_dimension_numbers<[1], [0], [0], [1], [0, 0, 1, 1], [], []>} : vector<1x1536xbf16>, vector<1536x256xbf16>, vector<1x256xf32> -> vector<1x256xf32>
    %97 = arith.addf %62, %96 : vector<1x256xf32>
    %98 = vector.extract_strided_slice %61 {offsets = [24, 0], sizes = [1, 64], strides = [1, 1]} : vector<49x64xf32> to vector<1x64xf32>
    %99 = vector.extract_strided_slice %61 {offsets = [25, 0], sizes = [1, 64], strides = [1, 1]} : vector<49x64xf32> to vector<1x64xf32>
    %100 = vector.extract_strided_slice %61 {offsets = [26, 0], sizes = [1, 64], strides = [1, 1]} : vector<49x64xf32> to vector<1x64xf32>
    %101 = vector.extract_strided_slice %61 {offsets = [27, 0], sizes = [1, 64], strides = [1, 1]} : vector<49x64xf32> to vector<1x64xf32>
    %102 = vector.extract_strided_slice %61 {offsets = [28, 0], sizes = [1, 64], strides = [1, 1]} : vector<49x64xf32> to vector<1x64xf32>
    %103 = vector.extract_strided_slice %61 {offsets = [29, 0], sizes = [1, 64], strides = [1, 1]} : vector<49x64xf32> to vector<1x64xf32>
    %104 = vector.extract_strided_slice %61 {offsets = [30, 0], sizes = [1, 64], strides = [1, 1]} : vector<49x64xf32> to vector<1x64xf32>
    %105 = vector.extract_strided_slice %61 {offsets = [31, 0], sizes = [1, 64], strides = [1, 1]} : vector<49x64xf32> to vector<1x64xf32>
    %106 = vector.extract_strided_slice %61 {offsets = [32, 0], sizes = [1, 64], strides = [1, 1]} : vector<49x64xf32> to vector<1x64xf32>
    %107 = vector.extract_strided_slice %61 {offsets = [33, 0], sizes = [1, 64], strides = [1, 1]} : vector<49x64xf32> to vector<1x64xf32>
    %108 = vector.extract_strided_slice %61 {offsets = [34, 0], sizes = [1, 64], strides = [1, 1]} : vector<49x64xf32> to vector<1x64xf32>
    %109 = vector.extract_strided_slice %61 {offsets = [35, 0], sizes = [1, 64], strides = [1, 1]} : vector<49x64xf32> to vector<1x64xf32>
    %110 = vector.extract_strided_slice %61 {offsets = [36, 0], sizes = [1, 64], strides = [1, 1]} : vector<49x64xf32> to vector<1x64xf32>
    %111 = vector.extract_strided_slice %61 {offsets = [37, 0], sizes = [1, 64], strides = [1, 1]} : vector<49x64xf32> to vector<1x64xf32>
    %112 = vector.extract_strided_slice %61 {offsets = [38, 0], sizes = [1, 64], strides = [1, 1]} : vector<49x64xf32> to vector<1x64xf32>
    %113 = vector.extract_strided_slice %61 {offsets = [39, 0], sizes = [1, 64], strides = [1, 1]} : vector<49x64xf32> to vector<1x64xf32>
    %114 = vector.extract_strided_slice %61 {offsets = [40, 0], sizes = [1, 64], strides = [1, 1]} : vector<49x64xf32> to vector<1x64xf32>
    %115 = vector.extract_strided_slice %61 {offsets = [41, 0], sizes = [1, 64], strides = [1, 1]} : vector<49x64xf32> to vector<1x64xf32>
    %116 = vector.extract_strided_slice %61 {offsets = [42, 0], sizes = [1, 64], strides = [1, 1]} : vector<49x64xf32> to vector<1x64xf32>
    %117 = vector.extract_strided_slice %61 {offsets = [43, 0], sizes = [1, 64], strides = [1, 1]} : vector<49x64xf32> to vector<1x64xf32>
    %118 = vector.extract_strided_slice %61 {offsets = [44, 0], sizes = [1, 64], strides = [1, 1]} : vector<49x64xf32> to vector<1x64xf32>
    %119 = vector.extract_strided_slice %61 {offsets = [45, 0], sizes = [1, 64], strides = [1, 1]} : vector<49x64xf32> to vector<1x64xf32>
    %120 = vector.extract_strided_slice %61 {offsets = [46, 0], sizes = [1, 64], strides = [1, 1]} : vector<49x64xf32> to vector<1x64xf32>
    %121 = vector.extract_strided_slice %61 {offsets = [47, 0], sizes = [1, 64], strides = [1, 1]} : vector<49x64xf32> to vector<1x64xf32>
    %122 = vector.extract_strided_slice %61 {offsets = [48, 0], sizes = [1, 64], strides = [1, 1]} : vector<49x64xf32> to vector<1x64xf32>
    %123 = tpu.concatenate %98, %99, %100, %101, %102, %103, %104, %105, %106, %107, %108, %109, %110, %111, %112, %113 in 1 : vector<1x64xf32>, vector<1x64xf32>, vector<1x64xf32>, vector<1x64xf32>, vector<1x64xf32>, vector<1x64xf32>, vector<1x64xf32>, vector<1x64xf32>, vector<1x64xf32>, vector<1x64xf32>, vector<1x64xf32>, vector<1x64xf32>, vector<1x64xf32>, vector<1x64xf32>, vector<1x64xf32>, vector<1x64xf32> -> vector<1x1024xf32>
    %124 = tpu.concatenate %114, %115, %116, %117, %118, %119, %120, %121, %122 in 1 : vector<1x64xf32>, vector<1x64xf32>, vector<1x64xf32>, vector<1x64xf32>, vector<1x64xf32>, vector<1x64xf32>, vector<1x64xf32>, vector<1x64xf32>, vector<1x64xf32> -> vector<1x576xf32>
    %125 = tpu.concatenate %123, %124 in 1 : vector<1x1024xf32>, vector<1x576xf32> -> vector<1x1600xf32>
    %126 = arith.truncf %125 : vector<1x1600xf32> to vector<1x1600xbf16>
    %c1_i32_75 = arith.constant 1 : i32
    %c1536_i32_76 = arith.constant 1536 : i32
    %c0_i32_77 = arith.constant 0 : i32
    %127 = tpu.memref_slice %arg8[%c1536_i32_76, %c0_i32_77] : memref<3136x256xbf16, #tpu.memory_space<any>> -> memref<1600x256xbf16, #tpu.memory_space<any>>
    %c1536_i32_78 = arith.constant 1536 : i32
    %c0_i32_79 = arith.constant 0 : i32
    %128 = tpu.memref_slice %arg14[%c1536_i32_78, %c0_i32_79] : memref<3136x256xbf16, #tpu.memory_space<vmem>> -> memref<1600x256xbf16, #tpu.memory_space<vmem>>
    %129 = tpu.memref_slice %arg15[%c1_i32_75] : memref<2x!tpu.dma_semaphore, #tpu.memory_space<semaphore_mem>> -> memref<1x!tpu.dma_semaphore, #tpu.memory_space<semaphore_mem>>
    %130 = tpu.memref_squeeze %129 : memref<1x!tpu.dma_semaphore, #tpu.memory_space<semaphore_mem>> -> memref<!tpu.dma_semaphore, #tpu.memory_space<semaphore_mem>>
    tpu.wait_dma2 semaphore(%130 : memref<!tpu.dma_semaphore, #tpu.memory_space<semaphore_mem>>) src(%127 : memref<1600x256xbf16, #tpu.memory_space<any>>) dst(%128 : memref<1600x256xbf16, #tpu.memory_space<vmem>>)
    %c1536 = arith.constant 1536 : index
    %c0_80 = arith.constant 0 : index
    %131 = vector.load %arg14[%c1536, %c0_80] : memref<3136x256xbf16, #tpu.memory_space<vmem>>, vector<1600x256xbf16>
    %cst_81 = arith.constant dense<0.000000e+00> : vector<1x256xf32>
    %132 = tpu.matmul %126, %131, %cst_81 {dimension_numbers = #tpu.dot_dimension_numbers<[1], [0], [0], [1], [0, 0, 1, 1], [], []>} : vector<1x1600xbf16>, vector<1600x256xbf16>, vector<1x256xf32> -> vector<1x256xf32>
    %133 = arith.addf %97, %132 : vector<1x256xf32>
    %cst_82 = arith.constant 0.000000e+00 : f32
    %134 = vector.broadcast %cst_82 : f32 to vector<1x256xf32>
    %135 = arith.maximumf %133, %134 : vector<1x256xf32>
    %136 = arith.truncf %135 : vector<1x256xf32> to vector<1x256xbf16>
    %c0_83 = arith.constant 0 : index
    %c0_84 = arith.constant 0 : index
    %137 = vector.load %arg10[%c0_83, %c0_84] : memref<256x128xbf16, #tpu.memory_space<vmem>>, vector<256x128xbf16>
    %cst_85 = arith.constant dense<0.000000e+00> : vector<1x128xf32>
    %138 = tpu.matmul %136, %137, %cst_85 {dimension_numbers = #tpu.dot_dimension_numbers<[1], [0], [0], [1], [0, 0, 1, 1], [], []>} : vector<1x256xbf16>, vector<256x128xbf16>, vector<1x128xf32> -> vector<1x128xf32>
    %c0_86 = arith.constant 0 : index
    %c0_87 = arith.constant 0 : index
    %139 = vector.load %arg11[%c0_86, %c0_87] : memref<1x128xf32, #tpu.memory_space<vmem>>, vector<1x128xf32>
    %140 = arith.addf %138, %139 : vector<1x128xf32>
    %c0_88 = arith.constant 0 : index
    %c0_89 = arith.constant 0 : index
    %c0_90 = arith.constant 0 : index
    %141 = vector.load %arg12[%c0_88, %c0_89, %c0_90] : memref<1x1x128xf32, #tpu.memory_space<vmem>>, vector<1x1x128xf32>
    %142 = vector.shape_cast %141 : vector<1x1x128xf32> to vector<1x128xf32>
    %143 = vector.shape_cast %140 : vector<1x128xf32> to vector<1x1x128xf32>
    tpu.vector_store %arg12[%c0_88, %c0_89, %c0_90], %143 {strides = array<i32>} : memref<1x1x128xf32, #tpu.memory_space<vmem>>, vector<1x1x128xf32>,
    return
  }
  func.func @transform_0(%arg0: i32) -> (i32, i32) {
    %c0_i32 = arith.constant 0 : i32
    %c0_i32_0 = arith.constant 0 : i32
    %c0_i32_1 = arith.constant 0 : i32
    return %c0_i32, %c0_i32_0 : i32, i32
  }
  func.func @transform_1(%arg0: i32) -> (i32, i32) {
    %c0_i32 = arith.constant 0 : i32
    %c0_i32_0 = arith.constant 0 : i32
    %c0_i32_1 = arith.constant 0 : i32
    return %c0_i32, %c0_i32_0 : i32, i32
  }
  func.func @transform_2(%arg0: i32) -> (i32, i32, i32) {
    %c0_i32 = arith.constant 0 : i32
    %c0_i32_0 = arith.constant 0 : i32
    %c0_i32_1 = arith.constant 0 : i32
    return %arg0, %c0_i32, %c0_i32_0 : i32, i32, i32
  }
  func.func @transform_3(%arg0: i32) -> (i32, i32) {
    %c0_i32 = arith.constant 0 : i32
    %c0_i32_0 = arith.constant 0 : i32
    %c0_i32_1 = arith.constant 0 : i32
    return %c0_i32, %c0_i32_0 : i32, i32
  }
  func.func @transform_4(%arg0: i32) -> (i32, i32) {
    %c0_i32 = arith.constant 0 : i32
    %c0_i32_0 = arith.constant 0 : i32
    %c0_i32_1 = arith.constant 0 : i32
    return %c0_i32, %c0_i32_0 : i32, i32
  }
  func.func @transform_5(%arg0: i32) -> (i32, i32) {
    %c0_i32 = arith.constant 0 : i32
    %c0_i32_0 = arith.constant 0 : i32
    %c0_i32_1 = arith.constant 0 : i32
    return %c0_i32, %c0_i32_0 : i32, i32
  }
  func.func @transform_6(%arg0: i32) -> (i32, i32) {
    %c0_i32 = arith.constant 0 : i32
    %c0_i32_0 = arith.constant 0 : i32
    %c0_i32_1 = arith.constant 0 : i32
    return %c0_i32, %c0_i32_0 : i32, i32
  }
  func.func @transform_8(%arg0: i32) -> (i32, i32) {
    %c0_i32 = arith.constant 0 : i32
    %c0_i32_0 = arith.constant 0 : i32
    %c0_i32_1 = arith.constant 0 : i32
    return %c0_i32, %c0_i32_0 : i32, i32
  }
  func.func @transform_9(%arg0: i32) -> (i32, i32) {
    %c0_i32 = arith.constant 0 : i32
    %c0_i32_0 = arith.constant 0 : i32
    %c0_i32_1 = arith.constant 0 : i32
    return %c0_i32, %c0_i32_0 : i32, i32
  }
  func.func @transform_10(%arg0: i32) -> (i32, i32) {
    %c0_i32 = arith.constant 0 : i32
    %c0_i32_0 = arith.constant 0 : i32
    %c0_i32_1 = arith.constant 0 : i32
    return %c0_i32, %c0_i32_0 : i32, i32
  }
  func.func @transform_11(%arg0: i32) -> (i32, i32, i32) {
    %c0_i32 = arith.constant 0 : i32
    %c0_i32_0 = arith.constant 0 : i32
    %c0_i32_1 = arith.constant 0 : i32
    return %arg0, %c0_i32, %c0_i32_0 : i32, i32, i32
  }
}

</mosaic_0001>

<llo_original>
// kernel: tpu_custom_call.1
$region0: #{tpu_custom_call.1}
  #allocation0 [shape = 'u32[]', space=smem, size = 0x4, offset = 0x4, fixed_abs, tag = 'smem constant byte address 0x4 - core index']
  #allocation1 [shape = 'u32[144,128]{1,0:T(1,128)}', space=vmem, size = 0x12000, scoped, tag = 'internal scratch']
  #allocation2 [shape = 'f32[65,32]{1,0:T(8,128)}', space=vmem, size = 0x9000, scoped, tag = 'scratch operand']
  #allocation3 [shape = 'bf16[3136,256]{1,0:T(16,128)(2,1)}', space=vmem, size = 0x188000, scoped, tag = 'scratch operand']
  #allocation4 [shape = 's32[2]{0}', space=sflag, size = 0x8, scoped, tag = 'scratch operand']
  #allocation18 [shape = 's32[]', space=sflag, size = 0x4, offset = 0, fixed_abs, tag = 'sflag constant byte address 0x0 - dummy sync flag']
  #allocation20 [shape = 's32[]', space=sflag, size = 0x4, offset = 0, fixed_abs, tag = 'sflag constant byte address 0x0 - dummy sync flag']
  %s0 = inlined_call_operand.hbm [shape: f32[49,54], index: 0, kind: input, shape index: {}]
  %s1 = inlined_call_operand.hbm [shape: f32[49,288], index: 1, kind: input, shape index: {}]
  %s2 = inlined_call_operand.vmem [shape: f32[2,65,6], index: 2, kind: input, shape index: {}]
  %s3 = inlined_call_operand.vmem [shape: bf16[54,32], index: 3, kind: input, shape index: {}]
  %s4 = inlined_call_operand.hbm [shape: f32[1,32], index: 4, kind: input, shape index: {}]
  %s5 = inlined_call_operand.vmem [shape: bf16[288,64], index: 5, kind: input, shape index: {}]
  %s6 = inlined_call_operand.hbm [shape: f32[1,64], index: 6, kind: input, shape index: {}]
  %s7 = inlined_call_operand.hbm [shape: bf16[3136,256], index: 7, kind: input, shape index: {}]
  %s8 = inlined_call_operand.hbm [shape: f32[1,256], index: 8, kind: input, shape index: {}]
  %s9 = inlined_call_operand.hbm [shape: bf16[256,128], index: 9, kind: input, shape index: {}]
  %s10 = inlined_call_operand.hbm [shape: f32[1,128], index: 10, kind: input, shape index: {}]
  %s11 = inlined_call_operand.hbm [shape: f32[2,1,128], index: 11, kind: output, shape index: {}]
  %s12 = sld [smem:[#allocation0]]
  $region101: #{tpu_custom_call.1} parent=0
    _
  %s14 = ssub.s32 1, %s12
  %s15 = scalar_select 0, %s14, %s12
  $region1: #{tpu_custom_call.1} parent=0
    #allocation5 [shape = 'u8[28672]{0}', space=vmem, size = 0x7000, scoped, tag = 'input window, operand 0, single buffered']
    #allocation6 [shape = 's32[2]{0}', space=sflag, size = 0x8, scoped, tag = 'scoped memory for tpu_custom_call.1']
    #allocation7 [shape = 's32[2]{0}', space=sflag, size = 0x8, scoped, tag = 'scoped memory for tpu_custom_call.1']
    #allocation8 [shape = 'u8[86016]{0}', space=vmem, size = 0x15000, scoped, tag = 'input window, operand 1, single buffered']
    #allocation9 [shape = 's32[1]{0}', space=sflag, size = 0x4, scoped, tag = 'scoped memory for tpu_custom_call.1']
    #allocation10 [shape = 'u8[512]{0}', space=vmem, size = 0x400, scoped, tag = 'input window, operand 4, single buffered']
    #allocation11 [shape = 'u8[512]{0}', space=vmem, size = 0x400, scoped, tag = 'input window, operand 6, single buffered']
    #allocation12 [shape = 's32[1]{0}', space=sflag, size = 0x4, scoped, tag = 'scoped memory for tpu_custom_call.1']
    #allocation13 [shape = 'u8[1024]{0}', space=vmem, size = 0x400, scoped, tag = 'input window, operand 8, single buffered']
    #allocation14 [shape = 'u8[65536]{0}', space=vmem, size = 0x10000, scoped, tag = 'input window, operand 9, single buffered']
    #allocation15 [shape = 's32[1]{0}', space=sflag, size = 0x4, scoped, tag = 'scoped memory for tpu_custom_call.1']
    #allocation16 [shape = 'u8[512]{0}', space=vmem, size = 0x400, scoped, tag = 'input window, operand 10, single buffered']
    #allocation17 [shape = 'u8[1024]{0}', space=vmem, size = 0x400, scoped, tag = 'output window, operand 0']
    %16 = vsyncpa [#allocation6], 0
    %17 = vsyncpa [#allocation9], 0
    %18 = vsyncpa [#allocation12], 0
    %19 = vsyncpa [#allocation15], 0
    %20 = vsyncpa [#allocation7], 0
    %s21 = scalar_lea.sflag [#allocation7], 1
    %22 = vsyncpa %s21, 0
    loop: start=0, step=1, limit=4
    $region2: #{tpu_custom_call.1} parent=1 // loop_pre_header
      _
    $region3: #{tpu_custom_call.1} parent=1 // loop_header
      %s24 = sphi 0, %s28
      %p25 = scmp.ge.s32.totalorder %s24, 4
      %s32 = sphi 0, %s32
      %s34 = sphi 0, %s32
      %s35 = sphi 0, %s34
      %s49 = sphi 0, %s35
      %s53 = sphi 0, %s53
      %s55 = sphi 0, %s53
      %s56 = sphi 0, %s55
      %s70 = sphi 0, %s56
      %s76 = sphi 0, %s78
      %s79 = sphi 0, %s76
      %s80 = sphi 0, %s79
      %s96 = sphi 0, %s80
      %s100 = sphi 0, %s100
      %s102 = sphi 0, %s100
      %s103 = sphi 0, %s102
      %s117 = sphi 0, %s103
      %s121 = sphi 0, %s121
      %s123 = sphi 0, %s121
      %s124 = sphi 0, %s123
      %s138 = sphi 0, %s124
      %s142 = sphi 0, %s142
      %s144 = sphi 0, %s142
      %s145 = sphi 0, %s144
      %s159 = sphi 0, %s145
      %s163 = sphi 0, %s163
      %s165 = sphi 0, %s163
      %s166 = sphi 0, %s165
      %s180 = sphi 0, %s166
      %s184 = sphi 0, %s184
      %s186 = sphi 0, %s184
      %s187 = sphi 0, %s186
      %s201 = sphi 0, %s187
      %s205 = sphi 0, %s205
      %s207 = sphi 0, %s205
      %s208 = sphi 0, %s207
      %s222 = sphi 0, %s208
      %s226 = sphi 0, %s226
      %s228 = sphi 0, %s226
      %s229 = sphi 0, %s228
      %s243 = sphi 0, %s229
      %s249 = sphi 0, %s251
      %s252 = sphi 0, %s249
      %s253 = sphi 0, %s252
      %s269 = sphi 0, %s253
    $region4: #{tpu_custom_call.1} parent=1 // loop_header_branch
      %27 = sbr.rel (%p25) target = $region8
    $region5: #{tpu_custom_call.1} parent=1 // loop_body
      %s29 = ssub.s32 %s24, 1
      %s30 = ssub.s32 %s24, 2
      %s31 = sadd.s32 %s24, 1
      %s33 = sadd.s32 %s32, 1
      %p36 = scmp.eq.s32.totalorder %s24, 1
      %p37 = scmp.ne.s32.totalorder %s32, %s34
      %p38 = scmp.eq.s32.totalorder %s24, 0
      %p39 = por %p37, %p38
      %p40 = scmp.ne.s32.totalorder %s32, %s34
      %p41 = scmp.eq.s32.totalorder %s29, 1
      %p42 = por %p40, %p41
      %p43 = scmp.ne.s32.totalorder %s34, %s35
      %p44 = scmp.eq.s32.totalorder %s29, 0
      %p45 = por %p43, %p44
      %p46 = scmp.ne.s32.totalorder %s34, %s35
      %p47 = scmp.eq.s32.totalorder %s30, 1
      %p48 = por %p46, %p47
      %p50 = scmp.ne.s32.totalorder %s35, %s49
      %p51 = scmp.eq.s32.totalorder %s30, 0
      %p52 = por %p50, %p51
      %s54 = sadd.s32 %s53, 1
      %p57 = scmp.eq.s32.totalorder %s24, 1
      %p58 = scmp.ne.s32.totalorder %s53, %s55
      %p59 = scmp.eq.s32.totalorder %s24, 0
      %p60 = por %p58, %p59
      %p61 = scmp.ne.s32.totalorder %s53, %s55
      %p62 = scmp.eq.s32.totalorder %s29, 1
      %p63 = por %p61, %p62
      %p64 = scmp.ne.s32.totalorder %s55, %s56
      %p65 = scmp.eq.s32.totalorder %s29, 0
      %p66 = por %p64, %p65
      %p67 = scmp.ne.s32.totalorder %s55, %s56
      %p68 = scmp.eq.s32.totalorder %s30, 1
      %p69 = por %p67, %p68
      %p71 = scmp.ne.s32.totalorder %s56, %s70
      %p72 = scmp.eq.s32.totalorder %s30, 0
      %p73 = por %p71, %p72
      %s74 = ssub.s32 %s24, %s31
      %p75 = scmp.eq.s32.totalorder %s74, 0
      %s77 = sadd.s32 %s76, 1
      %s78 = scalar_select %p75, %s76, %s77
      %p81 = pneg %p75
      %p82 = scmp.eq.s32.totalorder %s24, 1
      %p83 = por %p81, %p82
      %p84 = scmp.ne.s32.totalorder %s76, %s79
      %p85 = scmp.eq.s32.totalorder %s24, 0
      %p86 = por %p84, %p85
      %p87 = scmp.ne.s32.totalorder %s76, %s79
      %p88 = scmp.eq.s32.totalorder %s29, 1
      %p89 = por %p87, %p88
      %p90 = scmp.ne.s32.totalorder %s79, %s80
      %p91 = scmp.eq.s32.totalorder %s29, 0
      %p92 = por %p90, %p91
      %p93 = scmp.ne.s32.totalorder %s79, %s80
      %p94 = scmp.eq.s32.totalorder %s30, 1
      %p95 = por %p93, %p94
      %p97 = scmp.ne.s32.totalorder %s80, %s96
      %p98 = scmp.eq.s32.totalorder %s30, 0
      %p99 = por %p97, %p98
      %s101 = sadd.s32 %s100, 1
      %p104 = scmp.eq.s32.totalorder %s24, 1
      %p105 = scmp.ne.s32.totalorder %s100, %s102
      %p106 = scmp.eq.s32.totalorder %s24, 0
      %p107 = por %p105, %p106
      %p108 = scmp.ne.s32.totalorder %s100, %s102
      %p109 = scmp.eq.s32.totalorder %s29, 1
      %p110 = por %p108, %p109
      %p111 = scmp.ne.s32.totalorder %s102, %s103
      %p112 = scmp.eq.s32.totalorder %s29, 0
      %p113 = por %p111, %p112
      %p114 = scmp.ne.s32.totalorder %s102, %s103
      %p115 = scmp.eq.s32.totalorder %s30, 1
      %p116 = por %p114, %p115
      %p118 = scmp.ne.s32.totalorder %s103, %s117
      %p119 = scmp.eq.s32.totalorder %s30, 0
      %p120 = por %p118, %p119
      %s122 = sadd.s32 %s121, 1
      %p125 = scmp.eq.s32.totalorder %s24, 1
      %p126 = scmp.ne.s32.totalorder %s121, %s123
      %p127 = scmp.eq.s32.totalorder %s24, 0
      %p128 = por %p126, %p127
      %p129 = scmp.ne.s32.totalorder %s121, %s123
      %p130 = scmp.eq.s32.totalorder %s29, 1
      %p131 = por %p129, %p130
      %p132 = scmp.ne.s32.totalorder %s123, %s124
      %p133 = scmp.eq.s32.totalorder %s29, 0
      %p134 = por %p132, %p133
      %p135 = scmp.ne.s32.totalorder %s123, %s124
      %p136 = scmp.eq.s32.totalorder %s30, 1
      %p137 = por %p135, %p136
      %p139 = scmp.ne.s32.totalorder %s124, %s138
      %p140 = scmp.eq.s32.totalorder %s30, 0
      %p141 = por %p139, %p140
      %s143 = sadd.s32 %s142, 1
      %p146 = scmp.eq.s32.totalorder %s24, 1
      %p147 = scmp.ne.s32.totalorder %s142, %s144
      %p148 = scmp.eq.s32.totalorder %s24, 0
      %p149 = por %p147, %p148
      %p150 = scmp.ne.s32.totalorder %s142, %s144
      %p151 = scmp.eq.s32.totalorder %s29, 1
      %p152 = por %p150, %p151
      %p153 = scmp.ne.s32.totalorder %s144, %s145
      %p154 = scmp.eq.s32.totalorder %s29, 0
      %p155 = por %p153, %p154
      %p156 = scmp.ne.s32.totalorder %s144, %s145
      %p157 = scmp.eq.s32.totalorder %s30, 1
      %p158 = por %p156, %p157
      %p160 = scmp.ne.s32.totalorder %s145, %s159
      %p161 = scmp.eq.s32.totalorder %s30, 0
      %p162 = por %p160, %p161
      %s164 = sadd.s32 %s163, 1
      %p167 = scmp.eq.s32.totalorder %s24, 1
      %p168 = scmp.ne.s32.totalorder %s163, %s165
      %p169 = scmp.eq.s32.totalorder %s24, 0
      %p170 = por %p168, %p169
      %p171 = scmp.ne.s32.totalorder %s163, %s165
      %p172 = scmp.eq.s32.totalorder %s29, 1
      %p173 = por %p171, %p172
      %p174 = scmp.ne.s32.totalorder %s165, %s166
      %p175 = scmp.eq.s32.totalorder %s29, 0
      %p176 = por %p174, %p175
      %p177 = scmp.ne.s32.totalorder %s165, %s166
      %p178 = scmp.eq.s32.totalorder %s30, 1
      %p179 = por %p177, %p178
      %p181 = scmp.ne.s32.totalorder %s166, %s180
      %p182 = scmp.eq.s32.totalorder %s30, 0
      %p183 = por %p181, %p182
      %s185 = sadd.s32 %s184, 1
      %p188 = scmp.eq.s32.totalorder %s24, 1
      %p189 = scmp.ne.s32.totalorder %s184, %s186
      %p190 = scmp.eq.s32.totalorder %s24, 0
      %p191 = por %p189, %p190
      %p192 = scmp.ne.s32.totalorder %s184, %s186
      %p193 = scmp.eq.s32.totalorder %s29, 1
      %p194 = por %p192, %p193
      %p195 = scmp.ne.s32.totalorder %s186, %s187
      %p196 = scmp.eq.s32.totalorder %s29, 0
      %p197 = por %p195, %p196
      %p198 = scmp.ne.s32.totalorder %s186, %s187
      %p199 = scmp.eq.s32.totalorder %s30, 1
      %p200 = por %p198, %p199
      %p202 = scmp.ne.s32.totalorder %s187, %s201
      %p203 = scmp.eq.s32.totalorder %s30, 0
      %p204 = por %p202, %p203
      %s206 = sadd.s32 %s205, 1
      %p209 = scmp.eq.s32.totalorder %s24, 1
      %p210 = scmp.ne.s32.totalorder %s205, %s207
      %p211 = scmp.eq.s32.totalorder %s24, 0
      %p212 = por %p210, %p211
      %p213 = scmp.ne.s32.totalorder %s205, %s207
      %p214 = scmp.eq.s32.totalorder %s29, 1
      %p215 = por %p213, %p214
      %p216 = scmp.ne.s32.totalorder %s207, %s208
      %p217 = scmp.eq.s32.totalorder %s29, 0
      %p218 = por %p216, %p217
      %p219 = scmp.ne.s32.totalorder %s207, %s208
      %p220 = scmp.eq.s32.totalorder %s30, 1
      %p221 = por %p219, %p220
      %p223 = scmp.ne.s32.totalorder %s208, %s222
      %p224 = scmp.eq.s32.totalorder %s30, 0
      %p225 = por %p223, %p224
      %s227 = sadd.s32 %s226, 1
      %p230 = scmp.eq.s32.totalorder %s24, 1
      %p231 = scmp.ne.s32.totalorder %s226, %s228
      %p232 = scmp.eq.s32.totalorder %s24, 0
      %p233 = por %p231, %p232
      %p234 = scmp.ne.s32.totalorder %s226, %s228
      %p235 = scmp.eq.s32.totalorder %s29, 1
      %p236 = por %p234, %p235
      %p237 = scmp.ne.s32.totalorder %s228, %s229
      %p238 = scmp.eq.s32.totalorder %s29, 0
      %p239 = por %p237, %p238
      %p240 = scmp.ne.s32.totalorder %s228, %s229
      %p241 = scmp.eq.s32.totalorder %s30, 1
      %p242 = por %p240, %p241
      %p244 = scmp.ne.s32.totalorder %s229, %s243
      %p245 = scmp.eq.s32.totalorder %s30, 0
      %p246 = por %p244, %p245
      %s247 = ssub.s32 %s24, %s31
      %p248 = scmp.eq.s32.totalorder %s247, 0
      %s250 = sadd.s32 %s249, 1
      %s251 = scalar_select %p248, %s249, %s250
      %p254 = pneg %p248
      %p255 = scmp.eq.s32.totalorder %s24, 1
      %p256 = por %p254, %p255
      %p257 = scmp.ne.s32.totalorder %s249, %s252
      %p258 = scmp.eq.s32.totalorder %s24, 0
      %p259 = por %p257, %p258
      %p260 = scmp.ne.s32.totalorder %s249, %s252
      %p261 = scmp.eq.s32.totalorder %s29, 1
      %p262 = por %p260, %p261
      %p263 = scmp.ne.s32.totalorder %s252, %s253
      %p264 = scmp.eq.s32.totalorder %s29, 0
      %p265 = por %p263, %p264
      %p266 = scmp.ne.s32.totalorder %s252, %s253
      %p267 = scmp.eq.s32.totalorder %s30, 1
      %p268 = por %p266, %p267
      %p270 = scmp.ne.s32.totalorder %s253, %s269
      %p271 = scmp.eq.s32.totalorder %s30, 0
      %p272 = por %p270, %p271
      %p273 = scmp.le.s32.totalorder 1, %s24
      %p274 = scmp.lt.s32.totalorder %s24, 3
      %p275 = pnand %p273, %p274
      %p276 = pneg %p275
      // Predicated region
      $region9: #{tpu_custom_call.1} parent=5 // pred_check
        _
      $region10: #{tpu_custom_call.1} parent=5 // pred_check_branch
        %278 = sbr.rel (%p275) target = $region12
      $region11: #{tpu_custom_call.1} parent=5 // pred_region
        %s279 = ssub.s32 %s24, 1
        // Predicated region
        $region13: #{tpu_custom_call.1} parent=11 // pred_check
          %p280 = pneg %p45
        $region14: #{tpu_custom_call.1} parent=11 // pred_check_branch
          %282 = sbr.rel (%p280) target = $region16
        $region15: #{tpu_custom_call.1} parent=11 // pred_region
          %s284 = ssub.s32 896, 896
          %285 = vsyncadd [#allocation6], %s284
          %s286 = sshll.u32 [#allocation5], 4
          %s287 = int_to_ptr.vmem [resolvable:$true] %s286
          %292 = dma.hbm_to_vmem [thread:$0]  %s0, 896, %s287, [#allocation6], 128, 128, 8
        $region16: #{tpu_custom_call.1} parent=11 // pred_fallthru
          _
        // Predicated region
        $region17: #{tpu_custom_call.1} parent=11 // pred_check
          %p293 = pneg %p66
        $region18: #{tpu_custom_call.1} parent=11 // pred_check_branch
          %295 = sbr.rel (%p293) target = $region20
        $region19: #{tpu_custom_call.1} parent=11 // pred_region
          %s297 = ssub.s32 2688, 2688
          %298 = vsyncadd [#allocation9], %s297
          %s299 = sshll.u32 [#allocation8], 4
          %s300 = int_to_ptr.vmem [resolvable:$true] %s299
          %305 = dma.hbm_to_vmem [thread:$0]  %s1, 2688, %s300, [#allocation9], 384, 384, 24
        $region20: #{tpu_custom_call.1} parent=11 // pred_fallthru
          _
        // Predicated region
        $region21: #{tpu_custom_call.1} parent=11 // pred_check
          %p306 = pneg %p113
        $region22: #{tpu_custom_call.1} parent=11 // pred_check_branch
          %308 = sbr.rel (%p306) target = $region24
        $region23: #{tpu_custom_call.1} parent=11 // pred_region
          _
        $region24: #{tpu_custom_call.1} parent=11 // pred_fallthru
          _
        // Predicated region
        $region25: #{tpu_custom_call.1} parent=11 // pred_check
          %p309 = pneg %p134
        $region26: #{tpu_custom_call.1} parent=11 // pred_check_branch
          %311 = sbr.rel (%p309) target = $region28
        $region27: #{tpu_custom_call.1} parent=11 // pred_region
          %s313 = ssub.s32 16, 16
          %314 = vsyncadd [#allocation9], %s313
          %s316 = sshll.u32 [#allocation10], 4
          %s317 = int_to_ptr.vmem [resolvable:$true] %s316
          %319 = dma.hbm_to_vmem [thread:$0]  %s4, 16, %s317, [#allocation9]
        $region28: #{tpu_custom_call.1} parent=11 // pred_fallthru
          _
        // Predicated region
        $region29: #{tpu_custom_call.1} parent=11 // pred_check
          %p320 = pneg %p155
        $region30: #{tpu_custom_call.1} parent=11 // pred_check_branch
          %322 = sbr.rel (%p320) target = $region32
        $region31: #{tpu_custom_call.1} parent=11 // pred_region
          _
        $region32: #{tpu_custom_call.1} parent=11 // pred_fallthru
          _
        // Predicated region
        $region33: #{tpu_custom_call.1} parent=11 // pred_check
          %p323 = pneg %p176
        $region34: #{tpu_custom_call.1} parent=11 // pred_check_branch
          %325 = sbr.rel (%p323) target = $region36
        $region35: #{tpu_custom_call.1} parent=11 // pred_region
          %s327 = ssub.s32 16, 16
          %328 = vsyncadd [#allocation12], %s327
          %s330 = sshll.u32 [#allocation11], 4
          %s331 = int_to_ptr.vmem [resolvable:$true] %s330
          %333 = dma.hbm_to_vmem [thread:$0]  %s6, 16, %s331, [#allocation12]
        $region36: #{tpu_custom_call.1} parent=11 // pred_fallthru
          _
        // Predicated region
        $region37: #{tpu_custom_call.1} parent=11 // pred_check
          %p334 = pneg %p197
        $region38: #{tpu_custom_call.1} parent=11 // pred_check_branch
          %336 = sbr.rel (%p334) target = $region40
        $region39: #{tpu_custom_call.1} parent=11 // pred_region
          %s338 = ssub.s32 32, 32
          %339 = vsyncadd [#allocation12], %s338
          %s341 = sshll.u32 [#allocation13], 4
          %s342 = int_to_ptr.vmem [resolvable:$true] %s341
          %344 = dma.hbm_to_vmem [thread:$0]  %s8, 32, %s342, [#allocation12]
        $region40: #{tpu_custom_call.1} parent=11 // pred_fallthru
          _
        // Predicated region
        $region41: #{tpu_custom_call.1} parent=11 // pred_check
          %p345 = pneg %p218
        $region42: #{tpu_custom_call.1} parent=11 // pred_check_branch
          %347 = sbr.rel (%p345) target = $region44
        $region43: #{tpu_custom_call.1} parent=11 // pred_region
          %s349 = ssub.s32 2048, 2048
          %350 = vsyncadd [#allocation15], %s349
          %s351 = sshll.u32 [#allocation14], 4
          %s352 = int_to_ptr.vmem [resolvable:$true] %s351
          %357 = dma.hbm_to_vmem [thread:$0]  %s9, 2048, %s352, [#allocation15], 64, 64, 4
        $region44: #{tpu_custom_call.1} parent=11 // pred_fallthru
          _
        // Predicated region
        $region45: #{tpu_custom_call.1} parent=11 // pred_check
          %p358 = pneg %p239
        $region46: #{tpu_custom_call.1} parent=11 // pred_check_branch
          %360 = sbr.rel (%p358) target = $region48
        $region47: #{tpu_custom_call.1} parent=11 // pred_region
          %s362 = ssub.s32 16, 16
          %363 = vsyncadd [#allocation15], %s362
          %s365 = sshll.u32 [#allocation16], 4
          %s366 = int_to_ptr.vmem [resolvable:$true] %s365
          %368 = dma.hbm_to_vmem [thread:$0]  %s10, 16, %s366, [#allocation15]
        $region48: #{tpu_custom_call.1} parent=11 // pred_fallthru
          _
      $region12: #{tpu_custom_call.1} parent=5 // pred_fallthru
        _
      %p369 = scmp.lt.s32.totalorder %s24, 2
      // Predicated region
      $region49: #{tpu_custom_call.1} parent=5 // pred_check
        %p370 = pneg %p369
      $region50: #{tpu_custom_call.1} parent=5 // pred_check_branch
        %372 = sbr.rel (%p370) target = $region52
      $region51: #{tpu_custom_call.1} parent=5 // pred_region
        // Predicated region
        $region53: #{tpu_custom_call.1} parent=51 // pred_check
          %p373 = pneg %p86
        $region54: #{tpu_custom_call.1} parent=51 // pred_check_branch
          %375 = sbr.rel (%p373) target = $region56
        $region55: #{tpu_custom_call.1} parent=51 // pred_region
          %p376 = scmp.lt.s32.totalorder %s24, 1
          %s377 = scalar_select %p376, %s24, 1
          %s378 = smul.addr %s377, 9
          %s379 = smul.addr %s378, 8
          %s380 = scalar_lea.vmem %s2, %s379
        $region56: #{tpu_custom_call.1} parent=51 // pred_fallthru
          _
      $region52: #{tpu_custom_call.1} parent=5 // pred_fallthru
        _
      %p381 = scmp.le.s32.totalorder 1, %s24
      %p382 = scmp.lt.s32.totalorder %s24, 3
      %p383 = pnand %p381, %p382
      %p384 = pneg %p383
      // Predicated region
      $region57: #{tpu_custom_call.1} parent=5 // pred_check
        _
      $region58: #{tpu_custom_call.1} parent=5 // pred_check_branch
        %386 = sbr.rel (%p383) target = $region60
      $region59: #{tpu_custom_call.1} parent=5 // pred_region
        #allocation19 [shape = 'u32[9]{0}', space=smem, size = 0x24, scoped, tag = 'DMA stride descriptor']
        #allocation21 [shape = 'u32[9]{0}', space=smem, size = 0x24, scoped, tag = 'DMA stride descriptor']
        %s387 = ssub.s32 %s24, 1
        // Predicated region
        $region61: #{tpu_custom_call.1} parent=59 // pred_check
          %p388 = pneg %p45
        $region62: #{tpu_custom_call.1} parent=59 // pred_check_branch
          %390 = sbr.rel (%p388) target = $region64
        $region63: #{tpu_custom_call.1} parent=59 // pred_region
          %391 = dma.done [#allocation6], 896
        $region64: #{tpu_custom_call.1} parent=59 // pred_fallthru
          _
        // Predicated region
        $region65: #{tpu_custom_call.1} parent=59 // pred_check
          %p392 = pneg %p66
        $region66: #{tpu_custom_call.1} parent=59 // pred_check_branch
          %394 = sbr.rel (%p392) target = $region68
        $region67: #{tpu_custom_call.1} parent=59 // pred_region
          %395 = dma.done [#allocation9], 2688
        $region68: #{tpu_custom_call.1} parent=59 // pred_fallthru
          _
        // Predicated region
        $region69: #{tpu_custom_call.1} parent=59 // pred_check
          %p396 = pneg %p134
        $region70: #{tpu_custom_call.1} parent=59 // pred_check_branch
          %398 = sbr.rel (%p396) target = $region72
        $region71: #{tpu_custom_call.1} parent=59 // pred_region
          %399 = dma.done [#allocation9], 16
        $region72: #{tpu_custom_call.1} parent=59 // pred_fallthru
          _
        // Predicated region
        $region73: #{tpu_custom_call.1} parent=59 // pred_check
          %p400 = pneg %p176
        $region74: #{tpu_custom_call.1} parent=59 // pred_check_branch
          %402 = sbr.rel (%p400) target = $region76
        $region75: #{tpu_custom_call.1} parent=59 // pred_region
          %403 = dma.done [#allocation12], 16
        $region76: #{tpu_custom_call.1} parent=59 // pred_fallthru
          _
        // Predicated region
        $region77: #{tpu_custom_call.1} parent=59 // pred_check
          %p404 = pneg %p197
        $region78: #{tpu_custom_call.1} parent=59 // pred_check_branch
          %406 = sbr.rel (%p404) target = $region80
        $region79: #{tpu_custom_call.1} parent=59 // pred_region
          %407 = dma.done [#allocation12], 32
        $region80: #{tpu_custom_call.1} parent=59 // pred_fallthru
          _
        // Predicated region
        $region81: #{tpu_custom_call.1} parent=59 // pred_check
          %p408 = pneg %p218
        $region82: #{tpu_custom_call.1} parent=59 // pred_check_branch
          %410 = sbr.rel (%p408) target = $region84
        $region83: #{tpu_custom_call.1} parent=59 // pred_region
          %411 = dma.done [#allocation15], 2048
        $region84: #{tpu_custom_call.1} parent=59 // pred_fallthru
          _
        // Predicated region
        $region85: #{tpu_custom_call.1} parent=59 // pred_check
          %p412 = pneg %p239
        $region86: #{tpu_custom_call.1} parent=59 // pred_check_branch
          %414 = sbr.rel (%p412) target = $region88
        $region87: #{tpu_custom_call.1} parent=59 // pred_region
          %415 = dma.done [#allocation15], 16
        $region88: #{tpu_custom_call.1} parent=59 // pred_fallthru
          _
        %p416 = pneg %p45
        %p417 = pneg %p42
        %p418 = pneg %p66
        %p419 = pneg %p63
        %p420 = scmp.lt.s32.totalorder %s29, 1
        %s421 = scalar_select %p420, %s29, 1
        %s422 = smul.addr %s421, 9
        %s423 = smul.addr %s422, 8
        %s424 = scalar_lea.vmem %s2, %s423
        %p425 = pneg %p92
        %p426 = pneg %p89
        %p427 = pneg %p113
        %p428 = pneg %p110
        %p429 = pneg %p134
        %p430 = pneg %p131
        %p431 = pneg %p155
        %p432 = pneg %p152
        %p433 = pneg %p176
        %p434 = pneg %p173
        %p435 = pneg %p197
        %p436 = pneg %p194
        %p437 = pneg %p218
        %p438 = pneg %p215
        %p439 = pneg %p239
        %p440 = pneg %p236
        %p441 = pneg %p265
        %p442 = pneg %p262
        %s443 = sand.u32 %s252, 1
        %s444 = scalar_lea.sflag [#allocation7], %s443
        %s445 = sand.u32 %s252, 1
        %s446 = scalar_lea.vmem [#allocation17], %s445
        %p447 = scmp.lt.s32.totalorder %s29, 1
        %s448 = scalar_select %p447, %s29, 1
        %s449 = smul.addr %s448, 9
        %s450 = smul.addr %s449, 8
        %s451 = scalar_lea.vmem %s2, %s450
        %s454 = sshll.u32 1, 14
        %s455 = sxor.u32 4294967295, %s454
        %s457 = sld [smem:[#allocation0]]
        %s458 = sadd.s32 2, %s457
        %s460 = sshll.u32 7, 26
        %s461 = sxor.u32 4294967295, %s460
        %s462 = sand.u32 0, %s461
        %s463 = sshll.u32 %s458, 26
        %s464 = sor.u32 %s462, %s463
        %s465 = sshll.u32 [#allocation3], 4
        %s466 = int_to_ptr.vmem [resolvable:$true] %s465
        %469 = sst [smem:[#allocation19]] 256
        %s470 = scalar_lea.smem [#allocation19], 1
        %471 = sst [smem:[%s470]] 256
        %s472 = scalar_lea.smem [#allocation19], 2
        %473 = sst [smem:[%s472]] 2
        %s474 = scalar_lea.smem [#allocation19], 3
        %475 = sst [smem:[%s474]] 64
        %s476 = scalar_lea.smem [#allocation19], 4
        %477 = sst [smem:[%s476]] 128
        %s478 = scalar_lea.smem [#allocation19], 5
        %479 = sst [smem:[%s478]] 2
        %s480 = scalar_lea.smem [#allocation19], 6
        %481 = sst [smem:[%s480]] 128
        %s482 = scalar_lea.smem [#allocation19], 7
        %483 = sst [smem:[%s482]] 64
        %s484 = scalar_lea.smem [#allocation19], 8
        %485 = sst [smem:[%s484]] 4
        %487 = dma.general %s7, 24576, %s466, [#allocation4], [#allocation18], [#allocation19], %s464, 0
        %s488 = scalar_lea.hbm %s7, 24576
        %s489 = scalar_lea.vmem [#allocation3], 1536
        %s490 = scalar_lea.sflag [#allocation4], 1
        %s492 = sshll.u32 1, 14
        %s493 = sxor.u32 4294967295, %s492
        %s495 = sadd.s32 2, %s457
        %s497 = sshll.u32 7, 26
        %s498 = sxor.u32 4294967295, %s497
        %s499 = sand.u32 0, %s498
        %s500 = sshll.u32 %s495, 26
        %s501 = sor.u32 %s499, %s500
        %s502 = sshll.u32 %s489, 4
        %s503 = int_to_ptr.vmem [resolvable:$true] %s502
        %506 = sst [smem:[#allocation21]] 256
        %s507 = scalar_lea.smem [#allocation21], 1
        %508 = sst [smem:[%s507]] 256
        %s509 = scalar_lea.smem [#allocation21], 2
        %510 = sst [smem:[%s509]] 2
        %s511 = scalar_lea.smem [#allocation21], 3
        %512 = sst [smem:[%s511]] 64
        %s513 = scalar_lea.smem [#allocation21], 4
        %514 = sst [smem:[%s513]] 128
        %s515 = scalar_lea.smem [#allocation21], 5
        %516 = sst [smem:[%s515]] 2
        %s517 = scalar_lea.smem [#allocation21], 6
        %518 = sst [smem:[%s517]] 128
        %s519 = scalar_lea.smem [#allocation21], 7
        %520 = sst [smem:[%s519]] 64
        %s521 = scalar_lea.smem [#allocation21], 8
        %522 = sst [smem:[%s521]] 4
        %524 = dma.general %s488, 25600, %s503, %s490, [#allocation20], [#allocation21], %s501, 0
        %v525 = vld [vmem:[#allocation5] sm:$0xff]
        %v526 = vld [vmem:[#allocation5 + $0x8] sm:$0xff]
        %v527 = vld [vmem:[#allocation5 + $0x10] sm:$0xff]
        %v528 = vld [vmem:[#allocation5 + $0x18] sm:$0xff]
        %v529 = vld [vmem:[#allocation5 + $0x20] sm:$0xff]
        %v530 = vld [vmem:[#allocation5 + $0x28] sm:$0xff]
        %v531 = vld [vmem:[#allocation5 + $0x30] sm:$0x1]
        %v532 = vld [vmem:[%s451] sm:$0xff]
        %v533 = vld [vmem:[%s451 + $0x8] sm:$0xff]
        %v534 = vld [vmem:[%s451 + $0x10] sm:$0xff]
        %v535 = vld [vmem:[%s451 + $0x18] sm:$0xff]
        %v536 = vld [vmem:[%s451 + $0x20] sm:$0xff]
        %v537 = vld [vmem:[%s451 + $0x28] sm:$0xff]
        %v538 = vld [vmem:[%s451 + $0x30] sm:$0x1]
        %v539 = vld [vmem:[%s451 + $0x1] sm:$0xff]
        %v540 = vld [vmem:[%s451 + $0x9] sm:$0xff]
        %v541 = vld [vmem:[%s451 + $0x11] sm:$0xff]
        %v542 = vld [vmem:[%s451 + $0x19] sm:$0xff]
        %v543 = vld [vmem:[%s451 + $0x21] sm:$0xff]
        %v544 = vld [vmem:[%s451 + $0x29] sm:$0xff]
        %v545 = vld [vmem:[%s451 + $0x31] sm:$0x1]
        %v546 = vld [vmem:[%s451 + $0x2] sm:$0xff]
        %v547 = vld [vmem:[%s451 + $0xa] sm:$0xff]
        %v548 = vld [vmem:[%s451 + $0x12] sm:$0xff]
        %v549 = vld [vmem:[%s451 + $0x1a] sm:$0xff]
        %v550 = vld [vmem:[%s451 + $0x22] sm:$0xff]
        %v551 = vld [vmem:[%s451 + $0x2a] sm:$0xff]
        %v552 = vld [vmem:[%s451 + $0x32] sm:$0x1]
        %v553 = vld [vmem:[%s451 + $0x7] sm:$0xff]
        %v554 = vld [vmem:[%s451 + $0xf] sm:$0xff]
        %v555 = vld [vmem:[%s451 + $0x17] sm:$0xff]
        %v556 = vld [vmem:[%s451 + $0x1f] sm:$0xff]
        %v557 = vld [vmem:[%s451 + $0x27] sm:$0xff]
        %v558 = vld [vmem:[%s451 + $0x2f] sm:$0xff]
        %v559 = vld [vmem:[%s451 + $0x37] sm:$0x1]
        %v560 = vld [vmem:[%s451 + $0x30] sm:$0xff]
        %v561 = vld [vmem:[%s451 + $0x38] sm:$0x1]
        %v562 = vld [vmem:[%s451 + $0x31] sm:$0xff]
        %v563 = vld [vmem:[%s451 + $0x39] sm:$0x1]
        %v564 = vld [vmem:[%s451 + $0xe] sm:$0xff]
        %v565 = vld [vmem:[%s451 + $0x16] sm:$0xff]
        %v566 = vld [vmem:[%s451 + $0x1e] sm:$0xff]
        %v567 = vld [vmem:[%s451 + $0x26] sm:$0xff]
        %v568 = vld [vmem:[%s451 + $0x2e] sm:$0xff]
        %v569 = vld [vmem:[%s451 + $0x36] sm:$0xff]
        %v570 = vld [vmem:[%s451 + $0x3e] sm:$0x1]
        %v571 = vld [vmem:[%s451 + $0x37] sm:$0xff]
        %v572 = vld [vmem:[%s451 + $0x3f] sm:$0x1]
        %v573 = vld [vmem:[%s451 + $0x38] sm:$0xff]
        %v574 = vld [vmem:[%s451 + $0x40] sm:$0x1]
        %582 = vrot.lane.b32.xlu0 %v539, 6
        %v583 = vpop.permute.xlu0 %582
        %584 = vrot.lane.b32.xlu0 %v540, 6
        %v585 = vpop.permute.xlu0 %584
        %586 = vrot.lane.b32.xlu0 %v541, 6
        %v587 = vpop.permute.xlu0 %586
        %588 = vrot.lane.b32.xlu0 %v542, 6
        %v589 = vpop.permute.xlu0 %588
        %590 = vrot.lane.b32.xlu0 %v543, 6
        %v591 = vpop.permute.xlu0 %590
        %592 = vrot.lane.b32.xlu0 %v544, 6
        %v593 = vpop.permute.xlu0 %592
        %594 = vrot.lane.b32.xlu0 %v545, 6
        %v595 = vpop.permute.xlu0 %594
        %610 = vrot.lane.b32.xlu0 %v546, 12
        %v611 = vpop.permute.xlu0 %610
        %612 = vrot.lane.b32.xlu0 %v547, 12
        %v613 = vpop.permute.xlu0 %612
        %614 = vrot.lane.b32.xlu0 %v548, 12
        %v615 = vpop.permute.xlu0 %614
        %616 = vrot.lane.b32.xlu0 %v549, 12
        %v617 = vpop.permute.xlu0 %616
        %618 = vrot.lane.b32.xlu0 %v550, 12
        %v619 = vpop.permute.xlu0 %618
        %620 = vrot.lane.b32.xlu0 %v551, 12
        %v621 = vpop.permute.xlu0 %620
        %622 = vrot.lane.b32.xlu0 %v552, 12
        %v623 = vpop.permute.xlu0 %622
        %638 = vrot.lane.b32.xlu0 %v553, 18
        %v639 = vpop.permute.xlu0 %638
        %640 = vrot.lane.b32.xlu0 %v554, 18
        %v641 = vpop.permute.xlu0 %640
        %642 = vrot.lane.b32.xlu0 %v555, 18
        %v643 = vpop.permute.xlu0 %642
        %644 = vrot.lane.b32.xlu0 %v556, 18
        %v645 = vpop.permute.xlu0 %644
        %646 = vrot.lane.b32.xlu0 %v557, 18
        %v647 = vpop.permute.xlu0 %646
        %648 = vrot.lane.b32.xlu0 %v558, 18
        %v649 = vpop.permute.xlu0 %648
        %650 = vrot.lane.b32.xlu0 %v559, 18
        %v651 = vpop.permute.xlu0 %650
        %666 = vrot.lane.b32.xlu0 %v533, 24
        %v667 = vpop.permute.xlu0 %666
        %668 = vrot.lane.b32.xlu0 %v534, 24
        %v669 = vpop.permute.xlu0 %668
        %670 = vrot.lane.b32.xlu0 %v535, 24
        %v671 = vpop.permute.xlu0 %670
        %672 = vrot.lane.b32.xlu0 %v536, 24
        %v673 = vpop.permute.xlu0 %672
        %674 = vrot.lane.b32.xlu0 %v537, 24
        %v675 = vpop.permute.xlu0 %674
        %676 = vrot.lane.b32.xlu0 %v560, 24
        %v677 = vpop.permute.xlu0 %676
        %678 = vrot.lane.b32.xlu0 %v561, 24
        %v679 = vpop.permute.xlu0 %678
        %689 = vrot.lane.b32.xlu0 %v540, 30
        %v690 = vpop.permute.xlu0 %689
        %691 = vrot.lane.b32.xlu0 %v541, 30
        %v692 = vpop.permute.xlu0 %691
        %693 = vrot.lane.b32.xlu0 %v542, 30
        %v694 = vpop.permute.xlu0 %693
        %695 = vrot.lane.b32.xlu0 %v543, 30
        %v696 = vpop.permute.xlu0 %695
        %697 = vrot.lane.b32.xlu0 %v544, 30
        %v698 = vpop.permute.xlu0 %697
        %699 = vrot.lane.b32.xlu0 %v562, 30
        %v700 = vpop.permute.xlu0 %699
        %701 = vrot.lane.b32.xlu0 %v563, 30
        %v702 = vpop.permute.xlu0 %701
        %717 = vrot.lane.b32.xlu0 %v564, 36
        %v718 = vpop.permute.xlu0 %717
        %719 = vrot.lane.b32.xlu0 %v565, 36
        %v720 = vpop.permute.xlu0 %719
        %721 = vrot.lane.b32.xlu0 %v566, 36
        %v722 = vpop.permute.xlu0 %721
        %723 = vrot.lane.b32.xlu0 %v567, 36
        %v724 = vpop.permute.xlu0 %723
        %725 = vrot.lane.b32.xlu0 %v568, 36
        %v726 = vpop.permute.xlu0 %725
        %727 = vrot.lane.b32.xlu0 %v569, 36
        %v728 = vpop.permute.xlu0 %727
        %729 = vrot.lane.b32.xlu0 %v570, 36
        %v730 = vpop.permute.xlu0 %729
        %740 = vrot.lane.b32.xlu0 %v554, 42
        %v741 = vpop.permute.xlu0 %740
        %742 = vrot.lane.b32.xlu0 %v555, 42
        %v743 = vpop.permute.xlu0 %742
        %744 = vrot.lane.b32.xlu0 %v556, 42
        %v745 = vpop.permute.xlu0 %744
        %746 = vrot.lane.b32.xlu0 %v557, 42
        %v747 = vpop.permute.xlu0 %746
        %748 = vrot.lane.b32.xlu0 %v558, 42
        %v749 = vpop.permute.xlu0 %748
        %750 = vrot.lane.b32.xlu0 %v571, 42
        %v751 = vpop.permute.xlu0 %750
        %752 = vrot.lane.b32.xlu0 %v572, 42
        %v753 = vpop.permute.xlu0 %752
        %763 = vrot.lane.b32.xlu0 %v534, 48
        %v764 = vpop.permute.xlu0 %763
        %765 = vrot.lane.b32.xlu0 %v535, 48
        %v766 = vpop.permute.xlu0 %765
        %767 = vrot.lane.b32.xlu0 %v536, 48
        %v768 = vpop.permute.xlu0 %767
        %769 = vrot.lane.b32.xlu0 %v537, 48
        %v770 = vpop.permute.xlu0 %769
        %771 = vrot.lane.b32.xlu0 %v560, 48
        %v772 = vpop.permute.xlu0 %771
        %773 = vrot.lane.b32.xlu0 %v573, 48
        %v774 = vpop.permute.xlu0 %773
        %775 = vrot.lane.b32.xlu0 %v574, 48
        %v776 = vpop.permute.xlu0 %775
        %vm784 = vcmask 48128
        %v785 = vsel %vm784, %v532, %v583
        %v786 = vsel %vm784, %v533, %v585
        %v787 = vsel %vm784, %v534, %v587
        %v788 = vsel %vm784, %v535, %v589
        %v789 = vsel %vm784, %v536, %v591
        %v790 = vsel %vm784, %v537, %v593
        %v791 = vsel %vm784, %v538, %v595
        %vm792 = vcmask 97280
        %v793 = vsel %vm792, %v785, %v611
        %v794 = vsel %vm792, %v786, %v613
        %v795 = vsel %vm792, %v787, %v615
        %v796 = vsel %vm792, %v788, %v617
        %v797 = vsel %vm792, %v789, %v619
        %v798 = vsel %vm792, %v790, %v621
        %v799 = vsel %vm792, %v791, %v623
        %vm800 = vcmask 146432
        %v801 = vsel %vm800, %v793, %v639
        %v802 = vsel %vm800, %v794, %v641
        %v803 = vsel %vm800, %v795, %v643
        %v804 = vsel %vm800, %v796, %v645
        %v805 = vsel %vm800, %v797, %v647
        %v806 = vsel %vm800, %v798, %v649
        %v807 = vsel %vm800, %v799, %v651
        %vm808 = vcmask 195584
        %v809 = vsel %vm808, %v801, %v667
        %v810 = vsel %vm808, %v802, %v669
        %v811 = vsel %vm808, %v803, %v671
        %v812 = vsel %vm808, %v804, %v673
        %v813 = vsel %vm808, %v805, %v675
        %v814 = vsel %vm808, %v806, %v677
        %v815 = vsel %vm808, %v807, %v679
        %vm816 = vcmask 244736
        %v817 = vsel %vm816, %v809, %v690
        %v818 = vsel %vm816, %v810, %v692
        %v819 = vsel %vm816, %v811, %v694
        %v820 = vsel %vm816, %v812, %v696
        %v821 = vsel %vm816, %v813, %v698
        %v822 = vsel %vm816, %v814, %v700
        %v823 = vsel %vm816, %v815, %v702
        %vm824 = vcmask 293888
        %v825 = vsel %vm824, %v817, %v718
        %v826 = vsel %vm824, %v818, %v720
        %v827 = vsel %vm824, %v819, %v722
        %v828 = vsel %vm824, %v820, %v724
        %v829 = vsel %vm824, %v821, %v726
        %v830 = vsel %vm824, %v822, %v728
        %v831 = vsel %vm824, %v823, %v730
        %vm832 = vcmask 343040
        %v833 = vsel %vm832, %v825, %v741
        %v834 = vsel %vm832, %v826, %v743
        %v835 = vsel %vm832, %v827, %v745
        %v836 = vsel %vm832, %v828, %v747
        %v837 = vsel %vm832, %v829, %v749
        %v838 = vsel %vm832, %v830, %v751
        %v839 = vsel %vm832, %v831, %v753
        %vm840 = vcmask 392192
        %v841 = vsel %vm840, %v833, %v764
        %v842 = vsel %vm840, %v834, %v766
        %v843 = vsel %vm840, %v835, %v768
        %v844 = vsel %vm840, %v836, %v770
        %v845 = vsel %vm840, %v837, %v772
        %v846 = vsel %vm840, %v838, %v774
        %v847 = vsel %vm840, %v839, %v776
        %v848 = vmul.f32 %v841, %v525
        %v849 = vmul.f32 %v842, %v526
        %v850 = vmul.f32 %v843, %v527
        %v851 = vmul.f32 %v844, %v528
        %v852 = vmul.f32 %v845, %v529
        %v853 = vmul.f32 %v846, %v530
        %v854 = vmul.f32 %v847, %v531
        %v855 = vpack.c.bf16 %v849, %v848
        %v856 = vpack.c.bf16 %v851, %v850
        %v857 = vpack.c.bf16 %v853, %v852
        %v858 = vpack.c.bf16 %v854, %v854
        %v859 = vld [vmem:[%s3] sm:$0xf]
        %v860 = vld [vmem:[%s3 + $0x4] sm:$0xf]
        %v861 = vld [vmem:[%s3 + $0x8] sm:$0xf]
        %v862 = vld [vmem:[%s3 + $0xc] sm:$0xf]
        %v863 = vld [vmem:[%s3 + $0x10] sm:$0xf]
        %v864 = vld [vmem:[%s3 + $0x14] sm:$0xf]
        %v865 = vld [vmem:[%s3 + $0x18] sm:$0x7]
        %v866 = vld [vmem:[#allocation10] sm:$0x1]
        %v868 = vlaneseq
        %v869 = vshrl.u32 %v868, 7
        %v870 = vsub.s32 0, %v869
        %v871 = vrot.slane %v866, %v870
        %v880 = vunpack.c.l.b16 %v859
        %v881 = vunpack.c.l.b16 %v860
        %v882 = vunpack.c.l.b16 %v861
        %v883 = vunpack.c.l.b16 %v862
        %v884 = vunpack.c.l.b16 %v863
        %v885 = vunpack.c.l.b16 %v864
        %v886 = vunpack.c.l.b16 %v865
        %v887 = vpack.c.b16 %v881, %v880
        %v888 = vpack.c.b16 %v883, %v882
        %v889 = vpack.c.b16 %v885, %v884
        %v890 = vpack.c.b16 %v886, %v886
        %vm894 = vcmask 441344
        %v896 = vsel %vm894, %v855, 0
        %v899 = vsel %vm894, %v856, 0
        %v902 = vsel %vm894, %v857, 0
        %v905 = vsel %vm894, %v858, 0
        %vm907 = vcmask 1042432
        %v909 = vsel %vm907, %v890, 0
        %911 = vmatprep.subr.bf16.mxu0 0
        %912 = vmatpush1.bf16.msra.mxu0 %v887
        %913 = vmatprep.subr.bf16.mxu0 0
        %914 = vmatpush1.bf16.msra.mxu0 %v888
        %915 = vmatprep.subr.bf16.mxu0 0
        %916 = vmatpush1.bf16.msra.mxu0 %v889
        %917 = vmatprep.subr.bf16.mxu0 0
        %918 = vmatpush1.bf16.msra.mxu0 %v909
        %919 = vmatprep.subr.bf16.mxu0 0
        %920 = vmatpush1.bf16.msra.mxu0 0
        %921 = vmatprep.subr.bf16.mxu0 0
        %922 = vmatpush1.bf16.msra.mxu0 0
        %923 = vmatprep.subr.bf16.mxu0 0
        %924 = vmatpush1.bf16.msra.mxu0 0
        %925 = vmatprep.subr.bf16.mxu0 0
        %926 = vmatpush1.bf16.msra.mxu0 0
        %927 = vmatprep.subr.bf16.mxu0 0
        %928 = vmatpush1.bf16.msra.mxu0 0
        %929 = vmatprep.subr.bf16.mxu0 0
        %930 = vmatpush1.bf16.msra.mxu0 0
        %931 = vmatprep.subr.bf16.mxu0 0
        %932 = vmatpush1.bf16.msra.mxu0 0
        %933 = vmatprep.subr.bf16.mxu0 0
        %934 = vmatpush1.bf16.msra.mxu0 0
        %935 = vmatprep.subr.bf16.mxu0 0
        %936 = vmatpush1.bf16.msra.mxu0 0
        %937 = vmatprep.subr.bf16.mxu0 0
        %938 = vmatpush1.bf16.msra.mxu0 0
        %939 = vmatprep.subr.bf16.mxu0 0
        %940 = vmatpush1.bf16.msra.mxu0 0
        %941 = vmatprep.subr.bf16.mxu0 0
        %942 = vmatpush1.bf16.msra.mxu0 0
        %943 = vmatprep.mubr.bf16.mxu0 0
        %944 = vmatmul.mubr.bf16.gmra.mrb[0].mxu0 %v896
        %v945 = vpop.f32.mrb[0].mxu0
        %v946 = vadd.f32 %v871, %v945
        %v947 = vpop.f32.mrb[0].mxu0
        %v948 = vpop.f32.mrb[0].mxu0
        %v949 = vadd.f32 %v871, %v948
        %v950 = vpop.f32.mrb[0].mxu0
        %951 = vmatprep.mubr.bf16.mxu0 0
        %952 = vmatmul.mubr.bf16.gmra.mrb[0].mxu0 %v899
        %v953 = vpop.f32.mrb[0].mxu0
        %v954 = vadd.f32 %v871, %v953
        %v955 = vpop.f32.mrb[0].mxu0
        %v956 = vpop.f32.mrb[0].mxu0
        %v957 = vadd.f32 %v871, %v956
        %v958 = vpop.f32.mrb[0].mxu0
        %959 = vmatprep.mubr.bf16.mxu0 0
        %960 = vmatmul.mubr.bf16.gmra.mrb[0].mxu0 %v902
        %v961 = vpop.f32.mrb[0].mxu0
        %v962 = vadd.f32 %v871, %v961
        %v963 = vpop.f32.mrb[0].mxu0
        %v964 = vpop.f32.mrb[0].mxu0
        %v965 = vadd.f32 %v871, %v964
        %v966 = vpop.f32.mrb[0].mxu0
        %967 = vmatprep.mubr.bf16.mxu0 0
        %968 = vmatmul.mubr.bf16.gmra.mrb[0].mxu0 %v905
        %v969 = vpop.f32.mrb[0].mxu0
        %v970 = vadd.f32 %v871, %v969
        %v971 = vpop.f32.mrb[0].mxu0
        %v972 = vpop.f32.mrb[0].mxu0
        %v973 = vpop.f32.mrb[0].mxu0
        %974 = vdwg.mxu0
        %v975 = vmax.f32 %v946, 0.0
        %v976 = vmax.f32 %v949, 0.0
        %v977 = vmax.f32 %v954, 0.0
        %v978 = vmax.f32 %v957, 0.0
        %v979 = vmax.f32 %v962, 0.0
        %v980 = vmax.f32 %v965, 0.0
        %v981 = vmax.f32 %v970, 0.0
        %vm982 = vcmask 261120
        %983 = vst.msk [vmem:[#allocation2] sm:$0xff] %vm982, 0.0
        %984 = vst.msk [vmem:[#allocation2 + $0x39] sm:$0xff] %vm982, 0.0
        %985 = vst.msk [vmem:[#allocation2 + $0x8] sm:$0xff] %vm982, %v975
        %986 = vst.msk [vmem:[#allocation2 + $0x10] sm:$0xff] %vm982, %v976
        %987 = vst.msk [vmem:[#allocation2 + $0x18] sm:$0xff] %vm982, %v977
        %988 = vst.msk [vmem:[#allocation2 + $0x20] sm:$0xff] %vm982, %v978
        %989 = vst.msk [vmem:[#allocation2 + $0x28] sm:$0xff] %vm982, %v979
        %990 = vst.msk [vmem:[#allocation2 + $0x30] sm:$0xff] %vm982, %v980
        %vm991 = vcmask 253952
        %992 = vst.msk [vmem:[#allocation2 + $0x38] sm:$0x1] %vm991, %v981
        %v993 = vld [vmem:[#allocation8] sm:$0xff]
        %v994 = vld [vmem:[#allocation8 + $0x8] sm:$0xff]
        %v995 = vld [vmem:[#allocation8 + $0x10] sm:$0xff]
        %v996 = vld [vmem:[#allocation8 + $0x18] sm:$0xff]
        %v997 = vld [vmem:[#allocation8 + $0x20] sm:$0xff]
        %v998 = vld [vmem:[#allocation8 + $0x28] sm:$0xff]
        %v999 = vld [vmem:[#allocation8 + $0x30] sm:$0xff]
        %v1000 = vld [vmem:[#allocation8 + $0x38] sm:$0xff]
        %v1001 = vld [vmem:[#allocation8 + $0x40] sm:$0xff]
        %v1002 = vld [vmem:[#allocation8 + $0x48] sm:$0xff]
        %v1003 = vld [vmem:[#allocation8 + $0x50] sm:$0xff]
        %v1004 = vld [vmem:[#allocation8 + $0x58] sm:$0xff]
        %v1005 = vld [vmem:[#allocation8 + $0x60] sm:$0xff]
        %v1006 = vld [vmem:[#allocation8 + $0x68] sm:$0xff]
        %v1007 = vld [vmem:[#allocation8 + $0x70] sm:$0xff]
        %v1008 = vld [vmem:[#allocation8 + $0x78] sm:$0xff]
        %v1009 = vld [vmem:[#allocation8 + $0x80] sm:$0xff]
        %v1010 = vld [vmem:[#allocation8 + $0x88] sm:$0xff]
        %v1011 = vld [vmem:[#allocation8 + $0x90] sm:$0x1]
        %v1012 = vld [vmem:[#allocation8 + $0x98] sm:$0x1]
        %v1013 = vld [vmem:[#allocation8 + $0xa0] sm:$0x1]
        %v1014 = vld [vmem:[#allocation2] sm:$0xff]
        %v1015 = vld [vmem:[#allocation2 + $0x8] sm:$0xff]
        %v1016 = vld [vmem:[#allocation2 + $0x10] sm:$0xff]
        %v1017 = vld [vmem:[#allocation2 + $0x18] sm:$0xff]
        %v1018 = vld [vmem:[#allocation2 + $0x20] sm:$0xff]
        %v1019 = vld [vmem:[#allocation2 + $0x28] sm:$0xff]
        %v1020 = vld [vmem:[#allocation2 + $0x30] sm:$0x1]
        %v1021 = vld [vmem:[#allocation2 + $0x1] sm:$0xff]
        %v1022 = vld [vmem:[#allocation2 + $0x9] sm:$0xff]
        %v1023 = vld [vmem:[#allocation2 + $0x11] sm:$0xff]
        %v1024 = vld [vmem:[#allocation2 + $0x19] sm:$0xff]
        %v1025 = vld [vmem:[#allocation2 + $0x21] sm:$0xff]
        %v1026 = vld [vmem:[#allocation2 + $0x29] sm:$0xff]
        %v1027 = vld [vmem:[#allocation2 + $0x31] sm:$0x1]
        %v1028 = vld [vmem:[#allocation2 + $0x2] sm:$0xff]
        %v1029 = vld [vmem:[#allocation2 + $0xa] sm:$0xff]
        %v1030 = vld [vmem:[#allocation2 + $0x12] sm:$0xff]
        %v1031 = vld [vmem:[#allocation2 + $0x1a] sm:$0xff]
        %v1032 = vld [vmem:[#allocation2 + $0x22] sm:$0xff]
        %v1033 = vld [vmem:[#allocation2 + $0x2a] sm:$0xff]
        %v1034 = vld [vmem:[#allocation2 + $0x32] sm:$0x1]
        %v1035 = vld [vmem:[#allocation2 + $0x7] sm:$0xff]
        %v1036 = vld [vmem:[#allocation2 + $0xf] sm:$0xff]
        %v1037 = vld [vmem:[#allocation2 + $0x17] sm:$0xff]
        %v1038 = vld [vmem:[#allocation2 + $0x1f] sm:$0xff]
        %v1039 = vld [vmem:[#allocation2 + $0x27] sm:$0xff]
        %v1040 = vld [vmem:[#allocation2 + $0x2f] sm:$0xff]
        %v1041 = vld [vmem:[#allocation2 + $0x37] sm:$0x1]
        %v1042 = vld [vmem:[#allocation2 + $0x30] sm:$0xff]
        %v1043 = vld [vmem:[#allocation2 + $0x38] sm:$0x1]
        %v1044 = vld [vmem:[#allocation2 + $0x31] sm:$0xff]
        %v1045 = vld [vmem:[#allocation2 + $0x39] sm:$0x1]
        %v1046 = vld [vmem:[#allocation2 + $0xe] sm:$0xff]
        %v1047 = vld [vmem:[#allocation2 + $0x16] sm:$0xff]
        %v1048 = vld [vmem:[#allocation2 + $0x1e] sm:$0xff]
        %v1049 = vld [vmem:[#allocation2 + $0x26] sm:$0xff]
        %v1050 = vld [vmem:[#allocation2 + $0x2e] sm:$0xff]
        %v1051 = vld [vmem:[#allocation2 + $0x36] sm:$0xff]
        %v1052 = vld [vmem:[#allocation2 + $0x3e] sm:$0x1]
        %v1053 = vld [vmem:[#allocation2 + $0x37] sm:$0xff]
        %v1054 = vld [vmem:[#allocation2 + $0x3f] sm:$0x1]
        %v1055 = vld [vmem:[#allocation2 + $0x38] sm:$0xff]
        %v1056 = vld [vmem:[#allocation2 + $0x40] sm:$0x1]
        %1064 = vrot.lane.b32.xlu0 %v1021, 32
        %v1065 = vpop.permute.xlu0 %1064
        %1066 = vrot.lane.b32.xlu0 %v1022, 32
        %v1067 = vpop.permute.xlu0 %1066
        %1068 = vrot.lane.b32.xlu0 %v1023, 32
        %v1069 = vpop.permute.xlu0 %1068
        %1070 = vrot.lane.b32.xlu0 %v1024, 32
        %v1071 = vpop.permute.xlu0 %1070
        %1072 = vrot.lane.b32.xlu0 %v1025, 32
        %v1073 = vpop.permute.xlu0 %1072
        %1074 = vrot.lane.b32.xlu0 %v1026, 32
        %v1075 = vpop.permute.xlu0 %1074
        %1076 = vrot.lane.b32.xlu0 %v1027, 32
        %v1077 = vpop.permute.xlu0 %1076
        %1092 = vrot.lane.b32.xlu0 %v1028, 64
        %v1093 = vpop.permute.xlu0 %1092
        %1094 = vrot.lane.b32.xlu0 %v1029, 64
        %v1095 = vpop.permute.xlu0 %1094
        %1096 = vrot.lane.b32.xlu0 %v1030, 64
        %v1097 = vpop.permute.xlu0 %1096
        %1098 = vrot.lane.b32.xlu0 %v1031, 64
        %v1099 = vpop.permute.xlu0 %1098
        %1100 = vrot.lane.b32.xlu0 %v1032, 64
        %v1101 = vpop.permute.xlu0 %1100
        %1102 = vrot.lane.b32.xlu0 %v1033, 64
        %v1103 = vpop.permute.xlu0 %1102
        %1104 = vrot.lane.b32.xlu0 %v1034, 64
        %v1105 = vpop.permute.xlu0 %1104
        %1120 = vrot.lane.b32.xlu0 %v1035, 96
        %v1121 = vpop.permute.xlu0 %1120
        %1122 = vrot.lane.b32.xlu0 %v1036, 96
        %v1123 = vpop.permute.xlu0 %1122
        %1124 = vrot.lane.b32.xlu0 %v1037, 96
        %v1125 = vpop.permute.xlu0 %1124
        %1126 = vrot.lane.b32.xlu0 %v1038, 96
        %v1127 = vpop.permute.xlu0 %1126
        %1128 = vrot.lane.b32.xlu0 %v1039, 96
        %v1129 = vpop.permute.xlu0 %1128
        %1130 = vrot.lane.b32.xlu0 %v1040, 96
        %v1131 = vpop.permute.xlu0 %1130
        %1132 = vrot.lane.b32.xlu0 %v1041, 96
        %v1133 = vpop.permute.xlu0 %1132
        %1143 = vrot.lane.b32.xlu0 %v1044, 32
        %v1144 = vpop.permute.xlu0 %1143
        %1145 = vrot.lane.b32.xlu0 %v1045, 32
        %v1146 = vpop.permute.xlu0 %1145
        %1156 = vrot.lane.b32.xlu0 %v1046, 64
        %v1157 = vpop.permute.xlu0 %1156
        %1158 = vrot.lane.b32.xlu0 %v1047, 64
        %v1159 = vpop.permute.xlu0 %1158
        %1160 = vrot.lane.b32.xlu0 %v1048, 64
        %v1161 = vpop.permute.xlu0 %1160
        %1162 = vrot.lane.b32.xlu0 %v1049, 64
        %v1163 = vpop.permute.xlu0 %1162
        %1164 = vrot.lane.b32.xlu0 %v1050, 64
        %v1165 = vpop.permute.xlu0 %1164
        %1166 = vrot.lane.b32.xlu0 %v1051, 64
        %v1167 = vpop.permute.xlu0 %1166
        %1168 = vrot.lane.b32.xlu0 %v1052, 64
        %v1169 = vpop.permute.xlu0 %1168
        %1179 = vrot.lane.b32.xlu0 %v1053, 96
        %v1180 = vpop.permute.xlu0 %1179
        %1181 = vrot.lane.b32.xlu0 %v1054, 96
        %v1182 = vpop.permute.xlu0 %1181
        %v1185 = vsel %vm982, %v1014, %v1065
        %v1186 = vsel %vm982, %v1015, %v1067
        %v1187 = vsel %vm982, %v1016, %v1069
        %v1188 = vsel %vm982, %v1017, %v1071
        %v1189 = vsel %vm982, %v1018, %v1073
        %v1190 = vsel %vm982, %v1019, %v1075
        %v1191 = vsel %vm982, %v1020, %v1077
        %vm1192 = vcmask 523264
        %v1193 = vsel %vm1192, %v1185, %v1093
        %v1194 = vsel %vm1192, %v1186, %v1095
        %v1195 = vsel %vm1192, %v1187, %v1097
        %v1196 = vsel %vm1192, %v1188, %v1099
        %v1197 = vsel %vm1192, %v1189, %v1101
        %v1198 = vsel %vm1192, %v1190, %v1103
        %v1199 = vsel %vm1192, %v1191, %v1105
        %vm1200 = vcmask 785408
        %v1201 = vsel %vm1200, %v1193, %v1121
        %v1202 = vsel %vm1200, %v1194, %v1123
        %v1203 = vsel %vm1200, %v1195, %v1125
        %v1204 = vsel %vm1200, %v1196, %v1127
        %v1205 = vsel %vm1200, %v1197, %v1129
        %v1206 = vsel %vm1200, %v1198, %v1131
        %v1207 = vsel %vm1200, %v1199, %v1133
        %v1208 = vsel %vm982, %v1042, %v1144
        %v1209 = vsel %vm982, %v1043, %v1146
        %v1210 = vsel %vm1192, %v1186, %v1157
        %v1211 = vsel %vm1192, %v1187, %v1159
        %v1212 = vsel %vm1192, %v1188, %v1161
        %v1213 = vsel %vm1192, %v1189, %v1163
        %v1214 = vsel %vm1192, %v1190, %v1165
        %v1215 = vsel %vm1192, %v1208, %v1167
        %v1216 = vsel %vm1192, %v1209, %v1169
        %v1217 = vsel %vm1200, %v1210, %v1123
        %v1218 = vsel %vm1200, %v1211, %v1125
        %v1219 = vsel %vm1200, %v1212, %v1127
        %v1220 = vsel %vm1200, %v1213, %v1129
        %v1221 = vsel %vm1200, %v1214, %v1131
        %v1222 = vsel %vm1200, %v1215, %v1180
        %v1223 = vsel %vm1200, %v1216, %v1182
        %v1224 = vmul.f32 %v1201, %v993
        %v1225 = vmul.f32 %v1217, %v994
        %v1226 = vmul.f32 %v1016, %v995
        %v1227 = vmul.f32 %v1202, %v996
        %v1228 = vmul.f32 %v1218, %v997
        %v1229 = vmul.f32 %v1017, %v998
        %v1230 = vmul.f32 %v1203, %v999
        %v1231 = vmul.f32 %v1219, %v1000
        %v1232 = vmul.f32 %v1018, %v1001
        %v1233 = vmul.f32 %v1204, %v1002
        %v1234 = vmul.f32 %v1220, %v1003
        %v1235 = vmul.f32 %v1019, %v1004
        %v1236 = vmul.f32 %v1205, %v1005
        %v1237 = vmul.f32 %v1221, %v1006
        %v1238 = vmul.f32 %v1042, %v1007
        %v1239 = vmul.f32 %v1206, %v1008
        %v1240 = vmul.f32 %v1222, %v1009
        %v1241 = vmul.f32 %v1055, %v1010
        %v1242 = vmul.f32 %v1207, %v1011
        %v1243 = vmul.f32 %v1223, %v1012
        %v1244 = vmul.f32 %v1056, %v1013
        %v1245 = vpack.c.bf16 %v1227, %v1224
        %v1246 = vpack.c.bf16 %v1228, %v1225
        %v1247 = vpack.c.bf16 %v1229, %v1226
        %v1248 = vpack.c.bf16 %v1233, %v1230
        %v1249 = vpack.c.bf16 %v1234, %v1231
        %v1250 = vpack.c.bf16 %v1235, %v1232
        %v1251 = vpack.c.bf16 %v1239, %v1236
        %v1252 = vpack.c.bf16 %v1240, %v1237
        %v1253 = vpack.c.bf16 %v1241, %v1238
        %v1254 = vpack.c.bf16 %v1242, %v1242
        %v1255 = vpack.c.bf16 %v1243, %v1243
        %v1256 = vpack.c.bf16 %v1244, %v1244
        %v1257 = vld [vmem:[%s5] sm:$0xf]
        %v1258 = vld [vmem:[%s5 + $0x4] sm:$0xf]
        %v1259 = vld [vmem:[%s5 + $0x8] sm:$0xf]
        %v1260 = vld [vmem:[%s5 + $0xc] sm:$0xf]
        %v1261 = vld [vmem:[%s5 + $0x10] sm:$0xf]
        %v1262 = vld [vmem:[%s5 + $0x14] sm:$0xf]
        %v1263 = vld [vmem:[%s5 + $0x18] sm:$0xf]
        %v1264 = vld [vmem:[%s5 + $0x1c] sm:$0xf]
        %v1265 = vld [vmem:[%s5 + $0x20] sm:$0xf]
        %v1266 = vld [vmem:[%s5 + $0x24] sm:$0xf]
        %v1267 = vld [vmem:[%s5 + $0x28] sm:$0xf]
        %v1268 = vld [vmem:[%s5 + $0x2c] sm:$0xf]
        %v1269 = vld [vmem:[%s5 + $0x30] sm:$0xf]
        %v1270 = vld [vmem:[%s5 + $0x34] sm:$0xf]
        %v1271 = vld [vmem:[%s5 + $0x38] sm:$0xf]
        %v1272 = vld [vmem:[%s5 + $0x3c] sm:$0xf]
        %v1273 = vld [vmem:[%s5 + $0x40] sm:$0xf]
        %v1274 = vld [vmem:[%s5 + $0x44] sm:$0xf]
        %v1275 = vld [vmem:[%s5 + $0x48] sm:$0xf]
        %v1276 = vld [vmem:[%s5 + $0x4c] sm:$0xf]
        %v1277 = vld [vmem:[%s5 + $0x50] sm:$0xf]
        %v1278 = vld [vmem:[%s5 + $0x54] sm:$0xf]
        %v1279 = vld [vmem:[%s5 + $0x58] sm:$0xf]
        %v1280 = vld [vmem:[%s5 + $0x5c] sm:$0xf]
        %v1281 = vld [vmem:[%s5 + $0x60] sm:$0xf]
        %v1282 = vld [vmem:[%s5 + $0x64] sm:$0xf]
        %v1283 = vld [vmem:[%s5 + $0x68] sm:$0xf]
        %v1284 = vld [vmem:[%s5 + $0x6c] sm:$0xf]
        %v1285 = vld [vmem:[%s5 + $0x70] sm:$0xf]
        %v1286 = vld [vmem:[%s5 + $0x74] sm:$0xf]
        %v1287 = vld [vmem:[%s5 + $0x78] sm:$0xf]
        %v1288 = vld [vmem:[%s5 + $0x7c] sm:$0xf]
        %v1289 = vld [vmem:[%s5 + $0x80] sm:$0xf]
        %v1290 = vld [vmem:[%s5 + $0x84] sm:$0xf]
        %v1291 = vld [vmem:[%s5 + $0x88] sm:$0xf]
        %v1292 = vld [vmem:[%s5 + $0x8c] sm:$0xf]
        %v1293 = vld [vmem:[#allocation11] sm:$0x1]
        %v1295 = vlaneseq
        %v1296 = vshrl.u32 %v1295, 7
        %v1297 = vsub.s32 0, %v1296
        %v1298 = vrot.slane %v1293, %v1297
        %v1336 = vunpack.c.l.b16 %v1257
        %v1337 = vunpack.c.l.b16 %v1258
        %v1338 = vunpack.c.l.b16 %v1259
        %v1339 = vunpack.c.l.b16 %v1260
        %v1340 = vunpack.c.l.b16 %v1261
        %v1341 = vunpack.c.l.b16 %v1262
        %v1342 = vunpack.c.l.b16 %v1263
        %v1343 = vunpack.c.l.b16 %v1264
        %v1344 = vunpack.c.l.b16 %v1265
        %v1345 = vunpack.c.l.b16 %v1266
        %v1346 = vunpack.c.l.b16 %v1267
        %v1347 = vunpack.c.l.b16 %v1268
        %v1348 = vunpack.c.l.b16 %v1269
        %v1349 = vunpack.c.l.b16 %v1270
        %v1350 = vunpack.c.l.b16 %v1271
        %v1351 = vunpack.c.l.b16 %v1272
        %v1352 = vunpack.c.l.b16 %v1273
        %v1353 = vunpack.c.l.b16 %v1274
        %v1354 = vunpack.c.l.b16 %v1275
        %v1355 = vunpack.c.l.b16 %v1276
        %v1356 = vunpack.c.l.b16 %v1277
        %v1357 = vunpack.c.l.b16 %v1278
        %v1358 = vunpack.c.l.b16 %v1279
        %v1359 = vunpack.c.l.b16 %v1280
        %v1360 = vunpack.c.l.b16 %v1281
        %v1361 = vunpack.c.l.b16 %v1282
        %v1362 = vunpack.c.l.b16 %v1283
        %v1363 = vunpack.c.l.b16 %v1284
        %v1364 = vunpack.c.l.b16 %v1285
        %v1365 = vunpack.c.l.b16 %v1286
        %v1366 = vunpack.c.l.b16 %v1287
        %v1367 = vunpack.c.l.b16 %v1288
        %v1368 = vunpack.c.l.b16 %v1289
        %v1369 = vunpack.c.l.b16 %v1290
        %v1370 = vunpack.c.l.b16 %v1291
        %v1371 = vunpack.c.l.b16 %v1292
        %v1372 = vpack.c.b16 %v1337, %v1336
        %v1373 = vpack.c.b16 %v1339, %v1338
        %v1374 = vpack.c.b16 %v1341, %v1340
        %v1375 = vpack.c.b16 %v1343, %v1342
        %v1376 = vpack.c.b16 %v1345, %v1344
        %v1377 = vpack.c.b16 %v1347, %v1346
        %v1378 = vpack.c.b16 %v1349, %v1348
        %v1379 = vpack.c.b16 %v1351, %v1350
        %v1380 = vpack.c.b16 %v1353, %v1352
        %v1381 = vpack.c.b16 %v1355, %v1354
        %v1382 = vpack.c.b16 %v1357, %v1356
        %v1383 = vpack.c.b16 %v1359, %v1358
        %v1384 = vpack.c.b16 %v1361, %v1360
        %v1385 = vpack.c.b16 %v1363, %v1362
        %v1386 = vpack.c.b16 %v1365, %v1364
        %v1387 = vpack.c.b16 %v1367, %v1366
        %v1388 = vpack.c.b16 %v1369, %v1368
        %v1389 = vpack.c.b16 %v1371, %v1370
        %v1409 = vsel %vm982, %v1247, 0
        %v1412 = vsel %vm982, %v1250, 0
        %v1415 = vsel %vm982, %v1253, 0
        %v1418 = vsel %vm982, %v1256, 0
        %1420 = vmatprep.subr.bf16.mxu0 0
        %1421 = vmatpush1.bf16.msra.mxu0 %v1372
        %1422 = vmatprep.subr.bf16.mxu0 0
        %1423 = vmatpush1.bf16.msra.mxu0 %v1373
        %1424 = vmatprep.subr.bf16.mxu0 0
        %1425 = vmatpush1.bf16.msra.mxu0 %v1374
        %1426 = vmatprep.subr.bf16.mxu0 0
        %1427 = vmatpush1.bf16.msra.mxu0 %v1375
        %1428 = vmatprep.subr.bf16.mxu0 0
        %1429 = vmatpush1.bf16.msra.mxu0 %v1376
        %1430 = vmatprep.subr.bf16.mxu0 0
        %1431 = vmatpush1.bf16.msra.mxu0 %v1377
        %1432 = vmatprep.subr.bf16.mxu0 0
        %1433 = vmatpush1.bf16.msra.mxu0 %v1378
        %1434 = vmatprep.subr.bf16.mxu0 0
        %1435 = vmatpush1.bf16.msra.mxu0 %v1379
        %1436 = vmatprep.subr.bf16.mxu0 0
        %1437 = vmatpush1.bf16.msra.mxu0 %v1380
        %1438 = vmatprep.subr.bf16.mxu0 0
        %1439 = vmatpush1.bf16.msra.mxu0 %v1381
        %1440 = vmatprep.subr.bf16.mxu0 0
        %1441 = vmatpush1.bf16.msra.mxu0 %v1382
        %1442 = vmatprep.subr.bf16.mxu0 0
        %1443 = vmatpush1.bf16.msra.mxu0 %v1383
        %1444 = vmatprep.subr.bf16.mxu0 0
        %1445 = vmatpush1.bf16.msra.mxu0 %v1384
        %1446 = vmatprep.subr.bf16.mxu0 0
        %1447 = vmatpush1.bf16.msra.mxu0 %v1385
        %1448 = vmatprep.subr.bf16.mxu0 0
        %1449 = vmatpush1.bf16.msra.mxu0 %v1386
        %1450 = vmatprep.subr.bf16.mxu0 0
        %1451 = vmatpush1.bf16.msra.mxu0 %v1387
        %1452 = vmatprep.mubr.bf16.mxu0 %v1246
        %1453 = vmatmul.mubr.bf16.gmra.mrb[0].mxu0 %v1245
        %v1454 = vpop.f32.mrb[0].mxu0
        %v1455 = vadd.f32 %v1298, %v1454
        %v1456 = vpop.f32.mrb[0].mxu0
        %v1457 = vpop.f32.mrb[0].mxu0
        %v1458 = vadd.f32 %v1298, %v1457
        %v1459 = vpop.f32.mrb[0].mxu0
        %1460 = vmatprep.mubr.bf16.mxu0 %v1249
        %1461 = vmatmul.mubr.bf16.gmra.mrb[0].mxu0 %v1248
        %v1462 = vpop.f32.mrb[0].mxu0
        %v1463 = vadd.f32 %v1298, %v1462
        %v1464 = vpop.f32.mrb[0].mxu0
        %v1465 = vpop.f32.mrb[0].mxu0
        %v1466 = vadd.f32 %v1298, %v1465
        %v1467 = vpop.f32.mrb[0].mxu0
        %1468 = vmatprep.mubr.bf16.mxu0 %v1252
        %1469 = vmatmul.mubr.bf16.gmra.mrb[0].mxu0 %v1251
        %v1470 = vpop.f32.mrb[0].mxu0
        %v1471 = vadd.f32 %v1298, %v1470
        %v1472 = vpop.f32.mrb[0].mxu0
        %v1473 = vpop.f32.mrb[0].mxu0
        %v1474 = vadd.f32 %v1298, %v1473
        %v1475 = vpop.f32.mrb[0].mxu0
        %1476 = vmatprep.mubr.bf16.mxu0 %v1255
        %1477 = vmatmul.mubr.bf16.gmra.mrb[0].mxu0 %v1254
        %v1478 = vpop.f32.mrb[0].mxu0
        %v1479 = vadd.f32 %v1298, %v1478
        %v1480 = vpop.f32.mrb[0].mxu0
        %v1481 = vpop.f32.mrb[0].mxu0
        %v1482 = vpop.f32.mrb[0].mxu0
        %1483 = vdwg.mxu0
        %1484 = vmatprep.subr.bf16.mxu0 0
        %1485 = vmatpush1.bf16.msra.mxu0 %v1388
        %1486 = vmatprep.subr.bf16.mxu0 0
        %1487 = vmatpush1.bf16.msra.mxu0 %v1389
        %1488 = vmatprep.subr.bf16.mxu0 0
        %1489 = vmatpush1.bf16.msra.mxu0 0
        %1490 = vmatprep.subr.bf16.mxu0 0
        %1491 = vmatpush1.bf16.msra.mxu0 0
        %1492 = vmatprep.subr.bf16.mxu0 0
        %1493 = vmatpush1.bf16.msra.mxu0 0
        %1494 = vmatprep.subr.bf16.mxu0 0
        %1495 = vmatpush1.bf16.msra.mxu0 0
        %1496 = vmatprep.subr.bf16.mxu0 0
        %1497 = vmatpush1.bf16.msra.mxu0 0
        %1498 = vmatprep.subr.bf16.mxu0 0
        %1499 = vmatpush1.bf16.msra.mxu0 0
        %1500 = vmatprep.subr.bf16.mxu0 0
        %1501 = vmatpush1.bf16.msra.mxu0 0
        %1502 = vmatprep.subr.bf16.mxu0 0
        %1503 = vmatpush1.bf16.msra.mxu0 0
        %1504 = vmatprep.subr.bf16.mxu0 0
        %1505 = vmatpush1.bf16.msra.mxu0 0
        %1506 = vmatprep.subr.bf16.mxu0 0
        %1507 = vmatpush1.bf16.msra.mxu0 0
        %1508 = vmatprep.subr.bf16.mxu0 0
        %1509 = vmatpush1.bf16.msra.mxu0 0
        %1510 = vmatprep.subr.bf16.mxu0 0
        %1511 = vmatpush1.bf16.msra.mxu0 0
        %1512 = vmatprep.subr.bf16.mxu0 0
        %1513 = vmatpush1.bf16.msra.mxu0 0
        %1514 = vmatprep.subr.bf16.mxu0 0
        %1515 = vmatpush1.bf16.msra.mxu0 0
        %1516 = vmatprep.mubr.bf16.mxu0 0
        %1517 = vmatmul.mubr.bf16.gmra.mrb[0].mxu0 %v1409
        %v1518 = vpop.f32.mrb[0].mxu0
        %v1519 = vadd.f32 %v1455, %v1518
        %v1520 = vpop.f32.mrb[0].mxu0
        %v1521 = vpop.f32.mrb[0].mxu0
        %v1522 = vadd.f32 %v1458, %v1521
        %v1523 = vpop.f32.mrb[0].mxu0
        %1524 = vmatprep.mubr.bf16.mxu0 0
        %1525 = vmatmul.mubr.bf16.gmra.mrb[0].mxu0 %v1412
        %v1526 = vpop.f32.mrb[0].mxu0
        %v1527 = vadd.f32 %v1463, %v1526
        %v1528 = vpop.f32.mrb[0].mxu0
        %v1529 = vpop.f32.mrb[0].mxu0
        %v1530 = vadd.f32 %v1466, %v1529
        %v1531 = vpop.f32.mrb[0].mxu0
        %1532 = vmatprep.mubr.bf16.mxu0 0
        %1533 = vmatmul.mubr.bf16.gmra.mrb[0].mxu0 %v1415
        %v1534 = vpop.f32.mrb[0].mxu0
        %v1535 = vadd.f32 %v1471, %v1534
        %v1536 = vpop.f32.mrb[0].mxu0
        %v1537 = vpop.f32.mrb[0].mxu0
        %v1538 = vadd.f32 %v1474, %v1537
        %v1539 = vpop.f32.mrb[0].mxu0
        %1540 = vmatprep.mubr.bf16.mxu0 0
        %1541 = vmatmul.mubr.bf16.gmra.mrb[0].mxu0 %v1418
        %v1542 = vpop.f32.mrb[0].mxu0
        %v1543 = vadd.f32 %v1479, %v1542
        %v1544 = vpop.f32.mrb[0].mxu0
        %v1545 = vpop.f32.mrb[0].mxu0
        %v1546 = vpop.f32.mrb[0].mxu0
        %1547 = vdwg.mxu0
        %v1548 = vmax.f32 %v1519, 0.0
        %v1549 = vmax.f32 %v1522, 0.0
        %v1550 = vmax.f32 %v1527, 0.0
        %v1551 = vmax.f32 %v1530, 0.0
        %v1552 = vmax.f32 %v1535, 0.0
        %v1553 = vmax.f32 %v1538, 0.0
        %v1554 = vmax.f32 %v1543, 0.0
        %v1555 = vld [vmem:[#allocation13] sm:$0x3]
        %v1557 = vrot.slane %v1548, 1
        %1558 = vrot.lane.b32.xlu0 %v1557, 64
        %v1559 = vpop.permute.xlu0 %1558
        %v1561 = vrot.slane %v1548, 2
        %v1563 = vrot.slane %v1548, 3
        %1564 = vrot.lane.b32.xlu0 %v1563, 64
        %v1565 = vpop.permute.xlu0 %1564
        %v1567 = vrot.slane %v1548, 4
        %v1569 = vrot.slane %v1548, 5
        %1570 = vrot.lane.b32.xlu0 %v1569, 64
        %v1571 = vpop.permute.xlu0 %1570
        %v1573 = vrot.slane %v1548, 6
        %v1575 = vrot.slane %v1548, 7
        %1576 = vrot.lane.b32.xlu0 %v1575, 64
        %v1577 = vpop.permute.xlu0 %1576
        %v1580 = vrot.slane %v1549, 1
        %1581 = vrot.lane.b32.xlu0 %v1580, 64
        %v1582 = vpop.permute.xlu0 %1581
        %v1584 = vrot.slane %v1549, 2
        %v1586 = vrot.slane %v1549, 3
        %1587 = vrot.lane.b32.xlu0 %v1586, 64
        %v1588 = vpop.permute.xlu0 %1587
        %v1590 = vrot.slane %v1549, 4
        %v1592 = vrot.slane %v1549, 5
        %1593 = vrot.lane.b32.xlu0 %v1592, 64
        %v1594 = vpop.permute.xlu0 %1593
        %v1596 = vrot.slane %v1549, 6
        %v1598 = vrot.slane %v1549, 7
        %1599 = vrot.lane.b32.xlu0 %v1598, 64
        %v1600 = vpop.permute.xlu0 %1599
        %v1602 = vsel %vm1192, %v1548, %v1559
        %v1603 = vsel %vm1192, %v1561, %v1565
        %v1604 = vsel %vm1192, %v1567, %v1571
        %v1605 = vsel %vm1192, %v1573, %v1577
        %v1606 = vsel %vm1192, %v1549, %v1582
        %v1607 = vsel %vm1192, %v1584, %v1588
        %v1608 = vsel %vm1192, %v1590, %v1594
        %v1609 = vsel %vm1192, %v1596, %v1600
        %v1611 = vrot.slane %v1550, 1
        %1612 = vrot.lane.b32.xlu0 %v1611, 64
        %v1613 = vpop.permute.xlu0 %1612
        %v1615 = vrot.slane %v1550, 2
        %v1617 = vrot.slane %v1550, 3
        %1618 = vrot.lane.b32.xlu0 %v1617, 64
        %v1619 = vpop.permute.xlu0 %1618
        %v1621 = vrot.slane %v1550, 4
        %v1623 = vrot.slane %v1550, 5
        %1624 = vrot.lane.b32.xlu0 %v1623, 64
        %v1625 = vpop.permute.xlu0 %1624
        %v1627 = vrot.slane %v1550, 6
        %v1629 = vrot.slane %v1550, 7
        %1630 = vrot.lane.b32.xlu0 %v1629, 64
        %v1631 = vpop.permute.xlu0 %1630
        %v1633 = vsel %vm1192, %v1550, %v1613
        %v1634 = vsel %vm1192, %v1615, %v1619
        %v1635 = vsel %vm1192, %v1621, %v1625
        %v1636 = vsel %vm1192, %v1627, %v1631
        %v1637 = vpack.c.bf16 %v1602, %v1602
        %v1638 = vpack.c.bf16 %v1603, %v1603
        %v1639 = vpack.c.bf16 %v1604, %v1604
        %v1640 = vpack.c.bf16 %v1605, %v1605
        %v1641 = vpack.c.bf16 %v1606, %v1606
        %v1642 = vpack.c.bf16 %v1607, %v1607
        %v1643 = vpack.c.bf16 %v1608, %v1608
        %v1644 = vpack.c.bf16 %v1609, %v1609
        %v1645 = vpack.c.bf16 %v1633, %v1633
        %v1646 = vpack.c.bf16 %v1634, %v1634
        %v1647 = vpack.c.bf16 %v1635, %v1635
        %v1648 = vpack.c.bf16 %v1636, %v1636
        %s1649 = smul.u32 4, 192
        %s1650 = smul.u32 %s1649, 2
        %s1651 = sshll.u32 %s1650, 4
        %1652 = dma.done [#allocation4], %s1651
        %v1653 = vld [vmem:[#allocation3] sm:$0xff]
        %v1654 = vld [vmem:[#allocation3 + $0x8] sm:$0xff]
        %v1655 = vld [vmem:[#allocation3 + $0x10] sm:$0xff]
        %v1656 = vld [vmem:[#allocation3 + $0x18] sm:$0xff]
        %v1657 = vld [vmem:[#allocation3 + $0x20] sm:$0xff]
        %v1658 = vld [vmem:[#allocation3 + $0x28] sm:$0xff]
        %v1659 = vld [vmem:[#allocation3 + $0x30] sm:$0xff]
        %v1660 = vld [vmem:[#allocation3 + $0x38] sm:$0xff]
        %v1661 = vld [vmem:[#allocation3 + $0x40] sm:$0xff]
        %v1662 = vld [vmem:[#allocation3 + $0x48] sm:$0xff]
        %v1663 = vld [vmem:[#allocation3 + $0x50] sm:$0xff]
        %v1664 = vld [vmem:[#allocation3 + $0x58] sm:$0xff]
        %v1665 = vld [vmem:[#allocation3 + $0x60] sm:$0xff]
        %v1666 = vld [vmem:[#allocation3 + $0x68] sm:$0xff]
        %v1667 = vld [vmem:[#allocation3 + $0x70] sm:$0xff]
        %v1668 = vld [vmem:[#allocation3 + $0x78] sm:$0xff]
        %v1669 = vld [vmem:[#allocation3 + $0x80] sm:$0xff]
        %v1670 = vld [vmem:[#allocation3 + $0x88] sm:$0xff]
        %v1671 = vld [vmem:[#allocation3 + $0x90] sm:$0xff]
        %v1672 = vld [vmem:[#allocation3 + $0x98] sm:$0xff]
        %v1673 = vld [vmem:[#allocation3 + $0xa0] sm:$0xff]
        %v1674 = vld [vmem:[#allocation3 + $0xa8] sm:$0xff]
        %v1675 = vld [vmem:[#allocation3 + $0xb0] sm:$0xff]
        %v1676 = vld [vmem:[#allocation3 + $0xb8] sm:$0xff]
        %v1677 = vld [vmem:[#allocation3 + $0xc0] sm:$0xff]
        %v1678 = vld [vmem:[#allocation3 + $0xc8] sm:$0xff]
        %v1679 = vld [vmem:[#allocation3 + $0xd0] sm:$0xff]
        %v1680 = vld [vmem:[#allocation3 + $0xd8] sm:$0xff]
        %v1681 = vld [vmem:[#allocation3 + $0xe0] sm:$0xff]
        %v1682 = vld [vmem:[#allocation3 + $0xe8] sm:$0xff]
        %v1683 = vld [vmem:[#allocation3 + $0xf0] sm:$0xff]
        %v1684 = vld [vmem:[#allocation3 + $0xf8] sm:$0xff]
        %v1685 = vld [vmem:[#allocation3 + $0x100] sm:$0xff]
        %v1686 = vld [vmem:[#allocation3 + $0x108] sm:$0xff]
        %v1687 = vld [vmem:[#allocation3 + $0x110] sm:$0xff]
        %v1688 = vld [vmem:[#allocation3 + $0x118] sm:$0xff]
        %v1689 = vld [vmem:[#allocation3 + $0x120] sm:$0xff]
        %v1690 = vld [vmem:[#allocation3 + $0x128] sm:$0xff]
        %v1691 = vld [vmem:[#allocation3 + $0x130] sm:$0xff]
        %v1692 = vld [vmem:[#allocation3 + $0x138] sm:$0xff]
        %v1693 = vld [vmem:[#allocation3 + $0x140] sm:$0xff]
        %v1694 = vld [vmem:[#allocation3 + $0x148] sm:$0xff]
        %v1695 = vld [vmem:[#allocation3 + $0x150] sm:$0xff]
        %v1696 = vld [vmem:[#allocation3 + $0x158] sm:$0xff]
        %v1697 = vld [vmem:[#allocation3 + $0x160] sm:$0xff]
        %v1698 = vld [vmem:[#allocation3 + $0x168] sm:$0xff]
        %v1699 = vld [vmem:[#allocation3 + $0x170] sm:$0xff]
        %v1700 = vld [vmem:[#allocation3 + $0x178] sm:$0xff]
        %v1701 = vld [vmem:[#allocation3 + $0x180] sm:$0xff]
        %v1702 = vld [vmem:[#allocation3 + $0x188] sm:$0xff]
        %v1703 = vld [vmem:[#allocation3 + $0x190] sm:$0xff]
        %v1704 = vld [vmem:[#allocation3 + $0x198] sm:$0xff]
        %v1705 = vld [vmem:[#allocation3 + $0x1a0] sm:$0xff]
        %v1706 = vld [vmem:[#allocation3 + $0x1a8] sm:$0xff]
        %v1707 = vld [vmem:[#allocation3 + $0x1b0] sm:$0xff]
        %v1708 = vld [vmem:[#allocation3 + $0x1b8] sm:$0xff]
        %v1709 = vld [vmem:[#allocation3 + $0x1c0] sm:$0xff]
        %v1710 = vld [vmem:[#allocation3 + $0x1c8] sm:$0xff]
        %v1711 = vld [vmem:[#allocation3 + $0x1d0] sm:$0xff]
        %v1712 = vld [vmem:[#allocation3 + $0x1d8] sm:$0xff]
        %v1713 = vld [vmem:[#allocation3 + $0x1e0] sm:$0xff]
        %v1714 = vld [vmem:[#allocation3 + $0x1e8] sm:$0xff]
        %v1715 = vld [vmem:[#allocation3 + $0x1f0] sm:$0xff]
        %v1716 = vld [vmem:[#allocation3 + $0x1f8] sm:$0xff]
        %v1717 = vld [vmem:[#allocation3 + $0x200] sm:$0xff]
        %v1718 = vld [vmem:[#allocation3 + $0x208] sm:$0xff]
        %v1719 = vld [vmem:[#allocation3 + $0x210] sm:$0xff]
        %v1720 = vld [vmem:[#allocation3 + $0x218] sm:$0xff]
        %v1721 = vld [vmem:[#allocation3 + $0x220] sm:$0xff]
        %v1722 = vld [vmem:[#allocation3 + $0x228] sm:$0xff]
        %v1723 = vld [vmem:[#allocation3 + $0x230] sm:$0xff]
        %v1724 = vld [vmem:[#allocation3 + $0x238] sm:$0xff]
        %v1725 = vld [vmem:[#allocation3 + $0x240] sm:$0xff]
        %v1726 = vld [vmem:[#allocation3 + $0x248] sm:$0xff]
        %v1727 = vld [vmem:[#allocation3 + $0x250] sm:$0xff]
        %v1728 = vld [vmem:[#allocation3 + $0x258] sm:$0xff]
        %v1729 = vld [vmem:[#allocation3 + $0x260] sm:$0xff]
        %v1730 = vld [vmem:[#allocation3 + $0x268] sm:$0xff]
        %v1731 = vld [vmem:[#allocation3 + $0x270] sm:$0xff]
        %v1732 = vld [vmem:[#allocation3 + $0x278] sm:$0xff]
        %v1733 = vld [vmem:[#allocation3 + $0x280] sm:$0xff]
        %v1734 = vld [vmem:[#allocation3 + $0x288] sm:$0xff]
        %v1735 = vld [vmem:[#allocation3 + $0x290] sm:$0xff]
        %v1736 = vld [vmem:[#allocation3 + $0x298] sm:$0xff]
        %v1737 = vld [vmem:[#allocation3 + $0x2a0] sm:$0xff]
        %v1738 = vld [vmem:[#allocation3 + $0x2a8] sm:$0xff]
        %v1739 = vld [vmem:[#allocation3 + $0x2b0] sm:$0xff]
        %v1740 = vld [vmem:[#allocation3 + $0x2b8] sm:$0xff]
        %v1741 = vld [vmem:[#allocation3 + $0x2c0] sm:$0xff]
        %v1742 = vld [vmem:[#allocation3 + $0x2c8] sm:$0xff]
        %v1743 = vld [vmem:[#allocation3 + $0x2d0] sm:$0xff]
        %v1744 = vld [vmem:[#allocation3 + $0x2d8] sm:$0xff]
        %v1745 = vld [vmem:[#allocation3 + $0x2e0] sm:$0xff]
        %v1746 = vld [vmem:[#allocation3 + $0x2e8] sm:$0xff]
        %v1747 = vld [vmem:[#allocation3 + $0x2f0] sm:$0xff]
        %v1748 = vld [vmem:[#allocation3 + $0x2f8] sm:$0xff]
        %v1749 = vld [vmem:[#allocation3 + $0x300] sm:$0xff]
        %v1750 = vld [vmem:[#allocation3 + $0x308] sm:$0xff]
        %v1751 = vld [vmem:[#allocation3 + $0x310] sm:$0xff]
        %v1752 = vld [vmem:[#allocation3 + $0x318] sm:$0xff]
        %v1753 = vld [vmem:[#allocation3 + $0x320] sm:$0xff]
        %v1754 = vld [vmem:[#allocation3 + $0x328] sm:$0xff]
        %v1755 = vld [vmem:[#allocation3 + $0x330] sm:$0xff]
        %v1756 = vld [vmem:[#allocation3 + $0x338] sm:$0xff]
        %v1757 = vld [vmem:[#allocation3 + $0x340] sm:$0xff]
        %v1758 = vld [vmem:[#allocation3 + $0x348] sm:$0xff]
        %v1759 = vld [vmem:[#allocation3 + $0x350] sm:$0xff]
        %v1760 = vld [vmem:[#allocation3 + $0x358] sm:$0xff]
        %v1761 = vld [vmem:[#allocation3 + $0x360] sm:$0xff]
        %v1762 = vld [vmem:[#allocation3 + $0x368] sm:$0xff]
        %v1763 = vld [vmem:[#allocation3 + $0x370] sm:$0xff]
        %v1764 = vld [vmem:[#allocation3 + $0x378] sm:$0xff]
        %v1765 = vld [vmem:[#allocation3 + $0x380] sm:$0xff]
        %v1766 = vld [vmem:[#allocation3 + $0x388] sm:$0xff]
        %v1767 = vld [vmem:[#allocation3 + $0x390] sm:$0xff]
        %v1768 = vld [vmem:[#allocation3 + $0x398] sm:$0xff]
        %v1769 = vld [vmem:[#allocation3 + $0x3a0] sm:$0xff]
        %v1770 = vld [vmem:[#allocation3 + $0x3a8] sm:$0xff]
        %v1771 = vld [vmem:[#allocation3 + $0x3b0] sm:$0xff]
        %v1772 = vld [vmem:[#allocation3 + $0x3b8] sm:$0xff]
        %v1773 = vld [vmem:[#allocation3 + $0x3c0] sm:$0xff]
        %v1774 = vld [vmem:[#allocation3 + $0x3c8] sm:$0xff]
        %v1775 = vld [vmem:[#allocation3 + $0x3d0] sm:$0xff]
        %v1776 = vld [vmem:[#allocation3 + $0x3d8] sm:$0xff]
        %v1777 = vld [vmem:[#allocation3 + $0x3e0] sm:$0xff]
        %v1778 = vld [vmem:[#allocation3 + $0x3e8] sm:$0xff]
        %v1779 = vld [vmem:[#allocation3 + $0x3f0] sm:$0xff]
        %v1780 = vld [vmem:[#allocation3 + $0x3f8] sm:$0xff]
        %v1781 = vld [vmem:[#allocation3 + $0x400] sm:$0xff]
        %v1782 = vld [vmem:[#allocation3 + $0x408] sm:$0xff]
        %v1783 = vld [vmem:[#allocation3 + $0x410] sm:$0xff]
        %v1784 = vld [vmem:[#allocation3 + $0x418] sm:$0xff]
        %v1785 = vld [vmem:[#allocation3 + $0x420] sm:$0xff]
        %v1786 = vld [vmem:[#allocation3 + $0x428] sm:$0xff]
        %v1787 = vld [vmem:[#allocation3 + $0x430] sm:$0xff]
        %v1788 = vld [vmem:[#allocation3 + $0x438] sm:$0xff]
        %v1789 = vld [vmem:[#allocation3 + $0x440] sm:$0xff]
        %v1790 = vld [vmem:[#allocation3 + $0x448] sm:$0xff]
        %v1791 = vld [vmem:[#allocation3 + $0x450] sm:$0xff]
        %v1792 = vld [vmem:[#allocation3 + $0x458] sm:$0xff]
        %v1793 = vld [vmem:[#allocation3 + $0x460] sm:$0xff]
        %v1794 = vld [vmem:[#allocation3 + $0x468] sm:$0xff]
        %v1795 = vld [vmem:[#allocation3 + $0x470] sm:$0xff]
        %v1796 = vld [vmem:[#allocation3 + $0x478] sm:$0xff]
        %v1797 = vld [vmem:[#allocation3 + $0x480] sm:$0xff]
        %v1798 = vld [vmem:[#allocation3 + $0x488] sm:$0xff]
        %v1799 = vld [vmem:[#allocation3 + $0x490] sm:$0xff]
        %v1800 = vld [vmem:[#allocation3 + $0x498] sm:$0xff]
        %v1801 = vld [vmem:[#allocation3 + $0x4a0] sm:$0xff]
        %v1802 = vld [vmem:[#allocation3 + $0x4a8] sm:$0xff]
        %v1803 = vld [vmem:[#allocation3 + $0x4b0] sm:$0xff]
        %v1804 = vld [vmem:[#allocation3 + $0x4b8] sm:$0xff]
        %v1805 = vld [vmem:[#allocation3 + $0x4c0] sm:$0xff]
        %v1806 = vld [vmem:[#allocation3 + $0x4c8] sm:$0xff]
        %v1807 = vld [vmem:[#allocation3 + $0x4d0] sm:$0xff]
        %v1808 = vld [vmem:[#allocation3 + $0x4d8] sm:$0xff]
        %v1809 = vld [vmem:[#allocation3 + $0x4e0] sm:$0xff]
        %v1810 = vld [vmem:[#allocation3 + $0x4e8] sm:$0xff]
        %v1811 = vld [vmem:[#allocation3 + $0x4f0] sm:$0xff]
        %v1812 = vld [vmem:[#allocation3 + $0x4f8] sm:$0xff]
        %v1813 = vld [vmem:[#allocation3 + $0x500] sm:$0xff]
        %v1814 = vld [vmem:[#allocation3 + $0x508] sm:$0xff]
        %v1815 = vld [vmem:[#allocation3 + $0x510] sm:$0xff]
        %v1816 = vld [vmem:[#allocation3 + $0x518] sm:$0xff]
        %v1817 = vld [vmem:[#allocation3 + $0x520] sm:$0xff]
        %v1818 = vld [vmem:[#allocation3 + $0x528] sm:$0xff]
        %v1819 = vld [vmem:[#allocation3 + $0x530] sm:$0xff]
        %v1820 = vld [vmem:[#allocation3 + $0x538] sm:$0xff]
        %v1821 = vld [vmem:[#allocation3 + $0x540] sm:$0xff]
        %v1822 = vld [vmem:[#allocation3 + $0x548] sm:$0xff]
        %v1823 = vld [vmem:[#allocation3 + $0x550] sm:$0xff]
        %v1824 = vld [vmem:[#allocation3 + $0x558] sm:$0xff]
        %v1825 = vld [vmem:[#allocation3 + $0x560] sm:$0xff]
        %v1826 = vld [vmem:[#allocation3 + $0x568] sm:$0xff]
        %v1827 = vld [vmem:[#allocation3 + $0x570] sm:$0xff]
        %v1828 = vld [vmem:[#allocation3 + $0x578] sm:$0xff]
        %v1829 = vld [vmem:[#allocation3 + $0x580] sm:$0xff]
        %v1830 = vld [vmem:[#allocation3 + $0x588] sm:$0xff]
        %v1831 = vld [vmem:[#allocation3 + $0x590] sm:$0xff]
        %v1832 = vld [vmem:[#allocation3 + $0x598] sm:$0xff]
        %v1833 = vld [vmem:[#allocation3 + $0x5a0] sm:$0xff]
        %v1834 = vld [vmem:[#allocation3 + $0x5a8] sm:$0xff]
        %v1835 = vld [vmem:[#allocation3 + $0x5b0] sm:$0xff]
        %v1836 = vld [vmem:[#allocation3 + $0x5b8] sm:$0xff]
        %v1837 = vld [vmem:[#allocation3 + $0x5c0] sm:$0xff]
        %v1838 = vld [vmem:[#allocation3 + $0x5c8] sm:$0xff]
        %v1839 = vld [vmem:[#allocation3 + $0x5d0] sm:$0xff]
        %v1840 = vld [vmem:[#allocation3 + $0x5d8] sm:$0xff]
        %v1841 = vld [vmem:[#allocation3 + $0x5e0] sm:$0xff]
        %v1842 = vld [vmem:[#allocation3 + $0x5e8] sm:$0xff]
        %v1843 = vld [vmem:[#allocation3 + $0x5f0] sm:$0xff]
        %v1844 = vld [vmem:[#allocation3 + $0x5f8] sm:$0xff]
        %1845 = vmatprep.subr.bf16.mxu0 %v1654
        %1846 = vmatpush1.bf16.msra.mxu0 %v1653
        %1847 = vmatprep.subr.bf16.mxu0 %v1656
        %1848 = vmatpush1.bf16.msra.mxu0 %v1655
        %1849 = vmatprep.subr.bf16.mxu0 %v1658
        %1850 = vmatpush1.bf16.msra.mxu0 %v1657
        %1851 = vmatprep.subr.bf16.mxu0 %v1660
        %1852 = vmatpush1.bf16.msra.mxu0 %v1659
        %1853 = vmatprep.subr.bf16.mxu0 %v1662
        %1854 = vmatpush1.bf16.msra.mxu0 %v1661
        %1855 = vmatprep.subr.bf16.mxu0 %v1664
        %1856 = vmatpush1.bf16.msra.mxu0 %v1663
        %1857 = vmatprep.subr.bf16.mxu0 %v1666
        %1858 = vmatpush1.bf16.msra.mxu0 %v1665
        %1859 = vmatprep.subr.bf16.mxu0 %v1668
        %1860 = vmatpush1.bf16.msra.mxu0 %v1667
        %1861 = vmatprep.subr.bf16.mxu0 %v1670
        %1862 = vmatpush1.bf16.msra.mxu0 %v1669
        %1863 = vmatprep.subr.bf16.mxu0 %v1672
        %1864 = vmatpush1.bf16.msra.mxu0 %v1671
        %1865 = vmatprep.subr.bf16.mxu0 %v1674
        %1866 = vmatpush1.bf16.msra.mxu0 %v1673
        %1867 = vmatprep.subr.bf16.mxu0 %v1676
        %1868 = vmatpush1.bf16.msra.mxu0 %v1675
        %1869 = vmatprep.subr.bf16.mxu0 %v1678
        %1870 = vmatpush1.bf16.msra.mxu0 %v1677
        %1871 = vmatprep.subr.bf16.mxu0 %v1680
        %1872 = vmatpush1.bf16.msra.mxu0 %v1679
        %1873 = vmatprep.subr.bf16.mxu0 %v1682
        %1874 = vmatpush1.bf16.msra.mxu0 %v1681
        %1875 = vmatprep.subr.bf16.mxu0 %v1684
        %1876 = vmatpush1.bf16.msra.mxu0 %v1683
        %1877 = vmatprep.mubr.bf16.mxu0 %v1638
        %1878 = vmatmul.mubr.bf16.gmra.mrb[0].mxu0 %v1637
        %v1879 = vpop.f32.mrb[0].mxu0
        %v1880 = vadd.f32 0.0, %v1879
        %v1881 = vpop.f32.mrb[0].mxu0
        %v1882 = vadd.f32 0.0, %v1881
        %v1883 = vpop.f32.mrb[0].mxu0
        %v1884 = vpop.f32.mrb[0].mxu0
        %1885 = vdwg.mxu0
        %1886 = vmatprep.subr.bf16.mxu0 %v1686
        %1887 = vmatpush1.bf16.msra.mxu0 %v1685
        %1888 = vmatprep.subr.bf16.mxu0 %v1688
        %1889 = vmatpush1.bf16.msra.mxu0 %v1687
        %1890 = vmatprep.subr.bf16.mxu0 %v1690
        %1891 = vmatpush1.bf16.msra.mxu0 %v1689
        %1892 = vmatprep.subr.bf16.mxu0 %v1692
        %1893 = vmatpush1.bf16.msra.mxu0 %v1691
        %1894 = vmatprep.subr.bf16.mxu0 %v1694
        %1895 = vmatpush1.bf16.msra.mxu0 %v1693
        %1896 = vmatprep.subr.bf16.mxu0 %v1696
        %1897 = vmatpush1.bf16.msra.mxu0 %v1695
        %1898 = vmatprep.subr.bf16.mxu0 %v1698
        %1899 = vmatpush1.bf16.msra.mxu0 %v1697
        %1900 = vmatprep.subr.bf16.mxu0 %v1700
        %1901 = vmatpush1.bf16.msra.mxu0 %v1699
        %1902 = vmatprep.subr.bf16.mxu0 %v1702
        %1903 = vmatpush1.bf16.msra.mxu0 %v1701
        %1904 = vmatprep.subr.bf16.mxu0 %v1704
        %1905 = vmatpush1.bf16.msra.mxu0 %v1703
        %1906 = vmatprep.subr.bf16.mxu0 %v1706
        %1907 = vmatpush1.bf16.msra.mxu0 %v1705
        %1908 = vmatprep.subr.bf16.mxu0 %v1708
        %1909 = vmatpush1.bf16.msra.mxu0 %v1707
        %1910 = vmatprep.subr.bf16.mxu0 %v1710
        %1911 = vmatpush1.bf16.msra.mxu0 %v1709
        %1912 = vmatprep.subr.bf16.mxu0 %v1712
        %1913 = vmatpush1.bf16.msra.mxu0 %v1711
        %1914 = vmatprep.subr.bf16.mxu0 %v1714
        %1915 = vmatpush1.bf16.msra.mxu0 %v1713
        %1916 = vmatprep.subr.bf16.mxu0 %v1716
        %1917 = vmatpush1.bf16.msra.mxu0 %v1715
        %1918 = vmatprep.mubr.bf16.mxu0 %v1640
        %1919 = vmatmul.mubr.bf16.gmra.mrb[0].mxu0 %v1639
        %v1920 = vpop.f32.mrb[0].mxu0
        %v1921 = vadd.f32 %v1880, %v1920
        %v1922 = vpop.f32.mrb[0].mxu0
        %v1923 = vadd.f32 %v1882, %v1922
        %v1924 = vpop.f32.mrb[0].mxu0
        %v1925 = vpop.f32.mrb[0].mxu0
        %1926 = vdwg.mxu0
        %1927 = vmatprep.subr.bf16.mxu0 %v1718
        %1928 = vmatpush1.bf16.msra.mxu0 %v1717
        %1929 = vmatprep.subr.bf16.mxu0 %v1720
        %1930 = vmatpush1.bf16.msra.mxu0 %v1719
        %1931 = vmatprep.subr.bf16.mxu0 %v1722
        %1932 = vmatpush1.bf16.msra.mxu0 %v1721
        %1933 = vmatprep.subr.bf16.mxu0 %v1724
        %1934 = vmatpush1.bf16.msra.mxu0 %v1723
        %1935 = vmatprep.subr.bf16.mxu0 %v1726
        %1936 = vmatpush1.bf16.msra.mxu0 %v1725
        %1937 = vmatprep.subr.bf16.mxu0 %v1728
        %1938 = vmatpush1.bf16.msra.mxu0 %v1727
        %1939 = vmatprep.subr.bf16.mxu0 %v1730
        %1940 = vmatpush1.bf16.msra.mxu0 %v1729
        %1941 = vmatprep.subr.bf16.mxu0 %v1732
        %1942 = vmatpush1.bf16.msra.mxu0 %v1731
        %1943 = vmatprep.subr.bf16.mxu0 %v1734
        %1944 = vmatpush1.bf16.msra.mxu0 %v1733
        %1945 = vmatprep.subr.bf16.mxu0 %v1736
        %1946 = vmatpush1.bf16.msra.mxu0 %v1735
        %1947 = vmatprep.subr.bf16.mxu0 %v1738
        %1948 = vmatpush1.bf16.msra.mxu0 %v1737
        %1949 = vmatprep.subr.bf16.mxu0 %v1740
        %1950 = vmatpush1.bf16.msra.mxu0 %v1739
        %1951 = vmatprep.subr.bf16.mxu0 %v1742
        %1952 = vmatpush1.bf16.msra.mxu0 %v1741
        %1953 = vmatprep.subr.bf16.mxu0 %v1744
        %1954 = vmatpush1.bf16.msra.mxu0 %v1743
        %1955 = vmatprep.subr.bf16.mxu0 %v1746
        %1956 = vmatpush1.bf16.msra.mxu0 %v1745
        %1957 = vmatprep.subr.bf16.mxu0 %v1748
        %1958 = vmatpush1.bf16.msra.mxu0 %v1747
        %1959 = vmatprep.mubr.bf16.mxu0 %v1642
        %1960 = vmatmul.mubr.bf16.gmra.mrb[0].mxu0 %v1641
        %v1961 = vpop.f32.mrb[0].mxu0
        %v1962 = vadd.f32 %v1921, %v1961
        %v1963 = vpop.f32.mrb[0].mxu0
        %v1964 = vadd.f32 %v1923, %v1963
        %v1965 = vpop.f32.mrb[0].mxu0
        %v1966 = vpop.f32.mrb[0].mxu0
        %1967 = vdwg.mxu0
        %1968 = vmatprep.subr.bf16.mxu0 %v1750
        %1969 = vmatpush1.bf16.msra.mxu0 %v1749
        %1970 = vmatprep.subr.bf16.mxu0 %v1752
        %1971 = vmatpush1.bf16.msra.mxu0 %v1751
        %1972 = vmatprep.subr.bf16.mxu0 %v1754
        %1973 = vmatpush1.bf16.msra.mxu0 %v1753
        %1974 = vmatprep.subr.bf16.mxu0 %v1756
        %1975 = vmatpush1.bf16.msra.mxu0 %v1755
        %1976 = vmatprep.subr.bf16.mxu0 %v1758
        %1977 = vmatpush1.bf16.msra.mxu0 %v1757
        %1978 = vmatprep.subr.bf16.mxu0 %v1760
        %1979 = vmatpush1.bf16.msra.mxu0 %v1759
        %1980 = vmatprep.subr.bf16.mxu0 %v1762
        %1981 = vmatpush1.bf16.msra.mxu0 %v1761
        %1982 = vmatprep.subr.bf16.mxu0 %v1764
        %1983 = vmatpush1.bf16.msra.mxu0 %v1763
        %1984 = vmatprep.subr.bf16.mxu0 %v1766
        %1985 = vmatpush1.bf16.msra.mxu0 %v1765
        %1986 = vmatprep.subr.bf16.mxu0 %v1768
        %1987 = vmatpush1.bf16.msra.mxu0 %v1767
        %1988 = vmatprep.subr.bf16.mxu0 %v1770
        %1989 = vmatpush1.bf16.msra.mxu0 %v1769
        %1990 = vmatprep.subr.bf16.mxu0 %v1772
        %1991 = vmatpush1.bf16.msra.mxu0 %v1771
        %1992 = vmatprep.subr.bf16.mxu0 %v1774
        %1993 = vmatpush1.bf16.msra.mxu0 %v1773
        %1994 = vmatprep.subr.bf16.mxu0 %v1776
        %1995 = vmatpush1.bf16.msra.mxu0 %v1775
        %1996 = vmatprep.subr.bf16.mxu0 %v1778
        %1997 = vmatpush1.bf16.msra.mxu0 %v1777
        %1998 = vmatprep.subr.bf16.mxu0 %v1780
        %1999 = vmatpush1.bf16.msra.mxu0 %v1779
        %2000 = vmatprep.mubr.bf16.mxu0 %v1644
        %2001 = vmatmul.mubr.bf16.gmra.mrb[0].mxu0 %v1643
        %v2002 = vpop.f32.mrb[0].mxu0
        %v2003 = vadd.f32 %v1962, %v2002
        %v2004 = vpop.f32.mrb[0].mxu0
        %v2005 = vadd.f32 %v1964, %v2004
        %v2006 = vpop.f32.mrb[0].mxu0
        %v2007 = vpop.f32.mrb[0].mxu0
        %2008 = vdwg.mxu0
        %2009 = vmatprep.subr.bf16.mxu0 %v1782
        %2010 = vmatpush1.bf16.msra.mxu0 %v1781
        %2011 = vmatprep.subr.bf16.mxu0 %v1784
        %2012 = vmatpush1.bf16.msra.mxu0 %v1783
        %2013 = vmatprep.subr.bf16.mxu0 %v1786
        %2014 = vmatpush1.bf16.msra.mxu0 %v1785
        %2015 = vmatprep.subr.bf16.mxu0 %v1788
        %2016 = vmatpush1.bf16.msra.mxu0 %v1787
        %2017 = vmatprep.subr.bf16.mxu0 %v1790
        %2018 = vmatpush1.bf16.msra.mxu0 %v1789
        %2019 = vmatprep.subr.bf16.mxu0 %v1792
        %2020 = vmatpush1.bf16.msra.mxu0 %v1791
        %2021 = vmatprep.subr.bf16.mxu0 %v1794
        %2022 = vmatpush1.bf16.msra.mxu0 %v1793
        %2023 = vmatprep.subr.bf16.mxu0 %v1796
        %2024 = vmatpush1.bf16.msra.mxu0 %v1795
        %2025 = vmatprep.subr.bf16.mxu0 %v1798
        %2026 = vmatpush1.bf16.msra.mxu0 %v1797
        %2027 = vmatprep.subr.bf16.mxu0 %v1800
        %2028 = vmatpush1.bf16.msra.mxu0 %v1799
        %2029 = vmatprep.subr.bf16.mxu0 %v1802
        %2030 = vmatpush1.bf16.msra.mxu0 %v1801
        %2031 = vmatprep.subr.bf16.mxu0 %v1804
        %2032 = vmatpush1.bf16.msra.mxu0 %v1803
        %2033 = vmatprep.subr.bf16.mxu0 %v1806
        %2034 = vmatpush1.bf16.msra.mxu0 %v1805
        %2035 = vmatprep.subr.bf16.mxu0 %v1808
        %2036 = vmatpush1.bf16.msra.mxu0 %v1807
        %2037 = vmatprep.subr.bf16.mxu0 %v1810
        %2038 = vmatpush1.bf16.msra.mxu0 %v1809
        %2039 = vmatprep.subr.bf16.mxu0 %v1812
        %2040 = vmatpush1.bf16.msra.mxu0 %v1811
        %2041 = vmatprep.mubr.bf16.mxu0 %v1646
        %2042 = vmatmul.mubr.bf16.gmra.mrb[0].mxu0 %v1645
        %v2043 = vpop.f32.mrb[0].mxu0
        %v2044 = vadd.f32 %v2003, %v2043
        %v2045 = vpop.f32.mrb[0].mxu0
        %v2046 = vadd.f32 %v2005, %v2045
        %v2047 = vpop.f32.mrb[0].mxu0
        %v2048 = vpop.f32.mrb[0].mxu0
        %2049 = vdwg.mxu0
        %2050 = vmatprep.subr.bf16.mxu0 %v1814
        %2051 = vmatpush1.bf16.msra.mxu0 %v1813
        %2052 = vmatprep.subr.bf16.mxu0 %v1816
        %2053 = vmatpush1.bf16.msra.mxu0 %v1815
        %2054 = vmatprep.subr.bf16.mxu0 %v1818
        %2055 = vmatpush1.bf16.msra.mxu0 %v1817
        %2056 = vmatprep.subr.bf16.mxu0 %v1820
        %2057 = vmatpush1.bf16.msra.mxu0 %v1819
        %2058 = vmatprep.subr.bf16.mxu0 %v1822
        %2059 = vmatpush1.bf16.msra.mxu0 %v1821
        %2060 = vmatprep.subr.bf16.mxu0 %v1824
        %2061 = vmatpush1.bf16.msra.mxu0 %v1823
        %2062 = vmatprep.subr.bf16.mxu0 %v1826
        %2063 = vmatpush1.bf16.msra.mxu0 %v1825
        %2064 = vmatprep.subr.bf16.mxu0 %v1828
        %2065 = vmatpush1.bf16.msra.mxu0 %v1827
        %2066 = vmatprep.subr.bf16.mxu0 %v1830
        %2067 = vmatpush1.bf16.msra.mxu0 %v1829
        %2068 = vmatprep.subr.bf16.mxu0 %v1832
        %2069 = vmatpush1.bf16.msra.mxu0 %v1831
        %2070 = vmatprep.subr.bf16.mxu0 %v1834
        %2071 = vmatpush1.bf16.msra.mxu0 %v1833
        %2072 = vmatprep.subr.bf16.mxu0 %v1836
        %2073 = vmatpush1.bf16.msra.mxu0 %v1835
        %2074 = vmatprep.subr.bf16.mxu0 %v1838
        %2075 = vmatpush1.bf16.msra.mxu0 %v1837
        %2076 = vmatprep.subr.bf16.mxu0 %v1840
        %2077 = vmatpush1.bf16.msra.mxu0 %v1839
        %2078 = vmatprep.subr.bf16.mxu0 %v1842
        %2079 = vmatpush1.bf16.msra.mxu0 %v1841
        %2080 = vmatprep.subr.bf16.mxu0 %v1844
        %2081 = vmatpush1.bf16.msra.mxu0 %v1843
        %2082 = vmatprep.mubr.bf16.mxu0 %v1648
        %2083 = vmatmul.mubr.bf16.gmra.mrb[0].mxu0 %v1647
        %v2084 = vpop.f32.mrb[0].mxu0
        %v2085 = vadd.f32 %v2044, %v2084
        %v2086 = vpop.f32.mrb[0].mxu0
        %v2087 = vadd.f32 %v2046, %v2086
        %v2088 = vpop.f32.mrb[0].mxu0
        %v2089 = vpop.f32.mrb[0].mxu0
        %2090 = vdwg.mxu0
        %v2093 = vcombine.low %v2085, %v2087
        %v2095 = vunpack.c.l.s4 1966171168
        %v2096 = vunpack.c.0.s8 %v2095
        %v2097 = vlaneseq
        %v2098 = vshrl.u32 %v2097, 7
        %v2099 = vsub.s32 %v2096, %v2098
        %v2100 = vrot.slane %v2093, %v2099
        %v2102 = vunpack.c.l.s4 1966171168
        %v2103 = vunpack.c.0.s8 %v2102
        %v2104 = vlaneseq
        %v2105 = vshrl.u32 %v2104, 7
        %v2106 = vsub.s32 %v2103, %v2105
        %v2107 = vrot.slane %v2100, %v2106
        %v2109 = vadd.f32 %v1555, %v2107
        %v2111 = vrot.slane %v1551, 1
        %2112 = vrot.lane.b32.xlu0 %v2111, 64
        %v2113 = vpop.permute.xlu0 %2112
        %v2115 = vrot.slane %v1551, 2
        %v2117 = vrot.slane %v1551, 3
        %2118 = vrot.lane.b32.xlu0 %v2117, 64
        %v2119 = vpop.permute.xlu0 %2118
        %v2121 = vrot.slane %v1551, 4
        %v2123 = vrot.slane %v1551, 5
        %2124 = vrot.lane.b32.xlu0 %v2123, 64
        %v2125 = vpop.permute.xlu0 %2124
        %v2127 = vrot.slane %v1551, 6
        %v2129 = vrot.slane %v1551, 7
        %2130 = vrot.lane.b32.xlu0 %v2129, 64
        %v2131 = vpop.permute.xlu0 %2130
        %v2134 = vrot.slane %v1552, 1
        %2135 = vrot.lane.b32.xlu0 %v2134, 64
        %v2136 = vpop.permute.xlu0 %2135
        %v2138 = vrot.slane %v1552, 2
        %v2140 = vrot.slane %v1552, 3
        %2141 = vrot.lane.b32.xlu0 %v2140, 64
        %v2142 = vpop.permute.xlu0 %2141
        %v2144 = vrot.slane %v1552, 4
        %v2146 = vrot.slane %v1552, 5
        %2147 = vrot.lane.b32.xlu0 %v2146, 64
        %v2148 = vpop.permute.xlu0 %2147
        %v2150 = vrot.slane %v1552, 6
        %v2152 = vrot.slane %v1552, 7
        %2153 = vrot.lane.b32.xlu0 %v2152, 64
        %v2154 = vpop.permute.xlu0 %2153
        %v2156 = vsel %vm1192, %v1551, %v2113
        %v2157 = vsel %vm1192, %v2115, %v2119
        %v2158 = vsel %vm1192, %v2121, %v2125
        %v2159 = vsel %vm1192, %v2127, %v2131
        %v2160 = vsel %vm1192, %v1552, %v2136
        %v2161 = vsel %vm1192, %v2138, %v2142
        %v2162 = vsel %vm1192, %v2144, %v2148
        %v2163 = vsel %vm1192, %v2150, %v2154
        %v2165 = vrot.slane %v1553, 1
        %2166 = vrot.lane.b32.xlu0 %v2165, 64
        %v2167 = vpop.permute.xlu0 %2166
        %v2169 = vrot.slane %v1553, 2
        %v2171 = vrot.slane %v1553, 3
        %2172 = vrot.lane.b32.xlu0 %v2171, 64
        %v2173 = vpop.permute.xlu0 %2172
        %v2175 = vrot.slane %v1553, 4
        %v2177 = vrot.slane %v1553, 5
        %2178 = vrot.lane.b32.xlu0 %v2177, 64
        %v2179 = vpop.permute.xlu0 %2178
        %v2181 = vrot.slane %v1553, 6
        %v2183 = vrot.slane %v1553, 7
        %2184 = vrot.lane.b32.xlu0 %v2183, 64
        %v2185 = vpop.permute.xlu0 %2184
        %v2187 = vsel %vm1192, %v1553, %v2167
        %v2188 = vsel %vm1192, %v2169, %v2173
        %v2189 = vsel %vm1192, %v2175, %v2179
        %v2190 = vsel %vm1192, %v2181, %v2185
        %v2191 = vpack.c.bf16 %v2156, %v2156
        %v2192 = vpack.c.bf16 %v2157, %v2157
        %v2193 = vpack.c.bf16 %v2158, %v2158
        %v2194 = vpack.c.bf16 %v2159, %v2159
        %v2195 = vpack.c.bf16 %v2160, %v2160
        %v2196 = vpack.c.bf16 %v2161, %v2161
        %v2197 = vpack.c.bf16 %v2162, %v2162
        %v2198 = vpack.c.bf16 %v2163, %v2163
        %v2199 = vpack.c.bf16 %v2187, %v2187
        %v2200 = vpack.c.bf16 %v2188, %v2188
        %v2201 = vpack.c.bf16 %v2189, %v2189
        %v2202 = vpack.c.bf16 %v2190, %v2190
        %v2203 = vpack.c.bf16 %v1554, %v1554
        %s2204 = smul.u32 4, 200
        %s2205 = smul.u32 %s2204, 2
        %s2206 = sshll.u32 %s2205, 4
        %2207 = dma.done %s490, %s2206
        %v2208 = vld [vmem:[#allocation3 + $0x600] sm:$0xff]
        %v2209 = vld [vmem:[#allocation3 + $0x608] sm:$0xff]
        %v2210 = vld [vmem:[#allocation3 + $0x610] sm:$0xff]
        %v2211 = vld [vmem:[#allocation3 + $0x618] sm:$0xff]
        %v2212 = vld [vmem:[#allocation3 + $0x620] sm:$0xff]
        %v2213 = vld [vmem:[#allocation3 + $0x628] sm:$0xff]
        %v2214 = vld [vmem:[#allocation3 + $0x630] sm:$0xff]
        %v2215 = vld [vmem:[#allocation3 + $0x638] sm:$0xff]
        %v2216 = vld [vmem:[#allocation3 + $0x640] sm:$0xff]
        %v2217 = vld [vmem:[#allocation3 + $0x648] sm:$0xff]
        %v2218 = vld [vmem:[#allocation3 + $0x650] sm:$0xff]
        %v2219 = vld [vmem:[#allocation3 + $0x658] sm:$0xff]
        %v2220 = vld [vmem:[#allocation3 + $0x660] sm:$0xff]
        %v2221 = vld [vmem:[#allocation3 + $0x668] sm:$0xff]
        %v2222 = vld [vmem:[#allocation3 + $0x670] sm:$0xff]
        %v2223 = vld [vmem:[#allocation3 + $0x678] sm:$0xff]
        %v2224 = vld [vmem:[#allocation3 + $0x680] sm:$0xff]
        %v2225 = vld [vmem:[#allocation3 + $0x688] sm:$0xff]
        %v2226 = vld [vmem:[#allocation3 + $0x690] sm:$0xff]
        %v2227 = vld [vmem:[#allocation3 + $0x698] sm:$0xff]
        %v2228 = vld [vmem:[#allocation3 + $0x6a0] sm:$0xff]
        %v2229 = vld [vmem:[#allocation3 + $0x6a8] sm:$0xff]
        %v2230 = vld [vmem:[#allocation3 + $0x6b0] sm:$0xff]
        %v2231 = vld [vmem:[#allocation3 + $0x6b8] sm:$0xff]
        %v2232 = vld [vmem:[#allocation3 + $0x6c0] sm:$0xff]
        %v2233 = vld [vmem:[#allocation3 + $0x6c8] sm:$0xff]
        %v2234 = vld [vmem:[#allocation3 + $0x6d0] sm:$0xff]
        %v2235 = vld [vmem:[#allocation3 + $0x6d8] sm:$0xff]
        %v2236 = vld [vmem:[#allocation3 + $0x6e0] sm:$0xff]
        %v2237 = vld [vmem:[#allocation3 + $0x6e8] sm:$0xff]
        %v2238 = vld [vmem:[#allocation3 + $0x6f0] sm:$0xff]
        %v2239 = vld [vmem:[#allocation3 + $0x6f8] sm:$0xff]
        %v2240 = vld [vmem:[#allocation3 + $0x700] sm:$0xff]
        %v2241 = vld [vmem:[#allocation3 + $0x708] sm:$0xff]
        %v2242 = vld [vmem:[#allocation3 + $0x710] sm:$0xff]
        %v2243 = vld [vmem:[#allocation3 + $0x718] sm:$0xff]
        %v2244 = vld [vmem:[#allocation3 + $0x720] sm:$0xff]
        %v2245 = vld [vmem:[#allocation3 + $0x728] sm:$0xff]
        %v2246 = vld [vmem:[#allocation3 + $0x730] sm:$0xff]
        %v2247 = vld [vmem:[#allocation3 + $0x738] sm:$0xff]
        %v2248 = vld [vmem:[#allocation3 + $0x740] sm:$0xff]
        %v2249 = vld [vmem:[#allocation3 + $0x748] sm:$0xff]
        %v2250 = vld [vmem:[#allocation3 + $0x750] sm:$0xff]
        %v2251 = vld [vmem:[#allocation3 + $0x758] sm:$0xff]
        %v2252 = vld [vmem:[#allocation3 + $0x760] sm:$0xff]
        %v2253 = vld [vmem:[#allocation3 + $0x768] sm:$0xff]
        %v2254 = vld [vmem:[#allocation3 + $0x770] sm:$0xff]
        %v2255 = vld [vmem:[#allocation3 + $0x778] sm:$0xff]
        %v2256 = vld [vmem:[#allocation3 + $0x780] sm:$0xff]
        %v2257 = vld [vmem:[#allocation3 + $0x788] sm:$0xff]
        %v2258 = vld [vmem:[#allocation3 + $0x790] sm:$0xff]
        %v2259 = vld [vmem:[#allocation3 + $0x798] sm:$0xff]
        %v2260 = vld [vmem:[#allocation3 + $0x7a0] sm:$0xff]
        %v2261 = vld [vmem:[#allocation3 + $0x7a8] sm:$0xff]
        %v2262 = vld [vmem:[#allocation3 + $0x7b0] sm:$0xff]
        %v2263 = vld [vmem:[#allocation3 + $0x7b8] sm:$0xff]
        %v2264 = vld [vmem:[#allocation3 + $0x7c0] sm:$0xff]
        %v2265 = vld [vmem:[#allocation3 + $0x7c8] sm:$0xff]
        %v2266 = vld [vmem:[#allocation3 + $0x7d0] sm:$0xff]
        %v2267 = vld [vmem:[#allocation3 + $0x7d8] sm:$0xff]
        %v2268 = vld [vmem:[#allocation3 + $0x7e0] sm:$0xff]
        %v2269 = vld [vmem:[#allocation3 + $0x7e8] sm:$0xff]
        %v2270 = vld [vmem:[#allocation3 + $0x7f0] sm:$0xff]
        %v2271 = vld [vmem:[#allocation3 + $0x7f8] sm:$0xff]
        %v2272 = vld [vmem:[#allocation3 + $0x800] sm:$0xff]
        %v2273 = vld [vmem:[#allocation3 + $0x808] sm:$0xff]
        %v2274 = vld [vmem:[#allocation3 + $0x810] sm:$0xff]
        %v2275 = vld [vmem:[#allocation3 + $0x818] sm:$0xff]
        %v2276 = vld [vmem:[#allocation3 + $0x820] sm:$0xff]
        %v2277 = vld [vmem:[#allocation3 + $0x828] sm:$0xff]
        %v2278 = vld [vmem:[#allocation3 + $0x830] sm:$0xff]
        %v2279 = vld [vmem:[#allocation3 + $0x838] sm:$0xff]
        %v2280 = vld [vmem:[#allocation3 + $0x840] sm:$0xff]
        %v2281 = vld [vmem:[#allocation3 + $0x848] sm:$0xff]
        %v2282 = vld [vmem:[#allocation3 + $0x850] sm:$0xff]
        %v2283 = vld [vmem:[#allocation3 + $0x858] sm:$0xff]
        %v2284 = vld [vmem:[#allocation3 + $0x860] sm:$0xff]
        %v2285 = vld [vmem:[#allocation3 + $0x868] sm:$0xff]
        %v2286 = vld [vmem:[#allocation3 + $0x870] sm:$0xff]
        %v2287 = vld [vmem:[#allocation3 + $0x878] sm:$0xff]
        %v2288 = vld [vmem:[#allocation3 + $0x880] sm:$0xff]
        %v2289 = vld [vmem:[#allocation3 + $0x888] sm:$0xff]
        %v2290 = vld [vmem:[#allocation3 + $0x890] sm:$0xff]
        %v2291 = vld [vmem:[#allocation3 + $0x898] sm:$0xff]
        %v2292 = vld [vmem:[#allocation3 + $0x8a0] sm:$0xff]
        %v2293 = vld [vmem:[#allocation3 + $0x8a8] sm:$0xff]
        %v2294 = vld [vmem:[#allocation3 + $0x8b0] sm:$0xff]
        %v2295 = vld [vmem:[#allocation3 + $0x8b8] sm:$0xff]
        %v2296 = vld [vmem:[#allocation3 + $0x8c0] sm:$0xff]
        %v2297 = vld [vmem:[#allocation3 + $0x8c8] sm:$0xff]
        %v2298 = vld [vmem:[#allocation3 + $0x8d0] sm:$0xff]
        %v2299 = vld [vmem:[#allocation3 + $0x8d8] sm:$0xff]
        %v2300 = vld [vmem:[#allocation3 + $0x8e0] sm:$0xff]
        %v2301 = vld [vmem:[#allocation3 + $0x8e8] sm:$0xff]
        %v2302 = vld [vmem:[#allocation3 + $0x8f0] sm:$0xff]
        %v2303 = vld [vmem:[#allocation3 + $0x8f8] sm:$0xff]
        %v2304 = vld [vmem:[#allocation3 + $0x900] sm:$0xff]
        %v2305 = vld [vmem:[#allocation3 + $0x908] sm:$0xff]
        %v2306 = vld [vmem:[#allocation3 + $0x910] sm:$0xff]
        %v2307 = vld [vmem:[#allocation3 + $0x918] sm:$0xff]
        %v2308 = vld [vmem:[#allocation3 + $0x920] sm:$0xff]
        %v2309 = vld [vmem:[#allocation3 + $0x928] sm:$0xff]
        %v2310 = vld [vmem:[#allocation3 + $0x930] sm:$0xff]
        %v2311 = vld [vmem:[#allocation3 + $0x938] sm:$0xff]
        %v2312 = vld [vmem:[#allocation3 + $0x940] sm:$0xff]
        %v2313 = vld [vmem:[#allocation3 + $0x948] sm:$0xff]
        %v2314 = vld [vmem:[#allocation3 + $0x950] sm:$0xff]
        %v2315 = vld [vmem:[#allocation3 + $0x958] sm:$0xff]
        %v2316 = vld [vmem:[#allocation3 + $0x960] sm:$0xff]
        %v2317 = vld [vmem:[#allocation3 + $0x968] sm:$0xff]
        %v2318 = vld [vmem:[#allocation3 + $0x970] sm:$0xff]
        %v2319 = vld [vmem:[#allocation3 + $0x978] sm:$0xff]
        %v2320 = vld [vmem:[#allocation3 + $0x980] sm:$0xff]
        %v2321 = vld [vmem:[#allocation3 + $0x988] sm:$0xff]
        %v2322 = vld [vmem:[#allocation3 + $0x990] sm:$0xff]
        %v2323 = vld [vmem:[#allocation3 + $0x998] sm:$0xff]
        %v2324 = vld [vmem:[#allocation3 + $0x9a0] sm:$0xff]
        %v2325 = vld [vmem:[#allocation3 + $0x9a8] sm:$0xff]
        %v2326 = vld [vmem:[#allocation3 + $0x9b0] sm:$0xff]
        %v2327 = vld [vmem:[#allocation3 + $0x9b8] sm:$0xff]
        %v2328 = vld [vmem:[#allocation3 + $0x9c0] sm:$0xff]
        %v2329 = vld [vmem:[#allocation3 + $0x9c8] sm:$0xff]
        %v2330 = vld [vmem:[#allocation3 + $0x9d0] sm:$0xff]
        %v2331 = vld [vmem:[#allocation3 + $0x9d8] sm:$0xff]
        %v2332 = vld [vmem:[#allocation3 + $0x9e0] sm:$0xff]
        %v2333 = vld [vmem:[#allocation3 + $0x9e8] sm:$0xff]
        %v2334 = vld [vmem:[#allocation3 + $0x9f0] sm:$0xff]
        %v2335 = vld [vmem:[#allocation3 + $0x9f8] sm:$0xff]
        %v2336 = vld [vmem:[#allocation3 + $0xa00] sm:$0xff]
        %v2337 = vld [vmem:[#allocation3 + $0xa08] sm:$0xff]
        %v2338 = vld [vmem:[#allocation3 + $0xa10] sm:$0xff]
        %v2339 = vld [vmem:[#allocation3 + $0xa18] sm:$0xff]
        %v2340 = vld [vmem:[#allocation3 + $0xa20] sm:$0xff]
        %v2341 = vld [vmem:[#allocation3 + $0xa28] sm:$0xff]
        %v2342 = vld [vmem:[#allocation3 + $0xa30] sm:$0xff]
        %v2343 = vld [vmem:[#allocation3 + $0xa38] sm:$0xff]
        %v2344 = vld [vmem:[#allocation3 + $0xa40] sm:$0xff]
        %v2345 = vld [vmem:[#allocation3 + $0xa48] sm:$0xff]
        %v2346 = vld [vmem:[#allocation3 + $0xa50] sm:$0xff]
        %v2347 = vld [vmem:[#allocation3 + $0xa58] sm:$0xff]
        %v2348 = vld [vmem:[#allocation3 + $0xa60] sm:$0xff]
        %v2349 = vld [vmem:[#allocation3 + $0xa68] sm:$0xff]
        %v2350 = vld [vmem:[#allocation3 + $0xa70] sm:$0xff]
        %v2351 = vld [vmem:[#allocation3 + $0xa78] sm:$0xff]
        %v2352 = vld [vmem:[#allocation3 + $0xa80] sm:$0xff]
        %v2353 = vld [vmem:[#allocation3 + $0xa88] sm:$0xff]
        %v2354 = vld [vmem:[#allocation3 + $0xa90] sm:$0xff]
        %v2355 = vld [vmem:[#allocation3 + $0xa98] sm:$0xff]
        %v2356 = vld [vmem:[#allocation3 + $0xaa0] sm:$0xff]
        %v2357 = vld [vmem:[#allocation3 + $0xaa8] sm:$0xff]
        %v2358 = vld [vmem:[#allocation3 + $0xab0] sm:$0xff]
        %v2359 = vld [vmem:[#allocation3 + $0xab8] sm:$0xff]
        %v2360 = vld [vmem:[#allocation3 + $0xac0] sm:$0xff]
        %v2361 = vld [vmem:[#allocation3 + $0xac8] sm:$0xff]
        %v2362 = vld [vmem:[#allocation3 + $0xad0] sm:$0xff]
        %v2363 = vld [vmem:[#allocation3 + $0xad8] sm:$0xff]
        %v2364 = vld [vmem:[#allocation3 + $0xae0] sm:$0xff]
        %v2365 = vld [vmem:[#allocation3 + $0xae8] sm:$0xff]
        %v2366 = vld [vmem:[#allocation3 + $0xaf0] sm:$0xff]
        %v2367 = vld [vmem:[#allocation3 + $0xaf8] sm:$0xff]
        %v2368 = vld [vmem:[#allocation3 + $0xb00] sm:$0xff]
        %v2369 = vld [vmem:[#allocation3 + $0xb08] sm:$0xff]
        %v2370 = vld [vmem:[#allocation3 + $0xb10] sm:$0xff]
        %v2371 = vld [vmem:[#allocation3 + $0xb18] sm:$0xff]
        %v2372 = vld [vmem:[#allocation3 + $0xb20] sm:$0xff]
        %v2373 = vld [vmem:[#allocation3 + $0xb28] sm:$0xff]
        %v2374 = vld [vmem:[#allocation3 + $0xb30] sm:$0xff]
        %v2375 = vld [vmem:[#allocation3 + $0xb38] sm:$0xff]
        %v2376 = vld [vmem:[#allocation3 + $0xb40] sm:$0xff]
        %v2377 = vld [vmem:[#allocation3 + $0xb48] sm:$0xff]
        %v2378 = vld [vmem:[#allocation3 + $0xb50] sm:$0xff]
        %v2379 = vld [vmem:[#allocation3 + $0xb58] sm:$0xff]
        %v2380 = vld [vmem:[#allocation3 + $0xb60] sm:$0xff]
        %v2381 = vld [vmem:[#allocation3 + $0xb68] sm:$0xff]
        %v2382 = vld [vmem:[#allocation3 + $0xb70] sm:$0xff]
        %v2383 = vld [vmem:[#allocation3 + $0xb78] sm:$0xff]
        %v2384 = vld [vmem:[#allocation3 + $0xb80] sm:$0xff]
        %v2385 = vld [vmem:[#allocation3 + $0xb88] sm:$0xff]
        %v2386 = vld [vmem:[#allocation3 + $0xb90] sm:$0xff]
        %v2387 = vld [vmem:[#allocation3 + $0xb98] sm:$0xff]
        %v2388 = vld [vmem:[#allocation3 + $0xba0] sm:$0xff]
        %v2389 = vld [vmem:[#allocation3 + $0xba8] sm:$0xff]
        %v2390 = vld [vmem:[#allocation3 + $0xbb0] sm:$0xff]
        %v2391 = vld [vmem:[#allocation3 + $0xbb8] sm:$0xff]
        %v2392 = vld [vmem:[#allocation3 + $0xbc0] sm:$0xff]
        %v2393 = vld [vmem:[#allocation3 + $0xbc8] sm:$0xff]
        %v2394 = vld [vmem:[#allocation3 + $0xbd0] sm:$0xff]
        %v2395 = vld [vmem:[#allocation3 + $0xbd8] sm:$0xff]
        %v2396 = vld [vmem:[#allocation3 + $0xbe0] sm:$0xff]
        %v2397 = vld [vmem:[#allocation3 + $0xbe8] sm:$0xff]
        %v2398 = vld [vmem:[#allocation3 + $0xbf0] sm:$0xff]
        %v2399 = vld [vmem:[#allocation3 + $0xbf8] sm:$0xff]
        %v2400 = vld [vmem:[#allocation3 + $0xc00] sm:$0xff]
        %v2401 = vld [vmem:[#allocation3 + $0xc08] sm:$0xff]
        %v2402 = vld [vmem:[#allocation3 + $0xc10] sm:$0xff]
        %v2403 = vld [vmem:[#allocation3 + $0xc18] sm:$0xff]
        %v2404 = vld [vmem:[#allocation3 + $0xc20] sm:$0xff]
        %v2405 = vld [vmem:[#allocation3 + $0xc28] sm:$0xff]
        %v2406 = vld [vmem:[#allocation3 + $0xc30] sm:$0xff]
        %v2407 = vld [vmem:[#allocation3 + $0xc38] sm:$0xff]
        %v2409 = vsel %vm1192, %v2203, 0
        %2411 = vmatprep.subr.bf16.mxu0 %v2209
        %2412 = vmatpush1.bf16.msra.mxu0 %v2208
        %2413 = vmatprep.subr.bf16.mxu0 %v2211
        %2414 = vmatpush1.bf16.msra.mxu0 %v2210
        %2415 = vmatprep.subr.bf16.mxu0 %v2213
        %2416 = vmatpush1.bf16.msra.mxu0 %v2212
        %2417 = vmatprep.subr.bf16.mxu0 %v2215
        %2418 = vmatpush1.bf16.msra.mxu0 %v2214
        %2419 = vmatprep.subr.bf16.mxu0 %v2217
        %2420 = vmatpush1.bf16.msra.mxu0 %v2216
        %2421 = vmatprep.subr.bf16.mxu0 %v2219
        %2422 = vmatpush1.bf16.msra.mxu0 %v2218
        %2423 = vmatprep.subr.bf16.mxu0 %v2221
        %2424 = vmatpush1.bf16.msra.mxu0 %v2220
        %2425 = vmatprep.subr.bf16.mxu0 %v2223
        %2426 = vmatpush1.bf16.msra.mxu0 %v2222
        %2427 = vmatprep.subr.bf16.mxu0 %v2225
        %2428 = vmatpush1.bf16.msra.mxu0 %v2224
        %2429 = vmatprep.subr.bf16.mxu0 %v2227
        %2430 = vmatpush1.bf16.msra.mxu0 %v2226
        %2431 = vmatprep.subr.bf16.mxu0 %v2229
        %2432 = vmatpush1.bf16.msra.mxu0 %v2228
        %2433 = vmatprep.subr.bf16.mxu0 %v2231
        %2434 = vmatpush1.bf16.msra.mxu0 %v2230
        %2435 = vmatprep.subr.bf16.mxu0 %v2233
        %2436 = vmatpush1.bf16.msra.mxu0 %v2232
        %2437 = vmatprep.subr.bf16.mxu0 %v2235
        %2438 = vmatpush1.bf16.msra.mxu0 %v2234
        %2439 = vmatprep.subr.bf16.mxu0 %v2237
        %2440 = vmatpush1.bf16.msra.mxu0 %v2236
        %2441 = vmatprep.subr.bf16.mxu0 %v2239
        %2442 = vmatpush1.bf16.msra.mxu0 %v2238
        %2443 = vmatprep.mubr.bf16.mxu0 %v2192
        %2444 = vmatmul.mubr.bf16.gmra.mrb[0].mxu0 %v2191
        %v2445 = vpop.f32.mrb[0].mxu0
        %v2446 = vadd.f32 0.0, %v2445
        %v2447 = vpop.f32.mrb[0].mxu0
        %v2448 = vadd.f32 0.0, %v2447
        %v2449 = vpop.f32.mrb[0].mxu0
        %v2450 = vpop.f32.mrb[0].mxu0
        %2451 = vdwg.mxu0
        %2452 = vmatprep.subr.bf16.mxu0 %v2241
        %2453 = vmatpush1.bf16.msra.mxu0 %v2240
        %2454 = vmatprep.subr.bf16.mxu0 %v2243
        %2455 = vmatpush1.bf16.msra.mxu0 %v2242
        %2456 = vmatprep.subr.bf16.mxu0 %v2245
        %2457 = vmatpush1.bf16.msra.mxu0 %v2244
        %2458 = vmatprep.subr.bf16.mxu0 %v2247
        %2459 = vmatpush1.bf16.msra.mxu0 %v2246
        %2460 = vmatprep.subr.bf16.mxu0 %v2249
        %2461 = vmatpush1.bf16.msra.mxu0 %v2248
        %2462 = vmatprep.subr.bf16.mxu0 %v2251
        %2463 = vmatpush1.bf16.msra.mxu0 %v2250
        %2464 = vmatprep.subr.bf16.mxu0 %v2253
        %2465 = vmatpush1.bf16.msra.mxu0 %v2252
        %2466 = vmatprep.subr.bf16.mxu0 %v2255
        %2467 = vmatpush1.bf16.msra.mxu0 %v2254
        %2468 = vmatprep.subr.bf16.mxu0 %v2257
        %2469 = vmatpush1.bf16.msra.mxu0 %v2256
        %2470 = vmatprep.subr.bf16.mxu0 %v2259
        %2471 = vmatpush1.bf16.msra.mxu0 %v2258
        %2472 = vmatprep.subr.bf16.mxu0 %v2261
        %2473 = vmatpush1.bf16.msra.mxu0 %v2260
        %2474 = vmatprep.subr.bf16.mxu0 %v2263
        %2475 = vmatpush1.bf16.msra.mxu0 %v2262
        %2476 = vmatprep.subr.bf16.mxu0 %v2265
        %2477 = vmatpush1.bf16.msra.mxu0 %v2264
        %2478 = vmatprep.subr.bf16.mxu0 %v2267
        %2479 = vmatpush1.bf16.msra.mxu0 %v2266
        %2480 = vmatprep.subr.bf16.mxu0 %v2269
        %2481 = vmatpush1.bf16.msra.mxu0 %v2268
        %2482 = vmatprep.subr.bf16.mxu0 %v2271
        %2483 = vmatpush1.bf16.msra.mxu0 %v2270
        %2484 = vmatprep.mubr.bf16.mxu0 %v2194
        %2485 = vmatmul.mubr.bf16.gmra.mrb[0].mxu0 %v2193
        %v2486 = vpop.f32.mrb[0].mxu0
        %v2487 = vadd.f32 %v2446, %v2486
        %v2488 = vpop.f32.mrb[0].mxu0
        %v2489 = vadd.f32 %v2448, %v2488
        %v2490 = vpop.f32.mrb[0].mxu0
        %v2491 = vpop.f32.mrb[0].mxu0
        %2492 = vdwg.mxu0
        %2493 = vmatprep.subr.bf16.mxu0 %v2273
        %2494 = vmatpush1.bf16.msra.mxu0 %v2272
        %2495 = vmatprep.subr.bf16.mxu0 %v2275
        %2496 = vmatpush1.bf16.msra.mxu0 %v2274
        %2497 = vmatprep.subr.bf16.mxu0 %v2277
        %2498 = vmatpush1.bf16.msra.mxu0 %v2276
        %2499 = vmatprep.subr.bf16.mxu0 %v2279
        %2500 = vmatpush1.bf16.msra.mxu0 %v2278
        %2501 = vmatprep.subr.bf16.mxu0 %v2281
        %2502 = vmatpush1.bf16.msra.mxu0 %v2280
        %2503 = vmatprep.subr.bf16.mxu0 %v2283
        %2504 = vmatpush1.bf16.msra.mxu0 %v2282
        %2505 = vmatprep.subr.bf16.mxu0 %v2285
        %2506 = vmatpush1.bf16.msra.mxu0 %v2284
        %2507 = vmatprep.subr.bf16.mxu0 %v2287
        %2508 = vmatpush1.bf16.msra.mxu0 %v2286
        %2509 = vmatprep.subr.bf16.mxu0 %v2289
        %2510 = vmatpush1.bf16.msra.mxu0 %v2288
        %2511 = vmatprep.subr.bf16.mxu0 %v2291
        %2512 = vmatpush1.bf16.msra.mxu0 %v2290
        %2513 = vmatprep.subr.bf16.mxu0 %v2293
        %2514 = vmatpush1.bf16.msra.mxu0 %v2292
        %2515 = vmatprep.subr.bf16.mxu0 %v2295
        %2516 = vmatpush1.bf16.msra.mxu0 %v2294
        %2517 = vmatprep.subr.bf16.mxu0 %v2297
        %2518 = vmatpush1.bf16.msra.mxu0 %v2296
        %2519 = vmatprep.subr.bf16.mxu0 %v2299
        %2520 = vmatpush1.bf16.msra.mxu0 %v2298
        %2521 = vmatprep.subr.bf16.mxu0 %v2301
        %2522 = vmatpush1.bf16.msra.mxu0 %v2300
        %2523 = vmatprep.subr.bf16.mxu0 %v2303
        %2524 = vmatpush1.bf16.msra.mxu0 %v2302
        %2525 = vmatprep.mubr.bf16.mxu0 %v2196
        %2526 = vmatmul.mubr.bf16.gmra.mrb[0].mxu0 %v2195
        %v2527 = vpop.f32.mrb[0].mxu0
        %v2528 = vadd.f32 %v2487, %v2527
        %v2529 = vpop.f32.mrb[0].mxu0
        %v2530 = vadd.f32 %v2489, %v2529
        %v2531 = vpop.f32.mrb[0].mxu0
        %v2532 = vpop.f32.mrb[0].mxu0
        %2533 = vdwg.mxu0
        %2534 = vmatprep.subr.bf16.mxu0 %v2305
        %2535 = vmatpush1.bf16.msra.mxu0 %v2304
        %2536 = vmatprep.subr.bf16.mxu0 %v2307
        %2537 = vmatpush1.bf16.msra.mxu0 %v2306
        %2538 = vmatprep.subr.bf16.mxu0 %v2309
        %2539 = vmatpush1.bf16.msra.mxu0 %v2308
        %2540 = vmatprep.subr.bf16.mxu0 %v2311
        %2541 = vmatpush1.bf16.msra.mxu0 %v2310
        %2542 = vmatprep.subr.bf16.mxu0 %v2313
        %2543 = vmatpush1.bf16.msra.mxu0 %v2312
        %2544 = vmatprep.subr.bf16.mxu0 %v2315
        %2545 = vmatpush1.bf16.msra.mxu0 %v2314
        %2546 = vmatprep.subr.bf16.mxu0 %v2317
        %2547 = vmatpush1.bf16.msra.mxu0 %v2316
        %2548 = vmatprep.subr.bf16.mxu0 %v2319
        %2549 = vmatpush1.bf16.msra.mxu0 %v2318
        %2550 = vmatprep.subr.bf16.mxu0 %v2321
        %2551 = vmatpush1.bf16.msra.mxu0 %v2320
        %2552 = vmatprep.subr.bf16.mxu0 %v2323
        %2553 = vmatpush1.bf16.msra.mxu0 %v2322
        %2554 = vmatprep.subr.bf16.mxu0 %v2325
        %2555 = vmatpush1.bf16.msra.mxu0 %v2324
        %2556 = vmatprep.subr.bf16.mxu0 %v2327
        %2557 = vmatpush1.bf16.msra.mxu0 %v2326
        %2558 = vmatprep.subr.bf16.mxu0 %v2329
        %2559 = vmatpush1.bf16.msra.mxu0 %v2328
        %2560 = vmatprep.subr.bf16.mxu0 %v2331
        %2561 = vmatpush1.bf16.msra.mxu0 %v2330
        %2562 = vmatprep.subr.bf16.mxu0 %v2333
        %2563 = vmatpush1.bf16.msra.mxu0 %v2332
        %2564 = vmatprep.subr.bf16.mxu0 %v2335
        %2565 = vmatpush1.bf16.msra.mxu0 %v2334
        %2566 = vmatprep.mubr.bf16.mxu0 %v2198
        %2567 = vmatmul.mubr.bf16.gmra.mrb[0].mxu0 %v2197
        %v2568 = vpop.f32.mrb[0].mxu0
        %v2569 = vadd.f32 %v2528, %v2568
        %v2570 = vpop.f32.mrb[0].mxu0
        %v2571 = vadd.f32 %v2530, %v2570
        %v2572 = vpop.f32.mrb[0].mxu0
        %v2573 = vpop.f32.mrb[0].mxu0
        %2574 = vdwg.mxu0
        %2575 = vmatprep.subr.bf16.mxu0 %v2337
        %2576 = vmatpush1.bf16.msra.mxu0 %v2336
        %2577 = vmatprep.subr.bf16.mxu0 %v2339
        %2578 = vmatpush1.bf16.msra.mxu0 %v2338
        %2579 = vmatprep.subr.bf16.mxu0 %v2341
        %2580 = vmatpush1.bf16.msra.mxu0 %v2340
        %2581 = vmatprep.subr.bf16.mxu0 %v2343
        %2582 = vmatpush1.bf16.msra.mxu0 %v2342
        %2583 = vmatprep.subr.bf16.mxu0 %v2345
        %2584 = vmatpush1.bf16.msra.mxu0 %v2344
        %2585 = vmatprep.subr.bf16.mxu0 %v2347
        %2586 = vmatpush1.bf16.msra.mxu0 %v2346
        %2587 = vmatprep.subr.bf16.mxu0 %v2349
        %2588 = vmatpush1.bf16.msra.mxu0 %v2348
        %2589 = vmatprep.subr.bf16.mxu0 %v2351
        %2590 = vmatpush1.bf16.msra.mxu0 %v2350
        %2591 = vmatprep.subr.bf16.mxu0 %v2353
        %2592 = vmatpush1.bf16.msra.mxu0 %v2352
        %2593 = vmatprep.subr.bf16.mxu0 %v2355
        %2594 = vmatpush1.bf16.msra.mxu0 %v2354
        %2595 = vmatprep.subr.bf16.mxu0 %v2357
        %2596 = vmatpush1.bf16.msra.mxu0 %v2356
        %2597 = vmatprep.subr.bf16.mxu0 %v2359
        %2598 = vmatpush1.bf16.msra.mxu0 %v2358
        %2599 = vmatprep.subr.bf16.mxu0 %v2361
        %2600 = vmatpush1.bf16.msra.mxu0 %v2360
        %2601 = vmatprep.subr.bf16.mxu0 %v2363
        %2602 = vmatpush1.bf16.msra.mxu0 %v2362
        %2603 = vmatprep.subr.bf16.mxu0 %v2365
        %2604 = vmatpush1.bf16.msra.mxu0 %v2364
        %2605 = vmatprep.subr.bf16.mxu0 %v2367
        %2606 = vmatpush1.bf16.msra.mxu0 %v2366
        %2607 = vmatprep.mubr.bf16.mxu0 %v2200
        %2608 = vmatmul.mubr.bf16.gmra.mrb[0].mxu0 %v2199
        %v2609 = vpop.f32.mrb[0].mxu0
        %v2610 = vadd.f32 %v2569, %v2609
        %v2611 = vpop.f32.mrb[0].mxu0
        %v2612 = vadd.f32 %v2571, %v2611
        %v2613 = vpop.f32.mrb[0].mxu0
        %v2614 = vpop.f32.mrb[0].mxu0
        %2615 = vdwg.mxu0
        %2616 = vmatprep.subr.bf16.mxu0 %v2369
        %2617 = vmatpush1.bf16.msra.mxu0 %v2368
        %2618 = vmatprep.subr.bf16.mxu0 %v2371
        %2619 = vmatpush1.bf16.msra.mxu0 %v2370
        %2620 = vmatprep.subr.bf16.mxu0 %v2373
        %2621 = vmatpush1.bf16.msra.mxu0 %v2372
        %2622 = vmatprep.subr.bf16.mxu0 %v2375
        %2623 = vmatpush1.bf16.msra.mxu0 %v2374
        %2624 = vmatprep.subr.bf16.mxu0 %v2377
        %2625 = vmatpush1.bf16.msra.mxu0 %v2376
        %2626 = vmatprep.subr.bf16.mxu0 %v2379
        %2627 = vmatpush1.bf16.msra.mxu0 %v2378
        %2628 = vmatprep.subr.bf16.mxu0 %v2381
        %2629 = vmatpush1.bf16.msra.mxu0 %v2380
        %2630 = vmatprep.subr.bf16.mxu0 %v2383
        %2631 = vmatpush1.bf16.msra.mxu0 %v2382
        %2632 = vmatprep.subr.bf16.mxu0 %v2385
        %2633 = vmatpush1.bf16.msra.mxu0 %v2384
        %2634 = vmatprep.subr.bf16.mxu0 %v2387
        %2635 = vmatpush1.bf16.msra.mxu0 %v2386
        %2636 = vmatprep.subr.bf16.mxu0 %v2389
        %2637 = vmatpush1.bf16.msra.mxu0 %v2388
        %2638 = vmatprep.subr.bf16.mxu0 %v2391
        %2639 = vmatpush1.bf16.msra.mxu0 %v2390
        %2640 = vmatprep.subr.bf16.mxu0 %v2393
        %2641 = vmatpush1.bf16.msra.mxu0 %v2392
        %2642 = vmatprep.subr.bf16.mxu0 %v2395
        %2643 = vmatpush1.bf16.msra.mxu0 %v2394
        %2644 = vmatprep.subr.bf16.mxu0 %v2397
        %2645 = vmatpush1.bf16.msra.mxu0 %v2396
        %2646 = vmatprep.subr.bf16.mxu0 %v2399
        %2647 = vmatpush1.bf16.msra.mxu0 %v2398
        %2648 = vmatprep.mubr.bf16.mxu0 %v2202
        %2649 = vmatmul.mubr.bf16.gmra.mrb[0].mxu0 %v2201
        %v2650 = vpop.f32.mrb[0].mxu0
        %v2651 = vadd.f32 %v2610, %v2650
        %v2652 = vpop.f32.mrb[0].mxu0
        %v2653 = vadd.f32 %v2612, %v2652
        %v2654 = vpop.f32.mrb[0].mxu0
        %v2655 = vpop.f32.mrb[0].mxu0
        %2656 = vdwg.mxu0
        %2657 = vmatprep.subr.bf16.mxu0 %v2401
        %2658 = vmatpush1.bf16.msra.mxu0 %v2400
        %2659 = vmatprep.subr.bf16.mxu0 %v2403
        %2660 = vmatpush1.bf16.msra.mxu0 %v2402
        %2661 = vmatprep.subr.bf16.mxu0 %v2405
        %2662 = vmatpush1.bf16.msra.mxu0 %v2404
        %2663 = vmatprep.subr.bf16.mxu0 %v2407
        %2664 = vmatpush1.bf16.msra.mxu0 %v2406
        %2665 = vmatprep.subr.bf16.mxu0 0
        %2666 = vmatpush1.bf16.msra.mxu0 0
        %2667 = vmatprep.subr.bf16.mxu0 0
        %2668 = vmatpush1.bf16.msra.mxu0 0
        %2669 = vmatprep.subr.bf16.mxu0 0
        %2670 = vmatpush1.bf16.msra.mxu0 0
        %2671 = vmatprep.subr.bf16.mxu0 0
        %2672 = vmatpush1.bf16.msra.mxu0 0
        %2673 = vmatprep.subr.bf16.mxu0 0
        %2674 = vmatpush1.bf16.msra.mxu0 0
        %2675 = vmatprep.subr.bf16.mxu0 0
        %2676 = vmatpush1.bf16.msra.mxu0 0
        %2677 = vmatprep.subr.bf16.mxu0 0
        %2678 = vmatpush1.bf16.msra.mxu0 0
        %2679 = vmatprep.subr.bf16.mxu0 0
        %2680 = vmatpush1.bf16.msra.mxu0 0
        %2681 = vmatprep.subr.bf16.mxu0 0
        %2682 = vmatpush1.bf16.msra.mxu0 0
        %2683 = vmatprep.subr.bf16.mxu0 0
        %2684 = vmatpush1.bf16.msra.mxu0 0
        %2685 = vmatprep.subr.bf16.mxu0 0
        %2686 = vmatpush1.bf16.msra.mxu0 0
        %2687 = vmatprep.subr.bf16.mxu0 0
        %2688 = vmatpush1.bf16.msra.mxu0 0
        %2689 = vmatprep.mubr.bf16.mxu0 0
        %2690 = vmatmul.mubr.bf16.gmra.mrb[0].mxu0 %v2409
        %v2691 = vpop.f32.mrb[0].mxu0
        %v2692 = vadd.f32 %v2651, %v2691
        %v2693 = vpop.f32.mrb[0].mxu0
        %v2694 = vadd.f32 %v2653, %v2693
        %v2695 = vpop.f32.mrb[0].mxu0
        %v2696 = vpop.f32.mrb[0].mxu0
        %2697 = vdwg.mxu0
        %v2700 = vcombine.low %v2692, %v2694
        %v2702 = vunpack.c.l.s4 1966171168
        %v2703 = vunpack.c.0.s8 %v2702
        %v2704 = vlaneseq
        %v2705 = vshrl.u32 %v2704, 7
        %v2706 = vsub.s32 %v2703, %v2705
        %v2707 = vrot.slane %v2700, %v2706
        %v2709 = vunpack.c.l.s4 1966171168
        %v2710 = vunpack.c.0.s8 %v2709
        %v2711 = vlaneseq
        %v2712 = vshrl.u32 %v2711, 7
        %v2713 = vsub.s32 %v2710, %v2712
        %v2714 = vrot.slane %v2707, %v2713
        %v2716 = vadd.f32 %v2109, %v2714
        %v2717 = vmax.f32 %v2716, 0.0
        %v2719 = vlaneseq
        %v2720 = vshrl.u32 %v2719, 7
        %v2721 = vsub.s32 0, %v2720
        %v2722 = vrot.slane %v2717, %v2721
        %v2723 = vlaneseq
        %v2724 = vshrl.u32 %v2723, 7
        %v2725 = vsub.s32 1, %v2724
        %v2726 = vrot.slane %v2717, %v2725
        %v2729 = vpack.c.bf16 %v2722, %v2722
        %v2730 = vpack.c.bf16 %v2726, %v2726
        %v2731 = vld [vmem:[#allocation14] sm:$0xf]
        %v2732 = vld [vmem:[#allocation14 + $0x4] sm:$0xf]
        %v2733 = vld [vmem:[#allocation14 + $0x8] sm:$0xf]
        %v2734 = vld [vmem:[#allocation14 + $0xc] sm:$0xf]
        %v2735 = vld [vmem:[#allocation14 + $0x10] sm:$0xf]
        %v2736 = vld [vmem:[#allocation14 + $0x14] sm:$0xf]
        %v2737 = vld [vmem:[#allocation14 + $0x18] sm:$0xf]
        %v2738 = vld [vmem:[#allocation14 + $0x1c] sm:$0xf]
        %v2739 = vld [vmem:[#allocation14 + $0x20] sm:$0xf]
        %v2740 = vld [vmem:[#allocation14 + $0x24] sm:$0xf]
        %v2741 = vld [vmem:[#allocation14 + $0x28] sm:$0xf]
        %v2742 = vld [vmem:[#allocation14 + $0x2c] sm:$0xf]
        %v2743 = vld [vmem:[#allocation14 + $0x30] sm:$0xf]
        %v2744 = vld [vmem:[#allocation14 + $0x34] sm:$0xf]
        %v2745 = vld [vmem:[#allocation14 + $0x38] sm:$0xf]
        %v2746 = vld [vmem:[#allocation14 + $0x3c] sm:$0xf]
        %v2747 = vld [vmem:[#allocation14 + $0x40] sm:$0xf]
        %v2748 = vld [vmem:[#allocation14 + $0x44] sm:$0xf]
        %v2749 = vld [vmem:[#allocation14 + $0x48] sm:$0xf]
        %v2750 = vld [vmem:[#allocation14 + $0x4c] sm:$0xf]
        %v2751 = vld [vmem:[#allocation14 + $0x50] sm:$0xf]
        %v2752 = vld [vmem:[#allocation14 + $0x54] sm:$0xf]
        %v2753 = vld [vmem:[#allocation14 + $0x58] sm:$0xf]
        %v2754 = vld [vmem:[#allocation14 + $0x5c] sm:$0xf]
        %v2755 = vld [vmem:[#allocation14 + $0x60] sm:$0xf]
        %v2756 = vld [vmem:[#allocation14 + $0x64] sm:$0xf]
        %v2757 = vld [vmem:[#allocation14 + $0x68] sm:$0xf]
        %v2758 = vld [vmem:[#allocation14 + $0x6c] sm:$0xf]
        %v2759 = vld [vmem:[#allocation14 + $0x70] sm:$0xf]
        %v2760 = vld [vmem:[#allocation14 + $0x74] sm:$0xf]
        %v2761 = vld [vmem:[#allocation14 + $0x78] sm:$0xf]
        %v2762 = vld [vmem:[#allocation14 + $0x7c] sm:$0xf]
        %v2763 = vld [vmem:[#allocation16] sm:$0x1]
        %v2796 = vunpack.c.l.b16 %v2731
        %v2797 = vunpack.c.l.b16 %v2732
        %v2798 = vunpack.c.l.b16 %v2733
        %v2799 = vunpack.c.l.b16 %v2734
        %v2800 = vunpack.c.l.b16 %v2735
        %v2801 = vunpack.c.l.b16 %v2736
        %v2802 = vunpack.c.l.b16 %v2737
        %v2803 = vunpack.c.l.b16 %v2738
        %v2804 = vunpack.c.l.b16 %v2739
        %v2805 = vunpack.c.l.b16 %v2740
        %v2806 = vunpack.c.l.b16 %v2741
        %v2807 = vunpack.c.l.b16 %v2742
        %v2808 = vunpack.c.l.b16 %v2743
        %v2809 = vunpack.c.l.b16 %v2744
        %v2810 = vunpack.c.l.b16 %v2745
        %v2811 = vunpack.c.l.b16 %v2746
        %v2812 = vunpack.c.l.b16 %v2747
        %v2813 = vunpack.c.l.b16 %v2748
        %v2814 = vunpack.c.l.b16 %v2749
        %v2815 = vunpack.c.l.b16 %v2750
        %v2816 = vunpack.c.l.b16 %v2751
        %v2817 = vunpack.c.l.b16 %v2752
        %v2818 = vunpack.c.l.b16 %v2753
        %v2819 = vunpack.c.l.b16 %v2754
        %v2820 = vunpack.c.l.b16 %v2755
        %v2821 = vunpack.c.l.b16 %v2756
        %v2822 = vunpack.c.l.b16 %v2757
        %v2823 = vunpack.c.l.b16 %v2758
        %v2824 = vunpack.c.l.b16 %v2759
        %v2825 = vunpack.c.l.b16 %v2760
        %v2826 = vunpack.c.l.b16 %v2761
        %v2827 = vunpack.c.l.b16 %v2762
        %v2828 = vpack.c.b16 %v2797, %v2796
        %v2829 = vpack.c.b16 %v2799, %v2798
        %v2830 = vpack.c.b16 %v2801, %v2800
        %v2831 = vpack.c.b16 %v2803, %v2802
        %v2832 = vpack.c.b16 %v2805, %v2804
        %v2833 = vpack.c.b16 %v2807, %v2806
        %v2834 = vpack.c.b16 %v2809, %v2808
        %v2835 = vpack.c.b16 %v2811, %v2810
        %v2836 = vpack.c.b16 %v2813, %v2812
        %v2837 = vpack.c.b16 %v2815, %v2814
        %v2838 = vpack.c.b16 %v2817, %v2816
        %v2839 = vpack.c.b16 %v2819, %v2818
        %v2840 = vpack.c.b16 %v2821, %v2820
        %v2841 = vpack.c.b16 %v2823, %v2822
        %v2842 = vpack.c.b16 %v2825, %v2824
        %v2843 = vpack.c.b16 %v2827, %v2826
        %2860 = vmatprep.subr.bf16.mxu0 0
        %2861 = vmatpush1.bf16.msra.mxu0 %v2828
        %2862 = vmatprep.subr.bf16.mxu0 0
        %2863 = vmatpush1.bf16.msra.mxu0 %v2829
        %2864 = vmatprep.subr.bf16.mxu0 0
        %2865 = vmatpush1.bf16.msra.mxu0 %v2830
        %2866 = vmatprep.subr.bf16.mxu0 0
        %2867 = vmatpush1.bf16.msra.mxu0 %v2831
        %2868 = vmatprep.subr.bf16.mxu0 0
        %2869 = vmatpush1.bf16.msra.mxu0 %v2832
        %2870 = vmatprep.subr.bf16.mxu0 0
        %2871 = vmatpush1.bf16.msra.mxu0 %v2833
        %2872 = vmatprep.subr.bf16.mxu0 0
        %2873 = vmatpush1.bf16.msra.mxu0 %v2834
        %2874 = vmatprep.subr.bf16.mxu0 0
        %2875 = vmatpush1.bf16.msra.mxu0 %v2835
        %2876 = vmatprep.subr.bf16.mxu0 0
        %2877 = vmatpush1.bf16.msra.mxu0 %v2836
        %2878 = vmatprep.subr.bf16.mxu0 0
        %2879 = vmatpush1.bf16.msra.mxu0 %v2837
        %2880 = vmatprep.subr.bf16.mxu0 0
        %2881 = vmatpush1.bf16.msra.mxu0 %v2838
        %2882 = vmatprep.subr.bf16.mxu0 0
        %2883 = vmatpush1.bf16.msra.mxu0 %v2839
        %2884 = vmatprep.subr.bf16.mxu0 0
        %2885 = vmatpush1.bf16.msra.mxu0 %v2840
        %2886 = vmatprep.subr.bf16.mxu0 0
        %2887 = vmatpush1.bf16.msra.mxu0 %v2841
        %2888 = vmatprep.subr.bf16.mxu0 0
        %2889 = vmatpush1.bf16.msra.mxu0 %v2842
        %2890 = vmatprep.subr.bf16.mxu0 0
        %2891 = vmatpush1.bf16.msra.mxu0 %v2843
        %2892 = vmatprep.mubr.bf16.mxu0 %v2730
        %2893 = vmatmul.mubr.bf16.gmra.mrb[0].mxu0 %v2729
        %v2894 = vpop.f32.mrb[0].mxu0
        %v2895 = vadd.f32 %v2763, %v2894
        %v2896 = vpop.f32.mrb[0].mxu0
        %v2897 = vpop.f32.mrb[0].mxu0
        %v2898 = vpop.f32.mrb[0].mxu0
        %2899 = vdwg.mxu0
        %2900 = vst [vmem:[%s446] sm:$0x1] %v2895
        %s2901 = sand.u32 %s252, 1
        %s2902 = scalar_lea.sflag [#allocation7], %s2901
        %s2903 = sand.u32 %s252, 1
        %s2904 = scalar_lea.vmem [#allocation17], %s2903
        // Predicated region
        $region89: #{tpu_custom_call.1} parent=59 // pred_check
          %p2905 = pneg %p262
        $region90: #{tpu_custom_call.1} parent=59 // pred_check_branch
          %2907 = sbr.rel (%p2905) target = $region92
        $region91: #{tpu_custom_call.1} parent=59 // pred_region
          %s2909 = ssub.s32 16, 16
          %2910 = vsyncadd %s2902, %s2909
          %s2911 = smul.addr %s29, 16
          %s2912 = scalar_lea.hbm %s11, %s2911
          %s2914 = sshll.u32 %s2904, 4
          %s2915 = int_to_ptr.vmem [resolvable:$true] %s2914
          %2917 = dma.vmem_to_hbm [thread:$0]  %s2915, 16, %s2912, %s2902
        $region92: #{tpu_custom_call.1} parent=59 // pred_fallthru
          _
      $region60: #{tpu_custom_call.1} parent=5 // pred_fallthru
        _
      %p2918 = scmp.le.s32.totalorder 2, %s24
      // Predicated region
      $region93: #{tpu_custom_call.1} parent=5 // pred_check
        %p2919 = pneg %p2918
      $region94: #{tpu_custom_call.1} parent=5 // pred_check_branch
        %2921 = sbr.rel (%p2919) target = $region96
      $region95: #{tpu_custom_call.1} parent=5 // pred_region
        %s2922 = ssub.s32 %s24, 2
        // Predicated region
        $region97: #{tpu_custom_call.1} parent=95 // pred_check
          %p2923 = pneg %p268
        $region98: #{tpu_custom_call.1} parent=95 // pred_check_branch
          %2925 = sbr.rel (%p2923) target = $region100
        $region99: #{tpu_custom_call.1} parent=95 // pred_region
          %s2926 = sand.u32 %s253, 1
          %s2927 = scalar_lea.sflag [#allocation7], %s2926
          %s2928 = sand.u32 %s253, 1
          %s2929 = scalar_lea.vmem [#allocation17], %s2928
          %2930 = dma.done %s2927, 16
        $region100: #{tpu_custom_call.1} parent=95 // pred_fallthru
          _
      $region96: #{tpu_custom_call.1} parent=5 // pred_fallthru
        _
    $region6: #{tpu_custom_call.1} parent=1 // loop_footer
      %s28 = sadd.s32 1, %s24
    $region7: #{tpu_custom_call.1} parent=1 // loop_footer_branch
      %23 = sbr.rel target = $region3
    $region8: #{tpu_custom_call.1} parent=1 // loop_exit
      _
    %2931 = vsyncpa [#allocation6], 1
    %s2932 = scalar_lea.sflag [#allocation6], 1
    %2933 = vsyncpa %s2932, 1
    %2934 = vsyncpa [#allocation9], 1
    %2935 = vsyncpa [#allocation12], 1
    %2936 = vsyncpa [#allocation15], 1
    %2937 = vsyncpa [#allocation7], 1
    %s2938 = scalar_lea.sflag [#allocation7], 1
    %2939 = vsyncpa %s2938, 1
  %2940 = vsyncmov [#allocation4]
  %s2941 = vpop.sfrf %2940
  %p2942 = scmp.eq.s32.totalorder %s2941, 0
  %p2943 = pneg %p2942
  %2945 = shalt.err (%p2943)
  %s2946 = scalar_lea.sflag [#allocation4], 1
  %2947 = vsyncmov %s2946
  %s2948 = vpop.sfrf %2947
  %p2949 = scmp.eq.s32.totalorder %s2948, 0
  %p2950 = pneg %p2949
  %2952 = shalt.err (%p2950)

</llo_original>
